<compile_context>
chip_gen: v6e
topology: v6e:2x2x1
jax: 0.10.0
libtpu: 0.0.40
codegen_flags: <defaults>
</compile_context>

<pallas_src>
import jax
import jax.numpy as jnp
from jax.experimental import pallas as pl
from jax.experimental.pallas import tpu as pltpu

BN_EPS = 1e-5


# ---------------------------------------------------------------------------
# Fused Pallas kernel: the entire ShakeHead forward for TB batch samples.
# ---------------------------------------------------------------------------
def _shake_head_kernel(f0_ref, f1_ref, f2_ref,
                       w1_ref, b1_ref, w2_ref, b2_ref,
                       w3_ref, b3_ref, w4_ref, b4_ref,
                       w5_ref, b5_ref, wfc_ref, bfc_ref,
                       o_ref, s1_scr, s2_scr):
    f32 = jnp.float32
    bf16 = jnp.bfloat16

    TB, _, H0p, Wq, C1 = f0_ref.shape          # H0p = H0+2, Wq = W2+1
    C2 = f1_ref.shape[-1]
    S2, C3 = f2_ref.shape[-2], f2_ref.shape[-1]
    H1 = H0p // 2 - 1                          # = H0/2
    W2 = Wq - 1
    H2 = H1 // 2
    S1 = H1 * W2

    w1m, b1m = w1_ref[...], b1_ref[...]
    w2m, b2m = w2_ref[...], b2_ref[...]
    w3m, b3m = w3_ref[...], b3_ref[...]
    w4m, b4m = w4_ref[...], b4_ref[...]
    w5m, b5m = w5_ref[...], b5_ref[...]

    # ---- fuse1 (3x3/s2) + fuse2 (1x1) -> s1, computed directly in even/odd
    #      output-column planes and written into zero-padded VMEM scratch ----
    s1_scr[...] = jnp.zeros(s1_scr.shape, s1_scr.dtype)

    # f0 plane p holds padded-f0 columns {4*v + p}; padded rows are viewed as
    # (row//2, row%2) so stride-2 row taps become unit-stride slices.
    f0_planes = [f0_ref[:, p].reshape(TB, H1 + 1, 2, Wq, C1) for p in range(4)]

    for px in range(2):                         # output column parity of s1
        taps = []
        for ky in range(3):
            r0, q = ky // 2, ky % 2             # padded row 2h+ky = 2*(r0+h)+q
            for kx in range(3):
                t = 2 * px + kx                 # padded-f0 column = 4*v + t
                p, c0 = (t, 0) if t < 4 else (0, 1)
                taps.append(f0_planes[p][:, r0:r0 + H1, q, c0:c0 + W2, :])
        cat = jnp.concatenate(taps, axis=-1)                # (TB, H1, W2, 9*C1)
        y1 = jnp.dot(cat.reshape(TB * S1, 9 * C1), w1m,
                     preferred_element_type=f32)
        y1 = jnp.maximum(y1 + b1m, 0.0)
        y2 = jnp.dot(f1_ref[:, px].reshape(TB * S1, C2), w2m,
                     preferred_element_type=f32)
        y2 = jnp.maximum(y2 + b2m, 0.0)
        plane = (y1 + y2).astype(bf16).reshape(TB, H1, W2, C2)
        s1_scr[px, :, 1:H1 + 1, 1:W2 + 1, :] = plane

    # ---- fuse3: 3x3/s2 conv on the VMEM-resident s1 (9 shifted taps of the
    #      padded even/odd column planes, K-concatenated -> one matmul) ----
    a_even = s1_scr[0].reshape(TB, H2 + 1, 2, W2 + 1, C2)
    a_odd = s1_scr[1].reshape(TB, H2 + 1, 2, W2 + 1, C2)
    taps = []
    for ky in range(3):
        u0, q = ky // 2, ky % 2                 # padded row 2i+ky = 2*u + q
        for kx in range(3):
            if kx == 0:
                src, c0 = a_odd, 0              # natural col 2j-1
            elif kx == 1:
                src, c0 = a_even, 1             # natural col 2j
            else:
                src, c0 = a_odd, 1              # natural col 2j+1
            taps.append(src[:, u0:u0 + H2, q, c0:c0 + W2, :])
    cat3 = jnp.concatenate(taps, axis=-1)                    # (TB, H2, W2, 9*C2)
    y3 = jnp.dot(cat3.reshape(TB * S2, 9 * C2), w3m, preferred_element_type=f32)
    y3 = jnp.maximum(y3 + b3m, 0.0)

    # ---- fuse4 (1x1) + second branch sum ----
    y4 = jnp.dot(f2_ref[...].reshape(TB * S2, C3), w4m, preferred_element_type=f32)
    y4 = jnp.maximum(y4 + b4m, 0.0)
    s2 = (y3 + y4).astype(bf16).reshape(TB, H2, W2, C3)

    # ---- fuse5: 3x3/s1 conv via padded scratch + 9 unit-stride shifts ----
    s2_scr[...] = jnp.zeros(s2_scr.shape, s2_scr.dtype)
    s2_scr[:, 1:H2 + 1, 1:W2 + 1, :] = s2
    taps = [s2_scr[:, ky:ky + H2, kx:kx + W2, :]
            for ky in range(3) for kx in range(3)]
    cat5 = jnp.concatenate(taps, axis=-1)                    # (TB, H2, W2, 9*C3)
    y5 = jnp.dot(cat5.reshape(TB * S2, 9 * C3), w5m, preferred_element_type=f32)
    y5 = jnp.maximum(y5 + b5m, 0.0)                          # (TB*S2, C3)

    # ---- adaptive avg pool (1,1) + flatten + F.linear (lane-padded) ----
    pooled = jnp.mean(y5.reshape(TB, S2, C3), axis=1)        # (TB, C3), f32
    logits = jnp.dot(pooled.astype(bf16), wfc_ref[...],
                     preferred_element_type=f32) + bfc_ref[...]
    o_ref[:, 0, :] = logits                                  # lane-dense store


# ---------------------------------------------------------------------------
# Wrapper helpers
# ---------------------------------------------------------------------------
def _fold_bn(bn):
    scale = bn["gamma"] / jnp.sqrt(bn["var"] + BN_EPS)
    bias = bn["beta"] - bn["mean"] * scale
    return scale, bias


def _batch_spec(shape, tb):
    tail = tuple(int(d) for d in shape[1:])
    zeros = (0,) * len(tail)
    return pl.BlockSpec((tb,) + tail, lambda b: (b,) + zeros)


def _shared_spec(shape):
    full = tuple(int(d) for d in shape)
    zeros = (0,) * len(full)
    return pl.BlockSpec(full, lambda b: zeros)


# ---------------------------------------------------------------------------
# Forward
# ---------------------------------------------------------------------------
@jax.jit
def shake_head_forward(params, f0_nchw, f1_nchw, f2_nchw, fc_weight, fc_bias):
    bf16 = jnp.bfloat16
    # NCHW (PyTorch) -> NHWC (channels on the lane axis)
    f0 = jnp.transpose(f0_nchw, (0, 2, 3, 1)).astype(jnp.float32)
    f1 = jnp.transpose(f1_nchw, (0, 2, 3, 1)).astype(jnp.float32)
    f2 = jnp.transpose(f2_nchw, (0, 2, 3, 1)).astype(jnp.float32)

    B, H0, W0, C1 = f0.shape
    _, H1, W1, C2 = f1.shape
    _, H2, W2, C3 = f2.shape
    num_classes = fc_weight.shape[0]
    assert H0 % 4 == 0 and W0 % 4 == 0, "feature maps assumed divisible by 4"
    assert H1 == H0 // 2 and W1 == W0 // 2 and H2 == H1 // 2 and W2 == W1 // 2

    # Fold BN scale into the conv weights; kernel only adds the folded bias.
    sc1, bb1 = _fold_bn(params["bn1"])
    sc2, bb2 = _fold_bn(params["bn2"])
    sc3, bb3 = _fold_bn(params["bn3"])
    sc4, bb4 = _fold_bn(params["bn4"])
    sc5, bb5 = _fold_bn(params["bn5"])

    w1m = (params["fuse1_w"] * sc1).reshape(9 * C1, C2).astype(bf16)
    w2m = (params["fuse2_w"] * sc2).reshape(C2, C2).astype(bf16)
    w3m = (params["fuse3_w"] * sc3).reshape(9 * C2, C3).astype(bf16)
    w4m = (params["fuse4_w"] * sc4).reshape(C3, C3).astype(bf16)
    w5m = (params["fuse5_w"] * sc5).reshape(9 * C3, C3).astype(bf16)
    b1 = bb1.reshape(1, C2)
    b2 = bb2.reshape(1, C2)
    b3 = bb3.reshape(1, C3)
    b4 = bb4.reshape(1, C3)
    b5 = bb5.reshape(1, C3)

    # f0: conv pad (1) + extra right zero cols, then column-split by 4
    # (pure permutation, same byte count as the raw padded map).
    Wq = W2 + 1
    f0p = jnp.pad(f0, ((0, 0), (1, 1), (1, 4 * Wq - W0 - 1), (0, 0)))
    f0q = (f0p.reshape(B, H0 + 2, Wq, 4, C1)
              .transpose(0, 3, 1, 2, 4).astype(bf16))        # (B,4,H0+2,Wq,C1)

    # f1: column-split by 2 (plane px holds cols 2*v+px), flatten spatial.
    f1cs = (f1.reshape(B, H1, W2, 2, C2).transpose(0, 3, 1, 2, 4)
              .reshape(B, 2, H1 * W2, C2).astype(bf16))
    f2r = f2.reshape(B, H2 * W2, C3).astype(bf16)

    # FC: transpose + lane-pad class dim to a multiple of 128.
    ncp = ((num_classes + 127) // 128) * 128
    wfc = jnp.pad(jnp.transpose(fc_weight).astype(jnp.float32),
                  ((0, 0), (0, ncp - num_classes))).astype(bf16)
    bfc = jnp.pad(fc_bias.astype(jnp.float32).reshape(1, -1),
                  ((0, 0), (0, ncp - num_classes)))

    # Batch tile: largest divisor of B that is <= 8.
    TB = 1
    for cand in (8, 4, 2, 1):
        if B % cand == 0:
            TB = cand
            break

    operands = (f0q, f1cs, f2r, w1m, b1, w2m, b2, w3m, b3,
                w4m, b4, w5m, b5, wfc, bfc)
    in_specs = ([_batch_spec(op.shape, TB) for op in operands[:3]]
                + [_shared_spec(op.shape) for op in operands[3:]])

    out = pl.pallas_call(
        _shake_head_kernel,
        out_shape=jax.ShapeDtypeStruct((B, 1, ncp), jnp.float32),
        grid=(B // TB,),
        in_specs=in_specs,
        out_specs=pl.BlockSpec((TB, 1, ncp), lambda b: (b, 0, 0)),
        scratch_shapes=[
            pltpu.VMEM((2, TB, H1 + 2, W2 + 1, C2), bf16),   # padded s1 planes
            pltpu.VMEM((TB, H2 + 2, W2 + 2, C3), bf16),      # padded s2
        ],
        compiler_params=pltpu.CompilerParams(
            dimension_semantics=("parallel",)),
    )(*operands)
    return out[:, 0, :num_classes]


# ---------------------------------------------------------------------------
# Parameter init (matches the PyTorch module's init)
# ---------------------------------------------------------------------------
def init_params(key, c1, c2, c3):
    ks = jax.random.split(key, 5)

    def kaiming(k, kh, kw, cin, cout):
        # torch kaiming_normal_(mode='fan_out', nonlinearity='relu')
        fan_out = cout * kh * kw
        std = (2.0 / fan_out) ** 0.5
        return jax.random.normal(k, (kh, kw, cin, cout), jnp.float32) * std

    def bn(c):
        return dict(gamma=jnp.ones((c,), jnp.float32),
                    beta=jnp.zeros((c,), jnp.float32),
                    mean=jnp.zeros((c,), jnp.float32),
                    var=jnp.ones((c,), jnp.float32))

    return {
        "fuse1_w": kaiming(ks[0], 3, 3, c1, c2), "bn1": bn(c2),
        "fuse2_w": kaiming(ks[1], 1, 1, c2, c2), "bn2": bn(c2),
        "fuse3_w": kaiming(ks[2], 3, 3, c2, c3), "bn3": bn(c3),
        "fuse4_w": kaiming(ks[3], 1, 1, c3, c3), "bn4": bn(c3),
        "fuse5_w": kaiming(ks[4], 3, 3, c3, c3), "bn5": bn(c3),
    }


# ---------------------------------------------------------------------------
# Pure-XLA reference (used only for the self-check in __main__)
# ---------------------------------------------------------------------------
def _reference_forward(params, f0_nchw, f1_nchw, f2_nchw, fc_weight, fc_bias):
    def to_nhwc(x):
        return jnp.transpose(x, (0, 2, 3, 1)).astype(jnp.float32)

    def block(x, w, bn, stride, pad):
        y = jax.lax.conv_general_dilated(
            x, w, window_strides=(stride, stride),
            padding=[(pad, pad), (pad, pad)],
            dimension_numbers=("NHWC", "HWIO", "NHWC"))
        scale = bn["gamma"] / jnp.sqrt(bn["var"] + BN_EPS)
        y = y * scale + (bn["beta"] - bn["mean"] * scale)
        return jnp.maximum(y, 0.0)

    f0, f1, f2 = to_nhwc(f0_nchw), to_nhwc(f1_nchw), to_nhwc(f2_nchw)
    s1 = (block(f0, params["fuse1_w"], params["bn1"], 2, 1)
          + block(f1, params["fuse2_w"], params["bn2"], 1, 0))
    s2 = (block(s1, params["fuse3_w"], params["bn3"], 2, 1)
          + block(f2, params["fuse4_w"], params["bn4"], 1, 0))
    x = block(s2, params["fuse5_w"], params["bn5"], 1, 1)
    pooled = jnp.mean(x, axis=(1, 2))
    return pooled @ jnp.transpose(fc_weight) + fc_bias


# ---------------------------------------------------------------------------
if __name__ == "__main__":
    key = jax.random.PRNGKey(0)
    B, C1, C2, C3, H = 2, 4, 8, 16, 16
    NUM_CLASSES = 100

    k_f0, k_f1, k_f2, k_w, k_b, k_p = jax.random.split(key, 6)
    # feature maps (NCHW, matching PyTorch): f[0] full-res, f[1] /2, f[2] /4
    f0 = jax.random.normal(k_f0, (B, C1, H, H), jnp.float32)
    f1 = jax.random.normal(k_f1, (B, C2, H // 2, H // 2), jnp.float32)
    f2 = jax.random.normal(k_f2, (B, C3, H // 4, H // 4), jnp.float32)
    # external linear weight/bias passed into forward (torch: (out, in), (out,))
    fc_weight = jax.random.normal(k_w, (NUM_CLASSES, C3), jnp.float32) * 0.05
    fc_bias = jax.random.normal(k_b, (NUM_CLASSES,), jnp.float32) * 0.05

    params = init_params(k_p, C1, C2, C3)

    out = shake_head_forward(params, f0, f1, f2, fc_weight, fc_bias)
    out = jax.block_until_ready(out)
    assert out.shape == (B, NUM_CLASSES)
    assert bool(jnp.all(jnp.isfinite(out)))

    # self-check against a pure-XLA f32 reference (bf16 matmul operands in the
    # kernel -> loose-ish absolute tolerance)
    ref = _reference_forward(params, f0, f1, f2, fc_weight, fc_bias)
    max_err = float(jnp.max(jnp.abs(out - ref)))
    assert max_err < 5e-2, f"mismatch vs XLA reference: {max_err}"

    print("KERNEL_OK")
</pallas_src>

<mosaic_0001>
module attributes {stable_mosaic.version = 11 : i64} {
  func.func @_shake_head_kernel(%arg0: i32, %arg1: memref<2x4x18x5x4xbf16, #tpu.memory_space<vmem>>, %arg2: memref<2x2x32x8xbf16, #tpu.memory_space<vmem>>, %arg3: memref<2x16x16xbf16, #tpu.memory_space<vmem>>, %arg4: memref<36x8xbf16, #tpu.memory_space<vmem>>, %arg5: memref<1x8xf32, #tpu.memory_space<vmem>>, %arg6: memref<8x8xbf16, #tpu.memory_space<vmem>>, %arg7: memref<1x8xf32, #tpu.memory_space<vmem>>, %arg8: memref<72x16xbf16, #tpu.memory_space<vmem>>, %arg9: memref<1x16xf32, #tpu.memory_space<vmem>>, %arg10: memref<16x16xbf16, #tpu.memory_space<vmem>>, %arg11: memref<1x16xf32, #tpu.memory_space<vmem>>, %arg12: memref<144x16xbf16, #tpu.memory_space<vmem>>, %arg13: memref<1x16xf32, #tpu.memory_space<vmem>>, %arg14: memref<16x128xbf16, #tpu.memory_space<vmem>>, %arg15: memref<1x128xf32, #tpu.memory_space<vmem>>, %arg16: memref<2x1x128xf32, #tpu.memory_space<vmem>>, %arg17: memref<2x2x10x5x8xbf16, #tpu.memory_space<vmem>>, %arg18: memref<2x6x6x16xbf16, #tpu.memory_space<vmem>>) attributes {dimension_semantics = [#tpu.dimension_semantics<parallel>], iteration_bounds = array<i64: 1>, scalar_prefetch = 0 : i64, scratch_operands = 2 : i64, tpu.core_type = #tpu.core_type<tc>, window_params = [{transform_indices = @transform_0, window_bounds = array<i64: 2, 4, 18, 5, 4>}, {transform_indices = @transform_1, window_bounds = array<i64: 2, 2, 32, 8>}, {transform_indices = @transform_2, window_bounds = array<i64: 2, 16, 16>}, {pipeline_mode = #tpu.pipeline_mode<synchronous>, transform_indices = @transform_3, window_bounds = array<i64: 36, 8>}, {pipeline_mode = #tpu.pipeline_mode<synchronous>, transform_indices = @transform_4, window_bounds = array<i64: 1, 8>}, {pipeline_mode = #tpu.pipeline_mode<synchronous>, transform_indices = @transform_5, window_bounds = array<i64: 8, 8>}, {pipeline_mode = #tpu.pipeline_mode<synchronous>, transform_indices = @transform_6, window_bounds = array<i64: 1, 8>}, {pipeline_mode = #tpu.pipeline_mode<synchronous>, transform_indices = @transform_7, window_bounds = array<i64: 72, 16>}, {pipeline_mode = #tpu.pipeline_mode<synchronous>, transform_indices = @transform_8, window_bounds = array<i64: 1, 16>}, {pipeline_mode = #tpu.pipeline_mode<synchronous>, transform_indices = @transform_9, window_bounds = array<i64: 16, 16>}, {pipeline_mode = #tpu.pipeline_mode<synchronous>, transform_indices = @transform_10, window_bounds = array<i64: 1, 16>}, {pipeline_mode = #tpu.pipeline_mode<synchronous>, transform_indices = @transform_11, window_bounds = array<i64: 144, 16>}, {pipeline_mode = #tpu.pipeline_mode<synchronous>, transform_indices = @transform_12, window_bounds = array<i64: 1, 16>}, {pipeline_mode = #tpu.pipeline_mode<synchronous>, transform_indices = @transform_13, window_bounds = array<i64: 16, 128>}, {pipeline_mode = #tpu.pipeline_mode<synchronous>, transform_indices = @transform_14, window_bounds = array<i64: 1, 128>}, {transform_indices = @transform_15, window_bounds = array<i64: 2, 1, 128>}]} {
    %c0 = arith.constant 0 : index
    %c0_0 = arith.constant 0 : index
    %0 = vector.load %arg4[%c0, %c0_0] : memref<36x8xbf16, #tpu.memory_space<vmem>>, vector<36x8xbf16>
    %c0_1 = arith.constant 0 : index
    %c0_2 = arith.constant 0 : index
    %1 = vector.load %arg5[%c0_1, %c0_2] : memref<1x8xf32, #tpu.memory_space<vmem>>, vector<1x8xf32>
    %c0_3 = arith.constant 0 : index
    %c0_4 = arith.constant 0 : index
    %2 = vector.load %arg6[%c0_3, %c0_4] : memref<8x8xbf16, #tpu.memory_space<vmem>>, vector<8x8xbf16>
    %c0_5 = arith.constant 0 : index
    %c0_6 = arith.constant 0 : index
    %3 = vector.load %arg7[%c0_5, %c0_6] : memref<1x8xf32, #tpu.memory_space<vmem>>, vector<1x8xf32>
    %c0_7 = arith.constant 0 : index
    %c0_8 = arith.constant 0 : index
    %4 = vector.load %arg8[%c0_7, %c0_8] : memref<72x16xbf16, #tpu.memory_space<vmem>>, vector<72x16xbf16>
    %c0_9 = arith.constant 0 : index
    %c0_10 = arith.constant 0 : index
    %5 = vector.load %arg9[%c0_9, %c0_10] : memref<1x16xf32, #tpu.memory_space<vmem>>, vector<1x16xf32>
    %c0_11 = arith.constant 0 : index
    %c0_12 = arith.constant 0 : index
    %6 = vector.load %arg10[%c0_11, %c0_12] : memref<16x16xbf16, #tpu.memory_space<vmem>>, vector<16x16xbf16>
    %c0_13 = arith.constant 0 : index
    %c0_14 = arith.constant 0 : index
    %7 = vector.load %arg11[%c0_13, %c0_14] : memref<1x16xf32, #tpu.memory_space<vmem>>, vector<1x16xf32>
    %c0_15 = arith.constant 0 : index
    %c0_16 = arith.constant 0 : index
    %8 = vector.load %arg12[%c0_15, %c0_16] : memref<144x16xbf16, #tpu.memory_space<vmem>>, vector<144x16xbf16>
    %c0_17 = arith.constant 0 : index
    %c0_18 = arith.constant 0 : index
    %9 = vector.load %arg13[%c0_17, %c0_18] : memref<1x16xf32, #tpu.memory_space<vmem>>, vector<1x16xf32>
    %cst = arith.constant 0.000000e+00 : bf16
    %10 = vector.broadcast %cst : bf16 to vector<2x2x10x5x8xbf16>
    %c0_19 = arith.constant 0 : index
    %c0_20 = arith.constant 0 : index
    %c0_21 = arith.constant 0 : index
    %c0_22 = arith.constant 0 : index
    %c0_23 = arith.constant 0 : index
    %11 = vector.load %arg17[%c0_19, %c0_20, %c0_21, %c0_22, %c0_23] : memref<2x2x10x5x8xbf16, #tpu.memory_space<vmem>>, vector<2x2x10x5x8xbf16>
    tpu.vector_store %arg17[%c0_19, %c0_20, %c0_21, %c0_22, %c0_23], %10 {strides = array<i32>} : memref<2x2x10x5x8xbf16, #tpu.memory_space<vmem>>, vector<2x2x10x5x8xbf16>,
    %c0_24 = arith.constant 0 : index
    %c0_25 = arith.constant 0 : index
    %c0_26 = arith.constant 0 : index
    %c0_27 = arith.constant 0 : index
    %c0_28 = arith.constant 0 : index
    %12 = vector.load %arg1[%c0_24, %c0_25, %c0_26, %c0_27, %c0_28] : memref<2x4x18x5x4xbf16, #tpu.memory_space<vmem>>, vector<2x1x18x5x4xbf16>
    %13 = vector.shape_cast %12 : vector<2x1x18x5x4xbf16> to vector<2x18x5x4xbf16>
    %14 = vector.shape_cast %13 : vector<2x18x5x4xbf16> to vector<2x9x2x5x4xbf16>
    %c0_29 = arith.constant 0 : index
    %c1 = arith.constant 1 : index
    %c0_30 = arith.constant 0 : index
    %c0_31 = arith.constant 0 : index
    %c0_32 = arith.constant 0 : index
    %15 = vector.load %arg1[%c0_29, %c1, %c0_30, %c0_31, %c0_32] : memref<2x4x18x5x4xbf16, #tpu.memory_space<vmem>>, vector<2x1x18x5x4xbf16>
    %16 = vector.shape_cast %15 : vector<2x1x18x5x4xbf16> to vector<2x18x5x4xbf16>
    %17 = vector.shape_cast %16 : vector<2x18x5x4xbf16> to vector<2x9x2x5x4xbf16>
    %c0_33 = arith.constant 0 : index
    %c2 = arith.constant 2 : index
    %c0_34 = arith.constant 0 : index
    %c0_35 = arith.constant 0 : index
    %c0_36 = arith.constant 0 : index
    %18 = vector.load %arg1[%c0_33, %c2, %c0_34, %c0_35, %c0_36] : memref<2x4x18x5x4xbf16, #tpu.memory_space<vmem>>, vector<2x1x18x5x4xbf16>
    %19 = vector.shape_cast %18 : vector<2x1x18x5x4xbf16> to vector<2x18x5x4xbf16>
    %20 = vector.shape_cast %19 : vector<2x18x5x4xbf16> to vector<2x9x2x5x4xbf16>
    %c0_37 = arith.constant 0 : index
    %c3 = arith.constant 3 : index
    %c0_38 = arith.constant 0 : index
    %c0_39 = arith.constant 0 : index
    %c0_40 = arith.constant 0 : index
    %21 = vector.load %arg1[%c0_37, %c3, %c0_38, %c0_39, %c0_40] : memref<2x4x18x5x4xbf16, #tpu.memory_space<vmem>>, vector<2x1x18x5x4xbf16>
    %22 = vector.shape_cast %21 : vector<2x1x18x5x4xbf16> to vector<2x18x5x4xbf16>
    %23 = vector.shape_cast %22 : vector<2x18x5x4xbf16> to vector<2x9x2x5x4xbf16>
    %24 = vector.extract_strided_slice %14 {offsets = [0, 0, 0, 0, 0], sizes = [2, 8, 1, 4, 4], strides = [1, 1, 1, 1, 1]} : vector<2x9x2x5x4xbf16> to vector<2x8x1x4x4xbf16>
    %25 = vector.shape_cast %24 : vector<2x8x1x4x4xbf16> to vector<2x8x4x4xbf16>
    %26 = vector.extract_strided_slice %17 {offsets = [0, 0, 0, 0, 0], sizes = [2, 8, 1, 4, 4], strides = [1, 1, 1, 1, 1]} : vector<2x9x2x5x4xbf16> to vector<2x8x1x4x4xbf16>
    %27 = vector.shape_cast %26 : vector<2x8x1x4x4xbf16> to vector<2x8x4x4xbf16>
    %28 = vector.extract_strided_slice %20 {offsets = [0, 0, 0, 0, 0], sizes = [2, 8, 1, 4, 4], strides = [1, 1, 1, 1, 1]} : vector<2x9x2x5x4xbf16> to vector<2x8x1x4x4xbf16>
    %29 = vector.shape_cast %28 : vector<2x8x1x4x4xbf16> to vector<2x8x4x4xbf16>
    %30 = vector.extract_strided_slice %14 {offsets = [0, 0, 1, 0, 0], sizes = [2, 8, 1, 4, 4], strides = [1, 1, 1, 1, 1]} : vector<2x9x2x5x4xbf16> to vector<2x8x1x4x4xbf16>
    %31 = vector.shape_cast %30 : vector<2x8x1x4x4xbf16> to vector<2x8x4x4xbf16>
    %32 = vector.extract_strided_slice %17 {offsets = [0, 0, 1, 0, 0], sizes = [2, 8, 1, 4, 4], strides = [1, 1, 1, 1, 1]} : vector<2x9x2x5x4xbf16> to vector<2x8x1x4x4xbf16>
    %33 = vector.shape_cast %32 : vector<2x8x1x4x4xbf16> to vector<2x8x4x4xbf16>
    %34 = vector.extract_strided_slice %20 {offsets = [0, 0, 1, 0, 0], sizes = [2, 8, 1, 4, 4], strides = [1, 1, 1, 1, 1]} : vector<2x9x2x5x4xbf16> to vector<2x8x1x4x4xbf16>
    %35 = vector.shape_cast %34 : vector<2x8x1x4x4xbf16> to vector<2x8x4x4xbf16>
    %36 = vector.extract_strided_slice %14 {offsets = [0, 1, 0, 0, 0], sizes = [2, 8, 1, 4, 4], strides = [1, 1, 1, 1, 1]} : vector<2x9x2x5x4xbf16> to vector<2x8x1x4x4xbf16>
    %37 = vector.shape_cast %36 : vector<2x8x1x4x4xbf16> to vector<2x8x4x4xbf16>
    %38 = vector.extract_strided_slice %17 {offsets = [0, 1, 0, 0, 0], sizes = [2, 8, 1, 4, 4], strides = [1, 1, 1, 1, 1]} : vector<2x9x2x5x4xbf16> to vector<2x8x1x4x4xbf16>
    %39 = vector.shape_cast %38 : vector<2x8x1x4x4xbf16> to vector<2x8x4x4xbf16>
    %40 = vector.extract_strided_slice %20 {offsets = [0, 1, 0, 0, 0], sizes = [2, 8, 1, 4, 4], strides = [1, 1, 1, 1, 1]} : vector<2x9x2x5x4xbf16> to vector<2x8x1x4x4xbf16>
    %41 = vector.shape_cast %40 : vector<2x8x1x4x4xbf16> to vector<2x8x4x4xbf16>
    %42 = tpu.concatenate %25, %27, %29, %31, %33, %35, %37, %39, %41 in 3 : vector<2x8x4x4xbf16>, vector<2x8x4x4xbf16>, vector<2x8x4x4xbf16>, vector<2x8x4x4xbf16>, vector<2x8x4x4xbf16>, vector<2x8x4x4xbf16>, vector<2x8x4x4xbf16>, vector<2x8x4x4xbf16>, vector<2x8x4x4xbf16> -> vector<2x8x4x36xbf16>
    %43 = vector.shape_cast %42 : vector<2x8x4x36xbf16> to vector<64x36xbf16>
    %cst_41 = arith.constant dense<0.000000e+00> : vector<64x8xf32>
    %44 = tpu.matmul %43, %0, %cst_41 {dimension_numbers = #tpu.dot_dimension_numbers<[1], [0], [0], [1], [0, 0, 1, 1], [], []>} : vector<64x36xbf16>, vector<36x8xbf16>, vector<64x8xf32> -> vector<64x8xf32>
    %45 = vector.broadcast %1 : vector<1x8xf32> to vector<64x8xf32>
    %46 = arith.addf %44, %45 : vector<64x8xf32>
    %cst_42 = arith.constant 0.000000e+00 : f32
    %47 = vector.broadcast %cst_42 : f32 to vector<64x8xf32>
    %48 = arith.maximumf %46, %47 : vector<64x8xf32>
    %c0_43 = arith.constant 0 : index
    %c0_44 = arith.constant 0 : index
    %c0_45 = arith.constant 0 : index
    %c0_46 = arith.constant 0 : index
    %49 = vector.load %arg2[%c0_43, %c0_44, %c0_45, %c0_46] : memref<2x2x32x8xbf16, #tpu.memory_space<vmem>>, vector<2x1x32x8xbf16>
    %50 = vector.shape_cast %49 : vector<2x1x32x8xbf16> to vector<2x32x8xbf16>
    %51 = vector.shape_cast %50 : vector<2x32x8xbf16> to vector<64x8xbf16>
    %cst_47 = arith.constant dense<0.000000e+00> : vector<64x8xf32>
    %52 = tpu.matmul %51, %2, %cst_47 {dimension_numbers = #tpu.dot_dimension_numbers<[1], [0], [0], [1], [0, 0, 1, 1], [], []>} : vector<64x8xbf16>, vector<8x8xbf16>, vector<64x8xf32> -> vector<64x8xf32>
    %53 = vector.broadcast %3 : vector<1x8xf32> to vector<64x8xf32>
    %54 = arith.addf %52, %53 : vector<64x8xf32>
    %cst_48 = arith.constant 0.000000e+00 : f32
    %55 = vector.broadcast %cst_48 : f32 to vector<64x8xf32>
    %56 = arith.maximumf %54, %55 : vector<64x8xf32>
    %57 = arith.addf %48, %56 : vector<64x8xf32>
    %58 = arith.truncf %57 : vector<64x8xf32> to vector<64x8xbf16>
    %59 = vector.shape_cast %58 : vector<64x8xbf16> to vector<2x8x4x8xbf16>
    %c0_49 = arith.constant 0 : index
    %c0_50 = arith.constant 0 : index
    %c1_51 = arith.constant 1 : index
    %c1_52 = arith.constant 1 : index
    %c0_53 = arith.constant 0 : index
    %60 = vector.load %arg17[%c0_49, %c0_50, %c1_51, %c1_52, %c0_53] : memref<2x2x10x5x8xbf16, #tpu.memory_space<vmem>>, vector<1x2x8x4x8xbf16>
    %61 = vector.shape_cast %60 : vector<1x2x8x4x8xbf16> to vector<2x8x4x8xbf16>
    %62 = vector.shape_cast %59 : vector<2x8x4x8xbf16> to vector<1x2x8x4x8xbf16>
    tpu.vector_store %arg17[%c0_49, %c0_50, %c1_51, %c1_52, %c0_53], %62 {strides = array<i32>} : memref<2x2x10x5x8xbf16, #tpu.memory_space<vmem>>, vector<1x2x8x4x8xbf16>,
    %63 = vector.extract_strided_slice %20 {offsets = [0, 0, 0, 0, 0], sizes = [2, 8, 1, 4, 4], strides = [1, 1, 1, 1, 1]} : vector<2x9x2x5x4xbf16> to vector<2x8x1x4x4xbf16>
    %64 = vector.shape_cast %63 : vector<2x8x1x4x4xbf16> to vector<2x8x4x4xbf16>
    %65 = vector.extract_strided_slice %23 {offsets = [0, 0, 0, 0, 0], sizes = [2, 8, 1, 4, 4], strides = [1, 1, 1, 1, 1]} : vector<2x9x2x5x4xbf16> to vector<2x8x1x4x4xbf16>
    %66 = vector.shape_cast %65 : vector<2x8x1x4x4xbf16> to vector<2x8x4x4xbf16>
    %67 = vector.extract_strided_slice %14 {offsets = [0, 0, 0, 1, 0], sizes = [2, 8, 1, 4, 4], strides = [1, 1, 1, 1, 1]} : vector<2x9x2x5x4xbf16> to vector<2x8x1x4x4xbf16>
    %68 = vector.shape_cast %67 : vector<2x8x1x4x4xbf16> to vector<2x8x4x4xbf16>
    %69 = vector.extract_strided_slice %20 {offsets = [0, 0, 1, 0, 0], sizes = [2, 8, 1, 4, 4], strides = [1, 1, 1, 1, 1]} : vector<2x9x2x5x4xbf16> to vector<2x8x1x4x4xbf16>
    %70 = vector.shape_cast %69 : vector<2x8x1x4x4xbf16> to vector<2x8x4x4xbf16>
    %71 = vector.extract_strided_slice %23 {offsets = [0, 0, 1, 0, 0], sizes = [2, 8, 1, 4, 4], strides = [1, 1, 1, 1, 1]} : vector<2x9x2x5x4xbf16> to vector<2x8x1x4x4xbf16>
    %72 = vector.shape_cast %71 : vector<2x8x1x4x4xbf16> to vector<2x8x4x4xbf16>
    %73 = vector.extract_strided_slice %14 {offsets = [0, 0, 1, 1, 0], sizes = [2, 8, 1, 4, 4], strides = [1, 1, 1, 1, 1]} : vector<2x9x2x5x4xbf16> to vector<2x8x1x4x4xbf16>
    %74 = vector.shape_cast %73 : vector<2x8x1x4x4xbf16> to vector<2x8x4x4xbf16>
    %75 = vector.extract_strided_slice %20 {offsets = [0, 1, 0, 0, 0], sizes = [2, 8, 1, 4, 4], strides = [1, 1, 1, 1, 1]} : vector<2x9x2x5x4xbf16> to vector<2x8x1x4x4xbf16>
    %76 = vector.shape_cast %75 : vector<2x8x1x4x4xbf16> to vector<2x8x4x4xbf16>
    %77 = vector.extract_strided_slice %23 {offsets = [0, 1, 0, 0, 0], sizes = [2, 8, 1, 4, 4], strides = [1, 1, 1, 1, 1]} : vector<2x9x2x5x4xbf16> to vector<2x8x1x4x4xbf16>
    %78 = vector.shape_cast %77 : vector<2x8x1x4x4xbf16> to vector<2x8x4x4xbf16>
    %79 = vector.extract_strided_slice %14 {offsets = [0, 1, 0, 1, 0], sizes = [2, 8, 1, 4, 4], strides = [1, 1, 1, 1, 1]} : vector<2x9x2x5x4xbf16> to vector<2x8x1x4x4xbf16>
    %80 = vector.shape_cast %79 : vector<2x8x1x4x4xbf16> to vector<2x8x4x4xbf16>
    %81 = tpu.concatenate %64, %66, %68, %70, %72, %74, %76, %78, %80 in 3 : vector<2x8x4x4xbf16>, vector<2x8x4x4xbf16>, vector<2x8x4x4xbf16>, vector<2x8x4x4xbf16>, vector<2x8x4x4xbf16>, vector<2x8x4x4xbf16>, vector<2x8x4x4xbf16>, vector<2x8x4x4xbf16>, vector<2x8x4x4xbf16> -> vector<2x8x4x36xbf16>
    %82 = vector.shape_cast %81 : vector<2x8x4x36xbf16> to vector<64x36xbf16>
    %cst_54 = arith.constant dense<0.000000e+00> : vector<64x8xf32>
    %83 = tpu.matmul %82, %0, %cst_54 {dimension_numbers = #tpu.dot_dimension_numbers<[1], [0], [0], [1], [0, 0, 1, 1], [], []>} : vector<64x36xbf16>, vector<36x8xbf16>, vector<64x8xf32> -> vector<64x8xf32>
    %84 = vector.broadcast %1 : vector<1x8xf32> to vector<64x8xf32>
    %85 = arith.addf %83, %84 : vector<64x8xf32>
    %cst_55 = arith.constant 0.000000e+00 : f32
    %86 = vector.broadcast %cst_55 : f32 to vector<64x8xf32>
    %87 = arith.maximumf %85, %86 : vector<64x8xf32>
    %c0_56 = arith.constant 0 : index
    %c1_57 = arith.constant 1 : index
    %c0_58 = arith.constant 0 : index
    %c0_59 = arith.constant 0 : index
    %88 = vector.load %arg2[%c0_56, %c1_57, %c0_58, %c0_59] : memref<2x2x32x8xbf16, #tpu.memory_space<vmem>>, vector<2x1x32x8xbf16>
    %89 = vector.shape_cast %88 : vector<2x1x32x8xbf16> to vector<2x32x8xbf16>
    %90 = vector.shape_cast %89 : vector<2x32x8xbf16> to vector<64x8xbf16>
    %cst_60 = arith.constant dense<0.000000e+00> : vector<64x8xf32>
    %91 = tpu.matmul %90, %2, %cst_60 {dimension_numbers = #tpu.dot_dimension_numbers<[1], [0], [0], [1], [0, 0, 1, 1], [], []>} : vector<64x8xbf16>, vector<8x8xbf16>, vector<64x8xf32> -> vector<64x8xf32>
    %92 = vector.broadcast %3 : vector<1x8xf32> to vector<64x8xf32>
    %93 = arith.addf %91, %92 : vector<64x8xf32>
    %cst_61 = arith.constant 0.000000e+00 : f32
    %94 = vector.broadcast %cst_61 : f32 to vector<64x8xf32>
    %95 = arith.maximumf %93, %94 : vector<64x8xf32>
    %96 = arith.addf %87, %95 : vector<64x8xf32>
    %97 = arith.truncf %96 : vector<64x8xf32> to vector<64x8xbf16>
    %98 = vector.shape_cast %97 : vector<64x8xbf16> to vector<2x8x4x8xbf16>
    %c1_62 = arith.constant 1 : index
    %c0_63 = arith.constant 0 : index
    %c1_64 = arith.constant 1 : index
    %c1_65 = arith.constant 1 : index
    %c0_66 = arith.constant 0 : index
    %99 = vector.load %arg17[%c1_62, %c0_63, %c1_64, %c1_65, %c0_66] : memref<2x2x10x5x8xbf16, #tpu.memory_space<vmem>>, vector<1x2x8x4x8xbf16>
    %100 = vector.shape_cast %99 : vector<1x2x8x4x8xbf16> to vector<2x8x4x8xbf16>
    %101 = vector.shape_cast %98 : vector<2x8x4x8xbf16> to vector<1x2x8x4x8xbf16>
    tpu.vector_store %arg17[%c1_62, %c0_63, %c1_64, %c1_65, %c0_66], %101 {strides = array<i32>} : memref<2x2x10x5x8xbf16, #tpu.memory_space<vmem>>, vector<1x2x8x4x8xbf16>,
    %c0_67 = arith.constant 0 : index
    %c0_68 = arith.constant 0 : index
    %c0_69 = arith.constant 0 : index
    %c0_70 = arith.constant 0 : index
    %c0_71 = arith.constant 0 : index
    %102 = vector.load %arg17[%c0_67, %c0_68, %c0_69, %c0_70, %c0_71] : memref<2x2x10x5x8xbf16, #tpu.memory_space<vmem>>, vector<1x2x10x5x8xbf16>
    %103 = vector.shape_cast %102 : vector<1x2x10x5x8xbf16> to vector<2x10x5x8xbf16>
    %104 = vector.shape_cast %103 : vector<2x10x5x8xbf16> to vector<2x5x2x5x8xbf16>
    %c1_72 = arith.constant 1 : index
    %c0_73 = arith.constant 0 : index
    %c0_74 = arith.constant 0 : index
    %c0_75 = arith.constant 0 : index
    %c0_76 = arith.constant 0 : index
    %105 = vector.load %arg17[%c1_72, %c0_73, %c0_74, %c0_75, %c0_76] : memref<2x2x10x5x8xbf16, #tpu.memory_space<vmem>>, vector<1x2x10x5x8xbf16>
    %106 = vector.shape_cast %105 : vector<1x2x10x5x8xbf16> to vector<2x10x5x8xbf16>
    %107 = vector.shape_cast %106 : vector<2x10x5x8xbf16> to vector<2x5x2x5x8xbf16>
    %108 = vector.extract_strided_slice %107 {offsets = [0, 0, 0, 0, 0], sizes = [2, 4, 1, 4, 8], strides = [1, 1, 1, 1, 1]} : vector<2x5x2x5x8xbf16> to vector<2x4x1x4x8xbf16>
    %109 = vector.shape_cast %108 : vector<2x4x1x4x8xbf16> to vector<2x4x4x8xbf16>
    %110 = vector.extract_strided_slice %104 {offsets = [0, 0, 0, 1, 0], sizes = [2, 4, 1, 4, 8], strides = [1, 1, 1, 1, 1]} : vector<2x5x2x5x8xbf16> to vector<2x4x1x4x8xbf16>
    %111 = vector.shape_cast %110 : vector<2x4x1x4x8xbf16> to vector<2x4x4x8xbf16>
    %112 = vector.extract_strided_slice %107 {offsets = [0, 0, 0, 1, 0], sizes = [2, 4, 1, 4, 8], strides = [1, 1, 1, 1, 1]} : vector<2x5x2x5x8xbf16> to vector<2x4x1x4x8xbf16>
    %113 = vector.shape_cast %112 : vector<2x4x1x4x8xbf16> to vector<2x4x4x8xbf16>
    %114 = vector.extract_strided_slice %107 {offsets = [0, 0, 1, 0, 0], sizes = [2, 4, 1, 4, 8], strides = [1, 1, 1, 1, 1]} : vector<2x5x2x5x8xbf16> to vector<2x4x1x4x8xbf16>
    %115 = vector.shape_cast %114 : vector<2x4x1x4x8xbf16> to vector<2x4x4x8xbf16>
    %116 = vector.extract_strided_slice %104 {offsets = [0, 0, 1, 1, 0], sizes = [2, 4, 1, 4, 8], strides = [1, 1, 1, 1, 1]} : vector<2x5x2x5x8xbf16> to vector<2x4x1x4x8xbf16>
    %117 = vector.shape_cast %116 : vector<2x4x1x4x8xbf16> to vector<2x4x4x8xbf16>
    %118 = vector.extract_strided_slice %107 {offsets = [0, 0, 1, 1, 0], sizes = [2, 4, 1, 4, 8], strides = [1, 1, 1, 1, 1]} : vector<2x5x2x5x8xbf16> to vector<2x4x1x4x8xbf16>
    %119 = vector.shape_cast %118 : vector<2x4x1x4x8xbf16> to vector<2x4x4x8xbf16>
    %120 = vector.extract_strided_slice %107 {offsets = [0, 1, 0, 0, 0], sizes = [2, 4, 1, 4, 8], strides = [1, 1, 1, 1, 1]} : vector<2x5x2x5x8xbf16> to vector<2x4x1x4x8xbf16>
    %121 = vector.shape_cast %120 : vector<2x4x1x4x8xbf16> to vector<2x4x4x8xbf16>
    %122 = vector.extract_strided_slice %104 {offsets = [0, 1, 0, 1, 0], sizes = [2, 4, 1, 4, 8], strides = [1, 1, 1, 1, 1]} : vector<2x5x2x5x8xbf16> to vector<2x4x1x4x8xbf16>
    %123 = vector.shape_cast %122 : vector<2x4x1x4x8xbf16> to vector<2x4x4x8xbf16>
    %124 = vector.extract_strided_slice %107 {offsets = [0, 1, 0, 1, 0], sizes = [2, 4, 1, 4, 8], strides = [1, 1, 1, 1, 1]} : vector<2x5x2x5x8xbf16> to vector<2x4x1x4x8xbf16>
    %125 = vector.shape_cast %124 : vector<2x4x1x4x8xbf16> to vector<2x4x4x8xbf16>
    %126 = tpu.concatenate %109, %111, %113, %115, %117, %119, %121, %123, %125 in 3 : vector<2x4x4x8xbf16>, vector<2x4x4x8xbf16>, vector<2x4x4x8xbf16>, vector<2x4x4x8xbf16>, vector<2x4x4x8xbf16>, vector<2x4x4x8xbf16>, vector<2x4x4x8xbf16>, vector<2x4x4x8xbf16>, vector<2x4x4x8xbf16> -> vector<2x4x4x72xbf16>
    %127 = vector.shape_cast %126 : vector<2x4x4x72xbf16> to vector<32x72xbf16>
    %cst_77 = arith.constant dense<0.000000e+00> : vector<32x16xf32>
    %128 = tpu.matmul %127, %4, %cst_77 {dimension_numbers = #tpu.dot_dimension_numbers<[1], [0], [0], [1], [0, 0, 1, 1], [], []>} : vector<32x72xbf16>, vector<72x16xbf16>, vector<32x16xf32> -> vector<32x16xf32>
    %129 = vector.broadcast %5 : vector<1x16xf32> to vector<32x16xf32>
    %130 = arith.addf %128, %129 : vector<32x16xf32>
    %cst_78 = arith.constant 0.000000e+00 : f32
    %131 = vector.broadcast %cst_78 : f32 to vector<32x16xf32>
    %132 = arith.maximumf %130, %131 : vector<32x16xf32>
    %c0_79 = arith.constant 0 : index
    %c0_80 = arith.constant 0 : index
    %c0_81 = arith.constant 0 : index
    %133 = vector.load %arg3[%c0_79, %c0_80, %c0_81] : memref<2x16x16xbf16, #tpu.memory_space<vmem>>, vector<2x16x16xbf16>
    %134 = vector.shape_cast %133 : vector<2x16x16xbf16> to vector<32x16xbf16>
    %cst_82 = arith.constant dense<0.000000e+00> : vector<32x16xf32>
    %135 = tpu.matmul %134, %6, %cst_82 {dimension_numbers = #tpu.dot_dimension_numbers<[1], [0], [0], [1], [0, 0, 1, 1], [], []>} : vector<32x16xbf16>, vector<16x16xbf16>, vector<32x16xf32> -> vector<32x16xf32>
    %136 = vector.broadcast %7 : vector<1x16xf32> to vector<32x16xf32>
    %137 = arith.addf %135, %136 : vector<32x16xf32>
    %cst_83 = arith.constant 0.000000e+00 : f32
    %138 = vector.broadcast %cst_83 : f32 to vector<32x16xf32>
    %139 = arith.maximumf %137, %138 : vector<32x16xf32>
    %140 = arith.addf %132, %139 : vector<32x16xf32>
    %141 = arith.truncf %140 : vector<32x16xf32> to vector<32x16xbf16>
    %142 = vector.shape_cast %141 : vector<32x16xbf16> to vector<2x4x4x16xbf16>
    %cst_84 = arith.constant 0.000000e+00 : bf16
    %143 = vector.broadcast %cst_84 : bf16 to vector<2x6x6x16xbf16>
    %c0_85 = arith.constant 0 : index
    %c0_86 = arith.constant 0 : index
    %c0_87 = arith.constant 0 : index
    %c0_88 = arith.constant 0 : index
    %144 = vector.load %arg18[%c0_85, %c0_86, %c0_87, %c0_88] : memref<2x6x6x16xbf16, #tpu.memory_space<vmem>>, vector<2x6x6x16xbf16>
    tpu.vector_store %arg18[%c0_85, %c0_86, %c0_87, %c0_88], %143 {strides = array<i32>} : memref<2x6x6x16xbf16, #tpu.memory_space<vmem>>, vector<2x6x6x16xbf16>,
    %c0_89 = arith.constant 0 : index
    %c1_90 = arith.constant 1 : index
    %c1_91 = arith.constant 1 : index
    %c0_92 = arith.constant 0 : index
    %145 = vector.load %arg18[%c0_89, %c1_90, %c1_91, %c0_92] : memref<2x6x6x16xbf16, #tpu.memory_space<vmem>>, vector<2x4x4x16xbf16>
    tpu.vector_store %arg18[%c0_89, %c1_90, %c1_91, %c0_92], %142 {strides = array<i32>} : memref<2x6x6x16xbf16, #tpu.memory_space<vmem>>, vector<2x4x4x16xbf16>,
    %c0_93 = arith.constant 0 : index
    %c0_94 = arith.constant 0 : index
    %c0_95 = arith.constant 0 : index
    %c0_96 = arith.constant 0 : index
    %146 = vector.load %arg18[%c0_93, %c0_94, %c0_95, %c0_96] : memref<2x6x6x16xbf16, #tpu.memory_space<vmem>>, vector<2x4x4x16xbf16>
    %c0_97 = arith.constant 0 : index
    %c0_98 = arith.constant 0 : index
    %c1_99 = arith.constant 1 : index
    %c0_100 = arith.constant 0 : index
    %147 = vector.load %arg18[%c0_97, %c0_98, %c1_99, %c0_100] : memref<2x6x6x16xbf16, #tpu.memory_space<vmem>>, vector<2x4x4x16xbf16>
    %c0_101 = arith.constant 0 : index
    %c0_102 = arith.constant 0 : index
    %c2_103 = arith.constant 2 : index
    %c0_104 = arith.constant 0 : index
    %148 = vector.load %arg18[%c0_101, %c0_102, %c2_103, %c0_104] : memref<2x6x6x16xbf16, #tpu.memory_space<vmem>>, vector<2x4x4x16xbf16>
    %c0_105 = arith.constant 0 : index
    %c1_106 = arith.constant 1 : index
    %c0_107 = arith.constant 0 : index
    %c0_108 = arith.constant 0 : index
    %149 = vector.load %arg18[%c0_105, %c1_106, %c0_107, %c0_108] : memref<2x6x6x16xbf16, #tpu.memory_space<vmem>>, vector<2x4x4x16xbf16>
    %c0_109 = arith.constant 0 : index
    %c1_110 = arith.constant 1 : index
    %c1_111 = arith.constant 1 : index
    %c0_112 = arith.constant 0 : index
    %150 = vector.load %arg18[%c0_109, %c1_110, %c1_111, %c0_112] : memref<2x6x6x16xbf16, #tpu.memory_space<vmem>>, vector<2x4x4x16xbf16>
    %c0_113 = arith.constant 0 : index
    %c1_114 = arith.constant 1 : index
    %c2_115 = arith.constant 2 : index
    %c0_116 = arith.constant 0 : index
    %151 = vector.load %arg18[%c0_113, %c1_114, %c2_115, %c0_116] : memref<2x6x6x16xbf16, #tpu.memory_space<vmem>>, vector<2x4x4x16xbf16>
    %c0_117 = arith.constant 0 : index
    %c2_118 = arith.constant 2 : index
    %c0_119 = arith.constant 0 : index
    %c0_120 = arith.constant 0 : index
    %152 = vector.load %arg18[%c0_117, %c2_118, %c0_119, %c0_120] : memref<2x6x6x16xbf16, #tpu.memory_space<vmem>>, vector<2x4x4x16xbf16>
    %c0_121 = arith.constant 0 : index
    %c2_122 = arith.constant 2 : index
    %c1_123 = arith.constant 1 : index
    %c0_124 = arith.constant 0 : index
    %153 = vector.load %arg18[%c0_121, %c2_122, %c1_123, %c0_124] : memref<2x6x6x16xbf16, #tpu.memory_space<vmem>>, vector<2x4x4x16xbf16>
    %c0_125 = arith.constant 0 : index
    %c2_126 = arith.constant 2 : index
    %c2_127 = arith.constant 2 : index
    %c0_128 = arith.constant 0 : index
    %154 = vector.load %arg18[%c0_125, %c2_126, %c2_127, %c0_128] : memref<2x6x6x16xbf16, #tpu.memory_space<vmem>>, vector<2x4x4x16xbf16>
    %155 = tpu.concatenate %146, %147, %148, %149, %150, %151, %152, %153, %154 in 3 : vector<2x4x4x16xbf16>, vector<2x4x4x16xbf16>, vector<2x4x4x16xbf16>, vector<2x4x4x16xbf16>, vector<2x4x4x16xbf16>, vector<2x4x4x16xbf16>, vector<2x4x4x16xbf16>, vector<2x4x4x16xbf16>, vector<2x4x4x16xbf16> -> vector<2x4x4x144xbf16>
    %156 = vector.shape_cast %155 : vector<2x4x4x144xbf16> to vector<32x144xbf16>
    %cst_129 = arith.constant dense<0.000000e+00> : vector<32x16xf32>
    %157 = tpu.matmul %156, %8, %cst_129 {dimension_numbers = #tpu.dot_dimension_numbers<[1], [0], [0], [1], [0, 0, 1, 1], [], []>} : vector<32x144xbf16>, vector<144x16xbf16>, vector<32x16xf32> -> vector<32x16xf32>
    %158 = vector.broadcast %9 : vector<1x16xf32> to vector<32x16xf32>
    %159 = arith.addf %157, %158 : vector<32x16xf32>
    %cst_130 = arith.constant 0.000000e+00 : f32
    %160 = vector.broadcast %cst_130 : f32 to vector<32x16xf32>
    %161 = arith.maximumf %159, %160 : vector<32x16xf32>
    %162 = vector.shape_cast %161 : vector<32x16xf32> to vector<2x16x16xf32>
    %cst_131 = arith.constant dense<0.000000e+00> : vector<2x16xf32>
    %163 = vector.multi_reduction <add>, %162, %cst_131 [1] : vector<2x16x16xf32> to vector<2x16xf32>
    %cst_132 = arith.constant 1.600000e+01 : f32
    %164 = vector.broadcast %cst_132 : f32 to vector<2x16xf32>
    %165 = arith.divf %163, %164 : vector<2x16xf32>
    %166 = arith.truncf %165 : vector<2x16xf32> to vector<2x16xbf16>
    %c0_133 = arith.constant 0 : index
    %c0_134 = arith.constant 0 : index
    %167 = vector.load %arg14[%c0_133, %c0_134] : memref<16x128xbf16, #tpu.memory_space<vmem>>, vector<16x128xbf16>
    %cst_135 = arith.constant dense<0.000000e+00> : vector<2x128xf32>
    %168 = tpu.matmul %166, %167, %cst_135 {dimension_numbers = #tpu.dot_dimension_numbers<[1], [0], [0], [1], [0, 0, 1, 1], [], []>} : vector<2x16xbf16>, vector<16x128xbf16>, vector<2x128xf32> -> vector<2x128xf32>
    %c0_136 = arith.constant 0 : index
    %c0_137 = arith.constant 0 : index
    %169 = vector.load %arg15[%c0_136, %c0_137] : memref<1x128xf32, #tpu.memory_space<vmem>>, vector<1x128xf32>
    %170 = vector.broadcast %169 : vector<1x128xf32> to vector<2x128xf32>
    %171 = arith.addf %168, %170 : vector<2x128xf32>
    %c0_138 = arith.constant 0 : index
    %c0_139 = arith.constant 0 : index
    %c0_140 = arith.constant 0 : index
    %172 = vector.load %arg16[%c0_138, %c0_139, %c0_140] : memref<2x1x128xf32, #tpu.memory_space<vmem>>, vector<2x1x128xf32>
    %173 = vector.shape_cast %172 : vector<2x1x128xf32> to vector<2x128xf32>
    %174 = vector.shape_cast %171 : vector<2x128xf32> to vector<2x1x128xf32>
    tpu.vector_store %arg16[%c0_138, %c0_139, %c0_140], %174 {strides = array<i32>} : memref<2x1x128xf32, #tpu.memory_space<vmem>>, vector<2x1x128xf32>,
    return
  }
  func.func @transform_0(%arg0: i32) -> (i32, i32, i32, i32, i32) {
    %c0_i32 = arith.constant 0 : i32
    %c0_i32_0 = arith.constant 0 : i32
    %c0_i32_1 = arith.constant 0 : i32
    %c0_i32_2 = arith.constant 0 : i32
    %c0_i32_3 = arith.constant 0 : i32
    return %arg0, %c0_i32, %c0_i32_0, %c0_i32_1, %c0_i32_2 : i32, i32, i32, i32, i32
  }
  func.func @transform_1(%arg0: i32) -> (i32, i32, i32, i32) {
    %c0_i32 = arith.constant 0 : i32
    %c0_i32_0 = arith.constant 0 : i32
    %c0_i32_1 = arith.constant 0 : i32
    %c0_i32_2 = arith.constant 0 : i32
    return %arg0, %c0_i32, %c0_i32_0, %c0_i32_1 : i32, i32, i32, i32
  }
  func.func @transform_2(%arg0: i32) -> (i32, i32, i32) {
    %c0_i32 = arith.constant 0 : i32
    %c0_i32_0 = arith.constant 0 : i32
    %c0_i32_1 = arith.constant 0 : i32
    return %arg0, %c0_i32, %c0_i32_0 : i32, i32, i32
  }
  func.func @transform_3(%arg0: i32) -> (i32, i32) {
    %c0_i32 = arith.constant 0 : i32
    %c0_i32_0 = arith.constant 0 : i32
    %c0_i32_1 = arith.constant 0 : i32
    return %c0_i32, %c0_i32_0 : i32, i32
  }
  func.func @transform_4(%arg0: i32) -> (i32, i32) {
    %c0_i32 = arith.constant 0 : i32
    %c0_i32_0 = arith.constant 0 : i32
    %c0_i32_1 = arith.constant 0 : i32
    return %c0_i32, %c0_i32_0 : i32, i32
  }
  func.func @transform_5(%arg0: i32) -> (i32, i32) {
    %c0_i32 = arith.constant 0 : i32
    %c0_i32_0 = arith.constant 0 : i32
    %c0_i32_1 = arith.constant 0 : i32
    return %c0_i32, %c0_i32_0 : i32, i32
  }
  func.func @transform_6(%arg0: i32) -> (i32, i32) {
    %c0_i32 = arith.constant 0 : i32
    %c0_i32_0 = arith.constant 0 : i32
    %c0_i32_1 = arith.constant 0 : i32
    return %c0_i32, %c0_i32_0 : i32, i32
  }
  func.func @transform_7(%arg0: i32) -> (i32, i32) {
    %c0_i32 = arith.constant 0 : i32
    %c0_i32_0 = arith.constant 0 : i32
    %c0_i32_1 = arith.constant 0 : i32
    return %c0_i32, %c0_i32_0 : i32, i32
  }
  func.func @transform_8(%arg0: i32) -> (i32, i32) {
    %c0_i32 = arith.constant 0 : i32
    %c0_i32_0 = arith.constant 0 : i32
    %c0_i32_1 = arith.constant 0 : i32
    return %c0_i32, %c0_i32_0 : i32, i32
  }
  func.func @transform_9(%arg0: i32) -> (i32, i32) {
    %c0_i32 = arith.constant 0 : i32
    %c0_i32_0 = arith.constant 0 : i32
    %c0_i32_1 = arith.constant 0 : i32
    return %c0_i32, %c0_i32_0 : i32, i32
  }
  func.func @transform_10(%arg0: i32) -> (i32, i32) {
    %c0_i32 = arith.constant 0 : i32
    %c0_i32_0 = arith.constant 0 : i32
    %c0_i32_1 = arith.constant 0 : i32
    return %c0_i32, %c0_i32_0 : i32, i32
  }
  func.func @transform_11(%arg0: i32) -> (i32, i32) {
    %c0_i32 = arith.constant 0 : i32
    %c0_i32_0 = arith.constant 0 : i32
    %c0_i32_1 = arith.constant 0 : i32
    return %c0_i32, %c0_i32_0 : i32, i32
  }
  func.func @transform_12(%arg0: i32) -> (i32, i32) {
    %c0_i32 = arith.constant 0 : i32
    %c0_i32_0 = arith.constant 0 : i32
    %c0_i32_1 = arith.constant 0 : i32
    return %c0_i32, %c0_i32_0 : i32, i32
  }
  func.func @transform_13(%arg0: i32) -> (i32, i32) {
    %c0_i32 = arith.constant 0 : i32
    %c0_i32_0 = arith.constant 0 : i32
    %c0_i32_1 = arith.constant 0 : i32
    return %c0_i32, %c0_i32_0 : i32, i32
  }
  func.func @transform_14(%arg0: i32) -> (i32, i32) {
    %c0_i32 = arith.constant 0 : i32
    %c0_i32_0 = arith.constant 0 : i32
    %c0_i32_1 = arith.constant 0 : i32
    return %c0_i32, %c0_i32_0 : i32, i32
  }
  func.func @transform_15(%arg0: i32) -> (i32, i32, i32) {
    %c0_i32 = arith.constant 0 : i32
    %c0_i32_0 = arith.constant 0 : i32
    %c0_i32_1 = arith.constant 0 : i32
    return %arg0, %c0_i32, %c0_i32_0 : i32, i32, i32
  }
}

</mosaic_0001>

<llo_original>
// kernel: shake_head_forward.1
$region0: #{shake_head_forward.1}
  #allocation0 [shape = 'u32[]', space=smem, size = 0x4, offset = 0x4, fixed_abs, tag = 'smem constant byte address 0x4 - core index']
  #allocation1 [shape = 'u32[144,128]{1,0:T(1,128)}', space=vmem, size = 0x12000, scoped, tag = 'internal scratch']
  #allocation2 [shape = 'bf16[2,2,10,5,8]{4,3,2,1,0:T(8,128)(2,1)}', space=vmem, size = 0x14000, scoped, tag = 'scratch operand']
  #allocation3 [shape = 'bf16[2,6,6,16]{3,2,1,0:T(8,128)(2,1)}', space=vmem, size = 0x6000, scoped, tag = 'scratch operand']
  %s0 = inlined_call_operand.vmem [shape: bf16[2,4,18,5,4], index: 0, kind: input, shape index: {}]
  %s1 = inlined_call_operand.vmem [shape: bf16[2,2,32,8], index: 1, kind: input, shape index: {}]
  %s2 = inlined_call_operand.vmem [shape: bf16[2,16,16], index: 2, kind: input, shape index: {}]
  %s3 = inlined_call_operand.vmem [shape: bf16[36,8], index: 3, kind: input, shape index: {}]
  %s4 = inlined_call_operand.vmem [shape: f32[1,8], index: 4, kind: input, shape index: {}]
  %s5 = inlined_call_operand.vmem [shape: bf16[8,8], index: 5, kind: input, shape index: {}]
  %s6 = inlined_call_operand.vmem [shape: f32[1,8], index: 6, kind: input, shape index: {}]
  %s7 = inlined_call_operand.vmem [shape: bf16[72,16], index: 7, kind: input, shape index: {}]
  %s8 = inlined_call_operand.vmem [shape: f32[1,16], index: 8, kind: input, shape index: {}]
  %s9 = inlined_call_operand.vmem [shape: bf16[16,16], index: 9, kind: input, shape index: {}]
  %s10 = inlined_call_operand.vmem [shape: f32[1,16], index: 10, kind: input, shape index: {}]
  %s11 = inlined_call_operand.vmem [shape: bf16[144,16], index: 11, kind: input, shape index: {}]
  %s12 = inlined_call_operand.vmem [shape: f32[1,16], index: 12, kind: input, shape index: {}]
  %s13 = inlined_call_operand.vmem [shape: bf16[16,128], index: 13, kind: input, shape index: {}]
  %s14 = inlined_call_operand.vmem [shape: f32[1,128], index: 14, kind: input, shape index: {}]
  %s15 = inlined_call_operand.hbm [shape: f32[2,1,128], index: 15, kind: output, shape index: {}]
  %s16 = sld [smem:[#allocation0]]
  $region70: #{shake_head_forward.1} parent=0
    _
  %s18 = ssub.s32 1, %s16
  %s19 = scalar_select 0, %s18, %s16
  $region1: #{shake_head_forward.1} parent=0
    #allocation4 [shape = 'u8[1024]{0}', space=vmem, size = 0x400, scoped, tag = 'output window, operand 0, single buffered']
    #allocation5 [shape = 's32[1]{0}', space=sflag, size = 0x4, scoped, tag = 'scoped memory for shake_head_forward.1']
    %20 = vsyncpa [#allocation5], 0
    // Predicated region
    $region2: #{shake_head_forward.1} parent=1 // pred_check
      _
    $region3: #{shake_head_forward.1} parent=1 // pred_check_branch
      %22 = sbr.rel (0) target = $region5
    $region4: #{shake_head_forward.1} parent=1 // pred_region
      _
    $region5: #{shake_head_forward.1} parent=1 // pred_fallthru
      _
    // Predicated region
    $region6: #{shake_head_forward.1} parent=1 // pred_check
      _
    $region7: #{shake_head_forward.1} parent=1 // pred_check_branch
      %24 = sbr.rel (0) target = $region9
    $region8: #{shake_head_forward.1} parent=1 // pred_region
      _
    $region9: #{shake_head_forward.1} parent=1 // pred_fallthru
      _
    // Predicated region
    $region10: #{shake_head_forward.1} parent=1 // pred_check
      _
    $region11: #{shake_head_forward.1} parent=1 // pred_check_branch
      %26 = sbr.rel (0) target = $region13
    $region12: #{shake_head_forward.1} parent=1 // pred_region
      _
    $region13: #{shake_head_forward.1} parent=1 // pred_fallthru
      _
    // Predicated region
    $region14: #{shake_head_forward.1} parent=1 // pred_check
      _
    $region15: #{shake_head_forward.1} parent=1 // pred_check_branch
      %28 = sbr.rel (0) target = $region17
    $region16: #{shake_head_forward.1} parent=1 // pred_region
      _
    $region17: #{shake_head_forward.1} parent=1 // pred_fallthru
      _
    // Predicated region
    $region18: #{shake_head_forward.1} parent=1 // pred_check
      _
    $region19: #{shake_head_forward.1} parent=1 // pred_check_branch
      %30 = sbr.rel (0) target = $region21
    $region20: #{shake_head_forward.1} parent=1 // pred_region
      _
    $region21: #{shake_head_forward.1} parent=1 // pred_fallthru
      _
    // Predicated region
    $region22: #{shake_head_forward.1} parent=1 // pred_check
      _
    $region23: #{shake_head_forward.1} parent=1 // pred_check_branch
      %32 = sbr.rel (0) target = $region25
    $region24: #{shake_head_forward.1} parent=1 // pred_region
      _
    $region25: #{shake_head_forward.1} parent=1 // pred_fallthru
      _
    // Predicated region
    $region26: #{shake_head_forward.1} parent=1 // pred_check
      _
    $region27: #{shake_head_forward.1} parent=1 // pred_check_branch
      %34 = sbr.rel (0) target = $region29
    $region28: #{shake_head_forward.1} parent=1 // pred_region
      _
    $region29: #{shake_head_forward.1} parent=1 // pred_fallthru
      _
    // Predicated region
    $region30: #{shake_head_forward.1} parent=1 // pred_check
      _
    $region31: #{shake_head_forward.1} parent=1 // pred_check_branch
      %36 = sbr.rel (0) target = $region33
    $region32: #{shake_head_forward.1} parent=1 // pred_region
      _
    $region33: #{shake_head_forward.1} parent=1 // pred_fallthru
      _
    // Predicated region
    $region34: #{shake_head_forward.1} parent=1 // pred_check
      _
    $region35: #{shake_head_forward.1} parent=1 // pred_check_branch
      %38 = sbr.rel (0) target = $region37
    $region36: #{shake_head_forward.1} parent=1 // pred_region
      _
    $region37: #{shake_head_forward.1} parent=1 // pred_fallthru
      _
    // Predicated region
    $region38: #{shake_head_forward.1} parent=1 // pred_check
      _
    $region39: #{shake_head_forward.1} parent=1 // pred_check_branch
      %40 = sbr.rel (0) target = $region41
    $region40: #{shake_head_forward.1} parent=1 // pred_region
      _
    $region41: #{shake_head_forward.1} parent=1 // pred_fallthru
      _
    // Predicated region
    $region42: #{shake_head_forward.1} parent=1 // pred_check
      _
    $region43: #{shake_head_forward.1} parent=1 // pred_check_branch
      %42 = sbr.rel (0) target = $region45
    $region44: #{shake_head_forward.1} parent=1 // pred_region
      _
    $region45: #{shake_head_forward.1} parent=1 // pred_fallthru
      _
    // Predicated region
    $region46: #{shake_head_forward.1} parent=1 // pred_check
      _
    $region47: #{shake_head_forward.1} parent=1 // pred_check_branch
      %44 = sbr.rel (0) target = $region49
    $region48: #{shake_head_forward.1} parent=1 // pred_region
      _
    $region49: #{shake_head_forward.1} parent=1 // pred_fallthru
      _
    // Predicated region
    $region50: #{shake_head_forward.1} parent=1 // pred_check
      _
    $region51: #{shake_head_forward.1} parent=1 // pred_check_branch
      %46 = sbr.rel (0) target = $region53
    $region52: #{shake_head_forward.1} parent=1 // pred_region
      _
    $region53: #{shake_head_forward.1} parent=1 // pred_fallthru
      _
    // Predicated region
    $region54: #{shake_head_forward.1} parent=1 // pred_check
      _
    $region55: #{shake_head_forward.1} parent=1 // pred_check_branch
      %48 = sbr.rel (0) target = $region57
    $region56: #{shake_head_forward.1} parent=1 // pred_region
      _
    $region57: #{shake_head_forward.1} parent=1 // pred_fallthru
      _
    // Predicated region
    $region58: #{shake_head_forward.1} parent=1 // pred_check
      _
    $region59: #{shake_head_forward.1} parent=1 // pred_check_branch
      %50 = sbr.rel (0) target = $region61
    $region60: #{shake_head_forward.1} parent=1 // pred_region
      _
    $region61: #{shake_head_forward.1} parent=1 // pred_fallthru
      _
    %v52 = vld [vmem:[%s3] sm:$0xf]
    %v53 = vld [vmem:[%s3 + $0x4] sm:$0xf]
    %v54 = vld [vmem:[%s3 + $0x8] sm:$0xf]
    %v55 = vld [vmem:[%s3 + $0xc] sm:$0xf]
    %v56 = vld [vmem:[%s3 + $0x10] sm:$0x3]
    %v57 = vld [vmem:[%s4] sm:$0x1]
    %v58 = vld [vmem:[%s5] sm:$0xf]
    %v59 = vld [vmem:[%s6] sm:$0x1]
    %v60 = vld [vmem:[%s7] sm:$0xf]
    %v61 = vld [vmem:[%s7 + $0x4] sm:$0xf]
    %v62 = vld [vmem:[%s7 + $0x8] sm:$0xf]
    %v63 = vld [vmem:[%s7 + $0xc] sm:$0xf]
    %v64 = vld [vmem:[%s7 + $0x10] sm:$0xf]
    %v65 = vld [vmem:[%s7 + $0x14] sm:$0xf]
    %v66 = vld [vmem:[%s7 + $0x18] sm:$0xf]
    %v67 = vld [vmem:[%s7 + $0x1c] sm:$0xf]
    %v68 = vld [vmem:[%s7 + $0x20] sm:$0xf]
    %v69 = vld [vmem:[%s8] sm:$0x1]
    %v70 = vld [vmem:[%s9] sm:$0xf]
    %v71 = vld [vmem:[%s9 + $0x4] sm:$0xf]
    %v72 = vld [vmem:[%s10] sm:$0x1]
    %v73 = vld [vmem:[%s11] sm:$0xf]
    %v74 = vld [vmem:[%s11 + $0x4] sm:$0xf]
    %v75 = vld [vmem:[%s11 + $0x8] sm:$0xf]
    %v76 = vld [vmem:[%s11 + $0xc] sm:$0xf]
    %v77 = vld [vmem:[%s11 + $0x10] sm:$0xf]
    %v78 = vld [vmem:[%s11 + $0x14] sm:$0xf]
    %v79 = vld [vmem:[%s11 + $0x18] sm:$0xf]
    %v80 = vld [vmem:[%s11 + $0x1c] sm:$0xf]
    %v81 = vld [vmem:[%s11 + $0x20] sm:$0xf]
    %v82 = vld [vmem:[%s11 + $0x24] sm:$0xf]
    %v83 = vld [vmem:[%s11 + $0x28] sm:$0xf]
    %v84 = vld [vmem:[%s11 + $0x2c] sm:$0xf]
    %v85 = vld [vmem:[%s11 + $0x30] sm:$0xf]
    %v86 = vld [vmem:[%s11 + $0x34] sm:$0xf]
    %v87 = vld [vmem:[%s11 + $0x38] sm:$0xf]
    %v88 = vld [vmem:[%s11 + $0x3c] sm:$0xf]
    %v89 = vld [vmem:[%s11 + $0x40] sm:$0xf]
    %v90 = vld [vmem:[%s11 + $0x44] sm:$0xf]
    %v91 = vld [vmem:[%s12] sm:$0x1]
    %vm92 = vcmask 59392
    %vm93 = vsmask.f32 2304
    %vm94 = vmand %vm92, %vm93
    %v95 = vld [vmem:[#allocation2] sm:$0x7]
    %v96 = vsel %vm94, 0, %v95
    %97 = vst [vmem:[#allocation2] sm:$0x7] %v96
    %v98 = vld [vmem:[#allocation2 + $0x4] sm:$0x7]
    %v99 = vsel %vm94, 0, %v98
    %100 = vst [vmem:[#allocation2 + $0x4] sm:$0x7] %v99
    %v101 = vld [vmem:[#allocation2 + $0x8] sm:$0x7]
    %v102 = vsel %vm94, 0, %v101
    %103 = vst [vmem:[#allocation2 + $0x8] sm:$0x7] %v102
    %v104 = vld [vmem:[#allocation2 + $0xc] sm:$0x7]
    %v105 = vsel %vm94, 0, %v104
    %106 = vst [vmem:[#allocation2 + $0xc] sm:$0x7] %v105
    %v107 = vld [vmem:[#allocation2 + $0x10] sm:$0x7]
    %v108 = vsel %vm94, 0, %v107
    %109 = vst [vmem:[#allocation2 + $0x10] sm:$0x7] %v108
    %v110 = vld [vmem:[#allocation2 + $0x14] sm:$0x7]
    %v111 = vsel %vm94, 0, %v110
    %112 = vst [vmem:[#allocation2 + $0x14] sm:$0x7] %v111
    %v113 = vld [vmem:[#allocation2 + $0x18] sm:$0x7]
    %v114 = vsel %vm94, 0, %v113
    %115 = vst [vmem:[#allocation2 + $0x18] sm:$0x7] %v114
    %v116 = vld [vmem:[#allocation2 + $0x1c] sm:$0x7]
    %v117 = vsel %vm94, 0, %v116
    %118 = vst [vmem:[#allocation2 + $0x1c] sm:$0x7] %v117
    %v119 = vld [vmem:[#allocation2 + $0x20] sm:$0x7]
    %v120 = vsel %vm94, 0, %v119
    %121 = vst [vmem:[#allocation2 + $0x20] sm:$0x7] %v120
    %v122 = vld [vmem:[#allocation2 + $0x24] sm:$0x7]
    %v123 = vsel %vm94, 0, %v122
    %124 = vst [vmem:[#allocation2 + $0x24] sm:$0x7] %v123
    %v125 = vld [vmem:[#allocation2 + $0x28] sm:$0x7]
    %v126 = vsel %vm94, 0, %v125
    %127 = vst [vmem:[#allocation2 + $0x28] sm:$0x7] %v126
    %v128 = vld [vmem:[#allocation2 + $0x2c] sm:$0x7]
    %v129 = vsel %vm94, 0, %v128
    %130 = vst [vmem:[#allocation2 + $0x2c] sm:$0x7] %v129
    %v131 = vld [vmem:[#allocation2 + $0x30] sm:$0x7]
    %v132 = vsel %vm94, 0, %v131
    %133 = vst [vmem:[#allocation2 + $0x30] sm:$0x7] %v132
    %v134 = vld [vmem:[#allocation2 + $0x34] sm:$0x7]
    %v135 = vsel %vm94, 0, %v134
    %136 = vst [vmem:[#allocation2 + $0x34] sm:$0x7] %v135
    %v137 = vld [vmem:[#allocation2 + $0x38] sm:$0x7]
    %v138 = vsel %vm94, 0, %v137
    %139 = vst [vmem:[#allocation2 + $0x38] sm:$0x7] %v138
    %v140 = vld [vmem:[#allocation2 + $0x3c] sm:$0x7]
    %v141 = vsel %vm94, 0, %v140
    %142 = vst [vmem:[#allocation2 + $0x3c] sm:$0x7] %v141
    %v143 = vld [vmem:[#allocation2 + $0x40] sm:$0x7]
    %v144 = vsel %vm94, 0, %v143
    %145 = vst [vmem:[#allocation2 + $0x40] sm:$0x7] %v144
    %v146 = vld [vmem:[#allocation2 + $0x44] sm:$0x7]
    %v147 = vsel %vm94, 0, %v146
    %148 = vst [vmem:[#allocation2 + $0x44] sm:$0x7] %v147
    %v149 = vld [vmem:[#allocation2 + $0x48] sm:$0x7]
    %v150 = vsel %vm94, 0, %v149
    %151 = vst [vmem:[#allocation2 + $0x48] sm:$0x7] %v150
    %v152 = vld [vmem:[#allocation2 + $0x4c] sm:$0x7]
    %v153 = vsel %vm94, 0, %v152
    %154 = vst [vmem:[#allocation2 + $0x4c] sm:$0x7] %v153
    %v155 = vld [vmem:[#allocation2 + $0x50] sm:$0x7]
    %v156 = vsel %vm94, 0, %v155
    %157 = vst [vmem:[#allocation2 + $0x50] sm:$0x7] %v156
    %v158 = vld [vmem:[#allocation2 + $0x54] sm:$0x7]
    %v159 = vsel %vm94, 0, %v158
    %160 = vst [vmem:[#allocation2 + $0x54] sm:$0x7] %v159
    %v161 = vld [vmem:[#allocation2 + $0x58] sm:$0x7]
    %v162 = vsel %vm94, 0, %v161
    %163 = vst [vmem:[#allocation2 + $0x58] sm:$0x7] %v162
    %v164 = vld [vmem:[#allocation2 + $0x5c] sm:$0x7]
    %v165 = vsel %vm94, 0, %v164
    %166 = vst [vmem:[#allocation2 + $0x5c] sm:$0x7] %v165
    %v167 = vld [vmem:[#allocation2 + $0x60] sm:$0x7]
    %v168 = vsel %vm94, 0, %v167
    %169 = vst [vmem:[#allocation2 + $0x60] sm:$0x7] %v168
    %v170 = vld [vmem:[#allocation2 + $0x64] sm:$0x7]
    %v171 = vsel %vm94, 0, %v170
    %172 = vst [vmem:[#allocation2 + $0x64] sm:$0x7] %v171
    %v173 = vld [vmem:[#allocation2 + $0x68] sm:$0x7]
    %v174 = vsel %vm94, 0, %v173
    %175 = vst [vmem:[#allocation2 + $0x68] sm:$0x7] %v174
    %v176 = vld [vmem:[#allocation2 + $0x6c] sm:$0x7]
    %v177 = vsel %vm94, 0, %v176
    %178 = vst [vmem:[#allocation2 + $0x6c] sm:$0x7] %v177
    %v179 = vld [vmem:[#allocation2 + $0x70] sm:$0x7]
    %v180 = vsel %vm94, 0, %v179
    %181 = vst [vmem:[#allocation2 + $0x70] sm:$0x7] %v180
    %v182 = vld [vmem:[#allocation2 + $0x74] sm:$0x7]
    %v183 = vsel %vm94, 0, %v182
    %184 = vst [vmem:[#allocation2 + $0x74] sm:$0x7] %v183
    %v185 = vld [vmem:[#allocation2 + $0x78] sm:$0x7]
    %v186 = vsel %vm94, 0, %v185
    %187 = vst [vmem:[#allocation2 + $0x78] sm:$0x7] %v186
    %v188 = vld [vmem:[#allocation2 + $0x7c] sm:$0x7]
    %v189 = vsel %vm94, 0, %v188
    %190 = vst [vmem:[#allocation2 + $0x7c] sm:$0x7] %v189
    %v191 = vld [vmem:[#allocation2 + $0x80] sm:$0x7]
    %v192 = vsel %vm94, 0, %v191
    %193 = vst [vmem:[#allocation2 + $0x80] sm:$0x7] %v192
    %v194 = vld [vmem:[#allocation2 + $0x84] sm:$0x7]
    %v195 = vsel %vm94, 0, %v194
    %196 = vst [vmem:[#allocation2 + $0x84] sm:$0x7] %v195
    %v197 = vld [vmem:[#allocation2 + $0x88] sm:$0x7]
    %v198 = vsel %vm94, 0, %v197
    %199 = vst [vmem:[#allocation2 + $0x88] sm:$0x7] %v198
    %v200 = vld [vmem:[#allocation2 + $0x8c] sm:$0x7]
    %v201 = vsel %vm94, 0, %v200
    %202 = vst [vmem:[#allocation2 + $0x8c] sm:$0x7] %v201
    %v203 = vld [vmem:[#allocation2 + $0x90] sm:$0x7]
    %v204 = vsel %vm94, 0, %v203
    %205 = vst [vmem:[#allocation2 + $0x90] sm:$0x7] %v204
    %v206 = vld [vmem:[#allocation2 + $0x94] sm:$0x7]
    %v207 = vsel %vm94, 0, %v206
    %208 = vst [vmem:[#allocation2 + $0x94] sm:$0x7] %v207
    %v209 = vld [vmem:[#allocation2 + $0x98] sm:$0x7]
    %v210 = vsel %vm94, 0, %v209
    %211 = vst [vmem:[#allocation2 + $0x98] sm:$0x7] %v210
    %v212 = vld [vmem:[#allocation2 + $0x9c] sm:$0x7]
    %v213 = vsel %vm94, 0, %v212
    %214 = vst [vmem:[#allocation2 + $0x9c] sm:$0x7] %v213
    %v215 = vld [vmem:[%s0] sm:$0x7]
    %v216 = vld [vmem:[%s0 + $0x4] sm:$0x7]
    %v217 = vld [vmem:[%s0 + $0x8] sm:$0x7]
    %v218 = vld [vmem:[%s0 + $0xc] sm:$0x7]
    %v219 = vld [vmem:[%s0 + $0x10] sm:$0x7]
    %v220 = vld [vmem:[%s0 + $0x14] sm:$0x7]
    %v221 = vld [vmem:[%s0 + $0x18] sm:$0x7]
    %v222 = vld [vmem:[%s0 + $0x1c] sm:$0x7]
    %v223 = vld [vmem:[%s0 + $0x20] sm:$0x7]
    %v224 = vld [vmem:[%s0 + $0x24] sm:$0x7]
    %v225 = vld [vmem:[%s0 + $0x28] sm:$0x7]
    %v226 = vld [vmem:[%s0 + $0x2c] sm:$0x7]
    %v227 = vld [vmem:[%s0 + $0x30] sm:$0x7]
    %v228 = vld [vmem:[%s0 + $0x34] sm:$0x7]
    %v229 = vld [vmem:[%s0 + $0x38] sm:$0x7]
    %v230 = vld [vmem:[%s0 + $0x3c] sm:$0x7]
    %v231 = vld [vmem:[%s0 + $0x40] sm:$0x7]
    %v232 = vld [vmem:[%s0 + $0x120] sm:$0x7]
    %v233 = vld [vmem:[%s0 + $0x124] sm:$0x7]
    %v234 = vld [vmem:[%s0 + $0x128] sm:$0x7]
    %v235 = vld [vmem:[%s0 + $0x12c] sm:$0x7]
    %v236 = vld [vmem:[%s0 + $0x130] sm:$0x7]
    %v237 = vld [vmem:[%s0 + $0x134] sm:$0x7]
    %v238 = vld [vmem:[%s0 + $0x138] sm:$0x7]
    %v239 = vld [vmem:[%s0 + $0x13c] sm:$0x7]
    %v240 = vld [vmem:[%s0 + $0x140] sm:$0x7]
    %v241 = vld [vmem:[%s0 + $0x144] sm:$0x7]
    %v242 = vld [vmem:[%s0 + $0x148] sm:$0x7]
    %v243 = vld [vmem:[%s0 + $0x14c] sm:$0x7]
    %v244 = vld [vmem:[%s0 + $0x150] sm:$0x7]
    %v245 = vld [vmem:[%s0 + $0x154] sm:$0x7]
    %v246 = vld [vmem:[%s0 + $0x158] sm:$0x7]
    %v247 = vld [vmem:[%s0 + $0x15c] sm:$0x7]
    %v248 = vld [vmem:[%s0 + $0x160] sm:$0x7]
    %s249 = scalar_lea.vmem %s0, 72
    %v250 = vld [vmem:[%s249] sm:$0x7]
    %v251 = vld [vmem:[%s249 + $0x4] sm:$0x7]
    %v252 = vld [vmem:[%s249 + $0x8] sm:$0x7]
    %v253 = vld [vmem:[%s249 + $0xc] sm:$0x7]
    %v254 = vld [vmem:[%s249 + $0x10] sm:$0x7]
    %v255 = vld [vmem:[%s249 + $0x14] sm:$0x7]
    %v256 = vld [vmem:[%s249 + $0x18] sm:$0x7]
    %v257 = vld [vmem:[%s249 + $0x1c] sm:$0x7]
    %v258 = vld [vmem:[%s249 + $0x20] sm:$0x7]
    %v259 = vld [vmem:[%s249 + $0x24] sm:$0x7]
    %v260 = vld [vmem:[%s249 + $0x28] sm:$0x7]
    %v261 = vld [vmem:[%s249 + $0x2c] sm:$0x7]
    %v262 = vld [vmem:[%s249 + $0x30] sm:$0x7]
    %v263 = vld [vmem:[%s249 + $0x34] sm:$0x7]
    %v264 = vld [vmem:[%s249 + $0x38] sm:$0x7]
    %v265 = vld [vmem:[%s249 + $0x3c] sm:$0x7]
    %v266 = vld [vmem:[%s249 + $0x40] sm:$0x7]
    %v267 = vld [vmem:[%s249 + $0x120] sm:$0x7]
    %v268 = vld [vmem:[%s249 + $0x124] sm:$0x7]
    %v269 = vld [vmem:[%s249 + $0x128] sm:$0x7]
    %v270 = vld [vmem:[%s249 + $0x12c] sm:$0x7]
    %v271 = vld [vmem:[%s249 + $0x130] sm:$0x7]
    %v272 = vld [vmem:[%s249 + $0x134] sm:$0x7]
    %v273 = vld [vmem:[%s249 + $0x138] sm:$0x7]
    %v274 = vld [vmem:[%s249 + $0x13c] sm:$0x7]
    %v275 = vld [vmem:[%s249 + $0x140] sm:$0x7]
    %v276 = vld [vmem:[%s249 + $0x144] sm:$0x7]
    %v277 = vld [vmem:[%s249 + $0x148] sm:$0x7]
    %v278 = vld [vmem:[%s249 + $0x14c] sm:$0x7]
    %v279 = vld [vmem:[%s249 + $0x150] sm:$0x7]
    %v280 = vld [vmem:[%s249 + $0x154] sm:$0x7]
    %v281 = vld [vmem:[%s249 + $0x158] sm:$0x7]
    %v282 = vld [vmem:[%s249 + $0x15c] sm:$0x7]
    %v283 = vld [vmem:[%s249 + $0x160] sm:$0x7]
    %s284 = scalar_lea.vmem %s0, 144
    %v285 = vld [vmem:[%s284] sm:$0x7]
    %v286 = vld [vmem:[%s284 + $0x4] sm:$0x7]
    %v287 = vld [vmem:[%s284 + $0x8] sm:$0x7]
    %v288 = vld [vmem:[%s284 + $0xc] sm:$0x7]
    %v289 = vld [vmem:[%s284 + $0x10] sm:$0x7]
    %v290 = vld [vmem:[%s284 + $0x14] sm:$0x7]
    %v291 = vld [vmem:[%s284 + $0x18] sm:$0x7]
    %v292 = vld [vmem:[%s284 + $0x1c] sm:$0x7]
    %v293 = vld [vmem:[%s284 + $0x20] sm:$0x7]
    %v294 = vld [vmem:[%s284 + $0x24] sm:$0x7]
    %v295 = vld [vmem:[%s284 + $0x28] sm:$0x7]
    %v296 = vld [vmem:[%s284 + $0x2c] sm:$0x7]
    %v297 = vld [vmem:[%s284 + $0x30] sm:$0x7]
    %v298 = vld [vmem:[%s284 + $0x34] sm:$0x7]
    %v299 = vld [vmem:[%s284 + $0x38] sm:$0x7]
    %v300 = vld [vmem:[%s284 + $0x3c] sm:$0x7]
    %v301 = vld [vmem:[%s284 + $0x40] sm:$0x7]
    %v302 = vld [vmem:[%s284 + $0x120] sm:$0x7]
    %v303 = vld [vmem:[%s284 + $0x124] sm:$0x7]
    %v304 = vld [vmem:[%s284 + $0x128] sm:$0x7]
    %v305 = vld [vmem:[%s284 + $0x12c] sm:$0x7]
    %v306 = vld [vmem:[%s284 + $0x130] sm:$0x7]
    %v307 = vld [vmem:[%s284 + $0x134] sm:$0x7]
    %v308 = vld [vmem:[%s284 + $0x138] sm:$0x7]
    %v309 = vld [vmem:[%s284 + $0x13c] sm:$0x7]
    %v310 = vld [vmem:[%s284 + $0x140] sm:$0x7]
    %v311 = vld [vmem:[%s284 + $0x144] sm:$0x7]
    %v312 = vld [vmem:[%s284 + $0x148] sm:$0x7]
    %v313 = vld [vmem:[%s284 + $0x14c] sm:$0x7]
    %v314 = vld [vmem:[%s284 + $0x150] sm:$0x7]
    %v315 = vld [vmem:[%s284 + $0x154] sm:$0x7]
    %v316 = vld [vmem:[%s284 + $0x158] sm:$0x7]
    %v317 = vld [vmem:[%s284 + $0x15c] sm:$0x7]
    %v318 = vld [vmem:[%s284 + $0x160] sm:$0x7]
    %s319 = scalar_lea.vmem %s0, 216
    %v320 = vld [vmem:[%s319] sm:$0x7]
    %v321 = vld [vmem:[%s319 + $0x4] sm:$0x7]
    %v322 = vld [vmem:[%s319 + $0x8] sm:$0x7]
    %v323 = vld [vmem:[%s319 + $0xc] sm:$0x7]
    %v324 = vld [vmem:[%s319 + $0x10] sm:$0x7]
    %v325 = vld [vmem:[%s319 + $0x14] sm:$0x7]
    %v326 = vld [vmem:[%s319 + $0x18] sm:$0x7]
    %v327 = vld [vmem:[%s319 + $0x1c] sm:$0x7]
    %v328 = vld [vmem:[%s319 + $0x20] sm:$0x7]
    %v329 = vld [vmem:[%s319 + $0x24] sm:$0x7]
    %v330 = vld [vmem:[%s319 + $0x28] sm:$0x7]
    %v331 = vld [vmem:[%s319 + $0x2c] sm:$0x7]
    %v332 = vld [vmem:[%s319 + $0x30] sm:$0x7]
    %v333 = vld [vmem:[%s319 + $0x34] sm:$0x7]
    %v334 = vld [vmem:[%s319 + $0x38] sm:$0x7]
    %v335 = vld [vmem:[%s319 + $0x3c] sm:$0x7]
    %v336 = vld [vmem:[%s319 + $0x40] sm:$0x7]
    %v337 = vld [vmem:[%s319 + $0x120] sm:$0x7]
    %v338 = vld [vmem:[%s319 + $0x124] sm:$0x7]
    %v339 = vld [vmem:[%s319 + $0x128] sm:$0x7]
    %v340 = vld [vmem:[%s319 + $0x12c] sm:$0x7]
    %v341 = vld [vmem:[%s319 + $0x130] sm:$0x7]
    %v342 = vld [vmem:[%s319 + $0x134] sm:$0x7]
    %v343 = vld [vmem:[%s319 + $0x138] sm:$0x7]
    %v344 = vld [vmem:[%s319 + $0x13c] sm:$0x7]
    %v345 = vld [vmem:[%s319 + $0x140] sm:$0x7]
    %v346 = vld [vmem:[%s319 + $0x144] sm:$0x7]
    %v347 = vld [vmem:[%s319 + $0x148] sm:$0x7]
    %v348 = vld [vmem:[%s319 + $0x14c] sm:$0x7]
    %v349 = vld [vmem:[%s319 + $0x150] sm:$0x7]
    %v350 = vld [vmem:[%s319 + $0x154] sm:$0x7]
    %v351 = vld [vmem:[%s319 + $0x158] sm:$0x7]
    %v352 = vld [vmem:[%s319 + $0x15c] sm:$0x7]
    %v353 = vld [vmem:[%s319 + $0x160] sm:$0x7]
    %v370 = vunpack.c.l.b16 %v250
    %v371 = vunpack.c.l.b16 %v252
    %v372 = vunpack.c.l.b16 %v254
    %v373 = vunpack.c.l.b16 %v256
    %v374 = vunpack.c.l.b16 %v258
    %v375 = vunpack.c.l.b16 %v260
    %v376 = vunpack.c.l.b16 %v262
    %v377 = vunpack.c.l.b16 %v264
    %v378 = vunpack.c.l.b16 %v267
    %v379 = vunpack.c.l.b16 %v269
    %v380 = vunpack.c.l.b16 %v271
    %v381 = vunpack.c.l.b16 %v273
    %v382 = vunpack.c.l.b16 %v275
    %v383 = vunpack.c.l.b16 %v277
    %v384 = vunpack.c.l.b16 %v279
    %v385 = vunpack.c.l.b16 %v281
    %v386 = vpack.c.b16 %v370, %v370
    %v387 = vpack.c.b16 %v371, %v371
    %v388 = vpack.c.b16 %v372, %v372
    %v389 = vpack.c.b16 %v373, %v373
    %v390 = vpack.c.b16 %v374, %v374
    %v391 = vpack.c.b16 %v375, %v375
    %v392 = vpack.c.b16 %v376, %v376
    %v393 = vpack.c.b16 %v377, %v377
    %v394 = vpack.c.b16 %v378, %v378
    %v395 = vpack.c.b16 %v379, %v379
    %v396 = vpack.c.b16 %v380, %v380
    %v397 = vpack.c.b16 %v381, %v381
    %v398 = vpack.c.b16 %v382, %v382
    %v399 = vpack.c.b16 %v383, %v383
    %v400 = vpack.c.b16 %v384, %v384
    %v401 = vpack.c.b16 %v385, %v385
    %402 = vrot.lane.b32.xlu0 %v386, 4
    %v403 = vpop.permute.xlu0 %402
    %404 = vrot.lane.b32.xlu0 %v387, 4
    %v405 = vpop.permute.xlu0 %404
    %406 = vrot.lane.b32.xlu0 %v388, 4
    %v407 = vpop.permute.xlu0 %406
    %408 = vrot.lane.b32.xlu0 %v389, 4
    %v409 = vpop.permute.xlu0 %408
    %410 = vrot.lane.b32.xlu0 %v390, 4
    %v411 = vpop.permute.xlu0 %410
    %412 = vrot.lane.b32.xlu0 %v391, 4
    %v413 = vpop.permute.xlu0 %412
    %414 = vrot.lane.b32.xlu0 %v392, 4
    %v415 = vpop.permute.xlu0 %414
    %416 = vrot.lane.b32.xlu0 %v393, 4
    %v417 = vpop.permute.xlu0 %416
    %418 = vrot.lane.b32.xlu0 %v394, 4
    %v419 = vpop.permute.xlu0 %418
    %420 = vrot.lane.b32.xlu0 %v395, 4
    %v421 = vpop.permute.xlu0 %420
    %422 = vrot.lane.b32.xlu0 %v396, 4
    %v423 = vpop.permute.xlu0 %422
    %424 = vrot.lane.b32.xlu0 %v397, 4
    %v425 = vpop.permute.xlu0 %424
    %426 = vrot.lane.b32.xlu0 %v398, 4
    %v427 = vpop.permute.xlu0 %426
    %428 = vrot.lane.b32.xlu0 %v399, 4
    %v429 = vpop.permute.xlu0 %428
    %430 = vrot.lane.b32.xlu0 %v400, 4
    %v431 = vpop.permute.xlu0 %430
    %432 = vrot.lane.b32.xlu0 %v401, 4
    %v433 = vpop.permute.xlu0 %432
    %v450 = vunpack.c.l.b16 %v285
    %v451 = vunpack.c.l.b16 %v287
    %v452 = vunpack.c.l.b16 %v289
    %v453 = vunpack.c.l.b16 %v291
    %v454 = vunpack.c.l.b16 %v293
    %v455 = vunpack.c.l.b16 %v295
    %v456 = vunpack.c.l.b16 %v297
    %v457 = vunpack.c.l.b16 %v299
    %v458 = vunpack.c.l.b16 %v302
    %v459 = vunpack.c.l.b16 %v304
    %v460 = vunpack.c.l.b16 %v306
    %v461 = vunpack.c.l.b16 %v308
    %v462 = vunpack.c.l.b16 %v310
    %v463 = vunpack.c.l.b16 %v312
    %v464 = vunpack.c.l.b16 %v314
    %v465 = vunpack.c.l.b16 %v316
    %v466 = vpack.c.b16 %v450, %v450
    %v467 = vpack.c.b16 %v451, %v451
    %v468 = vpack.c.b16 %v452, %v452
    %v469 = vpack.c.b16 %v453, %v453
    %v470 = vpack.c.b16 %v454, %v454
    %v471 = vpack.c.b16 %v455, %v455
    %v472 = vpack.c.b16 %v456, %v456
    %v473 = vpack.c.b16 %v457, %v457
    %v474 = vpack.c.b16 %v458, %v458
    %v475 = vpack.c.b16 %v459, %v459
    %v476 = vpack.c.b16 %v460, %v460
    %v477 = vpack.c.b16 %v461, %v461
    %v478 = vpack.c.b16 %v462, %v462
    %v479 = vpack.c.b16 %v463, %v463
    %v480 = vpack.c.b16 %v464, %v464
    %v481 = vpack.c.b16 %v465, %v465
    %482 = vrot.lane.b32.xlu0 %v466, 8
    %v483 = vpop.permute.xlu0 %482
    %484 = vrot.lane.b32.xlu0 %v467, 8
    %v485 = vpop.permute.xlu0 %484
    %486 = vrot.lane.b32.xlu0 %v468, 8
    %v487 = vpop.permute.xlu0 %486
    %488 = vrot.lane.b32.xlu0 %v469, 8
    %v489 = vpop.permute.xlu0 %488
    %490 = vrot.lane.b32.xlu0 %v470, 8
    %v491 = vpop.permute.xlu0 %490
    %492 = vrot.lane.b32.xlu0 %v471, 8
    %v493 = vpop.permute.xlu0 %492
    %494 = vrot.lane.b32.xlu0 %v472, 8
    %v495 = vpop.permute.xlu0 %494
    %496 = vrot.lane.b32.xlu0 %v473, 8
    %v497 = vpop.permute.xlu0 %496
    %498 = vrot.lane.b32.xlu0 %v474, 8
    %v499 = vpop.permute.xlu0 %498
    %500 = vrot.lane.b32.xlu0 %v475, 8
    %v501 = vpop.permute.xlu0 %500
    %502 = vrot.lane.b32.xlu0 %v476, 8
    %v503 = vpop.permute.xlu0 %502
    %504 = vrot.lane.b32.xlu0 %v477, 8
    %v505 = vpop.permute.xlu0 %504
    %506 = vrot.lane.b32.xlu0 %v478, 8
    %v507 = vpop.permute.xlu0 %506
    %508 = vrot.lane.b32.xlu0 %v479, 8
    %v509 = vpop.permute.xlu0 %508
    %510 = vrot.lane.b32.xlu0 %v480, 8
    %v511 = vpop.permute.xlu0 %510
    %512 = vrot.lane.b32.xlu0 %v481, 8
    %v513 = vpop.permute.xlu0 %512
    %v530 = vunpack.c.l.b16 %v216
    %v531 = vunpack.c.l.b16 %v218
    %v532 = vunpack.c.l.b16 %v220
    %v533 = vunpack.c.l.b16 %v222
    %v534 = vunpack.c.l.b16 %v224
    %v535 = vunpack.c.l.b16 %v226
    %v536 = vunpack.c.l.b16 %v228
    %v537 = vunpack.c.l.b16 %v230
    %v538 = vunpack.c.l.b16 %v233
    %v539 = vunpack.c.l.b16 %v235
    %v540 = vunpack.c.l.b16 %v237
    %v541 = vunpack.c.l.b16 %v239
    %v542 = vunpack.c.l.b16 %v241
    %v543 = vunpack.c.l.b16 %v243
    %v544 = vunpack.c.l.b16 %v245
    %v545 = vunpack.c.l.b16 %v247
    %v546 = vpack.c.b16 %v530, %v530
    %v547 = vpack.c.b16 %v531, %v531
    %v548 = vpack.c.b16 %v532, %v532
    %v549 = vpack.c.b16 %v533, %v533
    %v550 = vpack.c.b16 %v534, %v534
    %v551 = vpack.c.b16 %v535, %v535
    %v552 = vpack.c.b16 %v536, %v536
    %v553 = vpack.c.b16 %v537, %v537
    %v554 = vpack.c.b16 %v538, %v538
    %v555 = vpack.c.b16 %v539, %v539
    %v556 = vpack.c.b16 %v540, %v540
    %v557 = vpack.c.b16 %v541, %v541
    %v558 = vpack.c.b16 %v542, %v542
    %v559 = vpack.c.b16 %v543, %v543
    %v560 = vpack.c.b16 %v544, %v544
    %v561 = vpack.c.b16 %v545, %v545
    %562 = vrot.lane.b32.xlu0 %v546, 12
    %v563 = vpop.permute.xlu0 %562
    %564 = vrot.lane.b32.xlu0 %v547, 12
    %v565 = vpop.permute.xlu0 %564
    %566 = vrot.lane.b32.xlu0 %v548, 12
    %v567 = vpop.permute.xlu0 %566
    %568 = vrot.lane.b32.xlu0 %v549, 12
    %v569 = vpop.permute.xlu0 %568
    %570 = vrot.lane.b32.xlu0 %v550, 12
    %v571 = vpop.permute.xlu0 %570
    %572 = vrot.lane.b32.xlu0 %v551, 12
    %v573 = vpop.permute.xlu0 %572
    %574 = vrot.lane.b32.xlu0 %v552, 12
    %v575 = vpop.permute.xlu0 %574
    %576 = vrot.lane.b32.xlu0 %v553, 12
    %v577 = vpop.permute.xlu0 %576
    %578 = vrot.lane.b32.xlu0 %v554, 12
    %v579 = vpop.permute.xlu0 %578
    %580 = vrot.lane.b32.xlu0 %v555, 12
    %v581 = vpop.permute.xlu0 %580
    %582 = vrot.lane.b32.xlu0 %v556, 12
    %v583 = vpop.permute.xlu0 %582
    %584 = vrot.lane.b32.xlu0 %v557, 12
    %v585 = vpop.permute.xlu0 %584
    %586 = vrot.lane.b32.xlu0 %v558, 12
    %v587 = vpop.permute.xlu0 %586
    %588 = vrot.lane.b32.xlu0 %v559, 12
    %v589 = vpop.permute.xlu0 %588
    %590 = vrot.lane.b32.xlu0 %v560, 12
    %v591 = vpop.permute.xlu0 %590
    %592 = vrot.lane.b32.xlu0 %v561, 12
    %v593 = vpop.permute.xlu0 %592
    %v610 = vunpack.c.l.b16 %v251
    %v611 = vunpack.c.l.b16 %v253
    %v612 = vunpack.c.l.b16 %v255
    %v613 = vunpack.c.l.b16 %v257
    %v614 = vunpack.c.l.b16 %v259
    %v615 = vunpack.c.l.b16 %v261
    %v616 = vunpack.c.l.b16 %v263
    %v617 = vunpack.c.l.b16 %v265
    %v618 = vunpack.c.l.b16 %v268
    %v619 = vunpack.c.l.b16 %v270
    %v620 = vunpack.c.l.b16 %v272
    %v621 = vunpack.c.l.b16 %v274
    %v622 = vunpack.c.l.b16 %v276
    %v623 = vunpack.c.l.b16 %v278
    %v624 = vunpack.c.l.b16 %v280
    %v625 = vunpack.c.l.b16 %v282
    %v626 = vpack.c.b16 %v610, %v610
    %v627 = vpack.c.b16 %v611, %v611
    %v628 = vpack.c.b16 %v612, %v612
    %v629 = vpack.c.b16 %v613, %v613
    %v630 = vpack.c.b16 %v614, %v614
    %v631 = vpack.c.b16 %v615, %v615
    %v632 = vpack.c.b16 %v616, %v616
    %v633 = vpack.c.b16 %v617, %v617
    %v634 = vpack.c.b16 %v618, %v618
    %v635 = vpack.c.b16 %v619, %v619
    %v636 = vpack.c.b16 %v620, %v620
    %v637 = vpack.c.b16 %v621, %v621
    %v638 = vpack.c.b16 %v622, %v622
    %v639 = vpack.c.b16 %v623, %v623
    %v640 = vpack.c.b16 %v624, %v624
    %v641 = vpack.c.b16 %v625, %v625
    %642 = vrot.lane.b32.xlu0 %v626, 16
    %v643 = vpop.permute.xlu0 %642
    %644 = vrot.lane.b32.xlu0 %v627, 16
    %v645 = vpop.permute.xlu0 %644
    %646 = vrot.lane.b32.xlu0 %v628, 16
    %v647 = vpop.permute.xlu0 %646
    %648 = vrot.lane.b32.xlu0 %v629, 16
    %v649 = vpop.permute.xlu0 %648
    %650 = vrot.lane.b32.xlu0 %v630, 16
    %v651 = vpop.permute.xlu0 %650
    %652 = vrot.lane.b32.xlu0 %v631, 16
    %v653 = vpop.permute.xlu0 %652
    %654 = vrot.lane.b32.xlu0 %v632, 16
    %v655 = vpop.permute.xlu0 %654
    %656 = vrot.lane.b32.xlu0 %v633, 16
    %v657 = vpop.permute.xlu0 %656
    %658 = vrot.lane.b32.xlu0 %v634, 16
    %v659 = vpop.permute.xlu0 %658
    %660 = vrot.lane.b32.xlu0 %v635, 16
    %v661 = vpop.permute.xlu0 %660
    %662 = vrot.lane.b32.xlu0 %v636, 16
    %v663 = vpop.permute.xlu0 %662
    %664 = vrot.lane.b32.xlu0 %v637, 16
    %v665 = vpop.permute.xlu0 %664
    %666 = vrot.lane.b32.xlu0 %v638, 16
    %v667 = vpop.permute.xlu0 %666
    %668 = vrot.lane.b32.xlu0 %v639, 16
    %v669 = vpop.permute.xlu0 %668
    %670 = vrot.lane.b32.xlu0 %v640, 16
    %v671 = vpop.permute.xlu0 %670
    %672 = vrot.lane.b32.xlu0 %v641, 16
    %v673 = vpop.permute.xlu0 %672
    %v690 = vunpack.c.l.b16 %v286
    %v691 = vunpack.c.l.b16 %v288
    %v692 = vunpack.c.l.b16 %v290
    %v693 = vunpack.c.l.b16 %v292
    %v694 = vunpack.c.l.b16 %v294
    %v695 = vunpack.c.l.b16 %v296
    %v696 = vunpack.c.l.b16 %v298
    %v697 = vunpack.c.l.b16 %v300
    %v698 = vunpack.c.l.b16 %v303
    %v699 = vunpack.c.l.b16 %v305
    %v700 = vunpack.c.l.b16 %v307
    %v701 = vunpack.c.l.b16 %v309
    %v702 = vunpack.c.l.b16 %v311
    %v703 = vunpack.c.l.b16 %v313
    %v704 = vunpack.c.l.b16 %v315
    %v705 = vunpack.c.l.b16 %v317
    %v706 = vpack.c.b16 %v690, %v690
    %v707 = vpack.c.b16 %v691, %v691
    %v708 = vpack.c.b16 %v692, %v692
    %v709 = vpack.c.b16 %v693, %v693
    %v710 = vpack.c.b16 %v694, %v694
    %v711 = vpack.c.b16 %v695, %v695
    %v712 = vpack.c.b16 %v696, %v696
    %v713 = vpack.c.b16 %v697, %v697
    %v714 = vpack.c.b16 %v698, %v698
    %v715 = vpack.c.b16 %v699, %v699
    %v716 = vpack.c.b16 %v700, %v700
    %v717 = vpack.c.b16 %v701, %v701
    %v718 = vpack.c.b16 %v702, %v702
    %v719 = vpack.c.b16 %v703, %v703
    %v720 = vpack.c.b16 %v704, %v704
    %v721 = vpack.c.b16 %v705, %v705
    %722 = vrot.lane.b32.xlu0 %v706, 20
    %v723 = vpop.permute.xlu0 %722
    %724 = vrot.lane.b32.xlu0 %v707, 20
    %v725 = vpop.permute.xlu0 %724
    %726 = vrot.lane.b32.xlu0 %v708, 20
    %v727 = vpop.permute.xlu0 %726
    %728 = vrot.lane.b32.xlu0 %v709, 20
    %v729 = vpop.permute.xlu0 %728
    %730 = vrot.lane.b32.xlu0 %v710, 20
    %v731 = vpop.permute.xlu0 %730
    %732 = vrot.lane.b32.xlu0 %v711, 20
    %v733 = vpop.permute.xlu0 %732
    %734 = vrot.lane.b32.xlu0 %v712, 20
    %v735 = vpop.permute.xlu0 %734
    %736 = vrot.lane.b32.xlu0 %v713, 20
    %v737 = vpop.permute.xlu0 %736
    %738 = vrot.lane.b32.xlu0 %v714, 20
    %v739 = vpop.permute.xlu0 %738
    %740 = vrot.lane.b32.xlu0 %v715, 20
    %v741 = vpop.permute.xlu0 %740
    %742 = vrot.lane.b32.xlu0 %v716, 20
    %v743 = vpop.permute.xlu0 %742
    %744 = vrot.lane.b32.xlu0 %v717, 20
    %v745 = vpop.permute.xlu0 %744
    %746 = vrot.lane.b32.xlu0 %v718, 20
    %v747 = vpop.permute.xlu0 %746
    %748 = vrot.lane.b32.xlu0 %v719, 20
    %v749 = vpop.permute.xlu0 %748
    %750 = vrot.lane.b32.xlu0 %v720, 20
    %v751 = vpop.permute.xlu0 %750
    %752 = vrot.lane.b32.xlu0 %v721, 20
    %v753 = vpop.permute.xlu0 %752
    %v770 = vunpack.c.l.b16 %v217
    %v771 = vunpack.c.l.b16 %v219
    %v772 = vunpack.c.l.b16 %v221
    %v773 = vunpack.c.l.b16 %v223
    %v774 = vunpack.c.l.b16 %v225
    %v775 = vunpack.c.l.b16 %v227
    %v776 = vunpack.c.l.b16 %v229
    %v777 = vunpack.c.l.b16 %v231
    %v778 = vunpack.c.l.b16 %v234
    %v779 = vunpack.c.l.b16 %v236
    %v780 = vunpack.c.l.b16 %v238
    %v781 = vunpack.c.l.b16 %v240
    %v782 = vunpack.c.l.b16 %v242
    %v783 = vunpack.c.l.b16 %v244
    %v784 = vunpack.c.l.b16 %v246
    %v785 = vunpack.c.l.b16 %v248
    %v786 = vpack.c.b16 %v770, %v770
    %v787 = vpack.c.b16 %v771, %v771
    %v788 = vpack.c.b16 %v772, %v772
    %v789 = vpack.c.b16 %v773, %v773
    %v790 = vpack.c.b16 %v774, %v774
    %v791 = vpack.c.b16 %v775, %v775
    %v792 = vpack.c.b16 %v776, %v776
    %v793 = vpack.c.b16 %v777, %v777
    %v794 = vpack.c.b16 %v778, %v778
    %v795 = vpack.c.b16 %v779, %v779
    %v796 = vpack.c.b16 %v780, %v780
    %v797 = vpack.c.b16 %v781, %v781
    %v798 = vpack.c.b16 %v782, %v782
    %v799 = vpack.c.b16 %v783, %v783
    %v800 = vpack.c.b16 %v784, %v784
    %v801 = vpack.c.b16 %v785, %v785
    %802 = vrot.lane.b32.xlu0 %v786, 24
    %v803 = vpop.permute.xlu0 %802
    %804 = vrot.lane.b32.xlu0 %v787, 24
    %v805 = vpop.permute.xlu0 %804
    %806 = vrot.lane.b32.xlu0 %v788, 24
    %v807 = vpop.permute.xlu0 %806
    %808 = vrot.lane.b32.xlu0 %v789, 24
    %v809 = vpop.permute.xlu0 %808
    %810 = vrot.lane.b32.xlu0 %v790, 24
    %v811 = vpop.permute.xlu0 %810
    %812 = vrot.lane.b32.xlu0 %v791, 24
    %v813 = vpop.permute.xlu0 %812
    %814 = vrot.lane.b32.xlu0 %v792, 24
    %v815 = vpop.permute.xlu0 %814
    %816 = vrot.lane.b32.xlu0 %v793, 24
    %v817 = vpop.permute.xlu0 %816
    %818 = vrot.lane.b32.xlu0 %v794, 24
    %v819 = vpop.permute.xlu0 %818
    %820 = vrot.lane.b32.xlu0 %v795, 24
    %v821 = vpop.permute.xlu0 %820
    %822 = vrot.lane.b32.xlu0 %v796, 24
    %v823 = vpop.permute.xlu0 %822
    %824 = vrot.lane.b32.xlu0 %v797, 24
    %v825 = vpop.permute.xlu0 %824
    %826 = vrot.lane.b32.xlu0 %v798, 24
    %v827 = vpop.permute.xlu0 %826
    %828 = vrot.lane.b32.xlu0 %v799, 24
    %v829 = vpop.permute.xlu0 %828
    %830 = vrot.lane.b32.xlu0 %v800, 24
    %v831 = vpop.permute.xlu0 %830
    %832 = vrot.lane.b32.xlu0 %v801, 24
    %v833 = vpop.permute.xlu0 %832
    %v836 = vunpack.c.l.b16 %v266
    %v837 = vunpack.c.l.b16 %v283
    %v838 = vpack.c.b16 %v836, %v836
    %v839 = vpack.c.b16 %v837, %v837
    %840 = vrot.lane.b32.xlu0 %v387, 28
    %v841 = vpop.permute.xlu0 %840
    %842 = vrot.lane.b32.xlu0 %v388, 28
    %v843 = vpop.permute.xlu0 %842
    %844 = vrot.lane.b32.xlu0 %v389, 28
    %v845 = vpop.permute.xlu0 %844
    %846 = vrot.lane.b32.xlu0 %v390, 28
    %v847 = vpop.permute.xlu0 %846
    %848 = vrot.lane.b32.xlu0 %v391, 28
    %v849 = vpop.permute.xlu0 %848
    %850 = vrot.lane.b32.xlu0 %v392, 28
    %v851 = vpop.permute.xlu0 %850
    %852 = vrot.lane.b32.xlu0 %v393, 28
    %v853 = vpop.permute.xlu0 %852
    %854 = vrot.lane.b32.xlu0 %v838, 28
    %v855 = vpop.permute.xlu0 %854
    %856 = vrot.lane.b32.xlu0 %v395, 28
    %v857 = vpop.permute.xlu0 %856
    %858 = vrot.lane.b32.xlu0 %v396, 28
    %v859 = vpop.permute.xlu0 %858
    %860 = vrot.lane.b32.xlu0 %v397, 28
    %v861 = vpop.permute.xlu0 %860
    %862 = vrot.lane.b32.xlu0 %v398, 28
    %v863 = vpop.permute.xlu0 %862
    %864 = vrot.lane.b32.xlu0 %v399, 28
    %v865 = vpop.permute.xlu0 %864
    %866 = vrot.lane.b32.xlu0 %v400, 28
    %v867 = vpop.permute.xlu0 %866
    %868 = vrot.lane.b32.xlu0 %v401, 28
    %v869 = vpop.permute.xlu0 %868
    %870 = vrot.lane.b32.xlu0 %v839, 28
    %v871 = vpop.permute.xlu0 %870
    %v874 = vunpack.c.l.b16 %v301
    %v875 = vunpack.c.l.b16 %v318
    %v876 = vpack.c.b16 %v874, %v874
    %v877 = vpack.c.b16 %v875, %v875
    %878 = vrot.lane.b32.xlu0 %v467, 32
    %v879 = vpop.permute.xlu0 %878
    %880 = vrot.lane.b32.xlu0 %v468, 32
    %v881 = vpop.permute.xlu0 %880
    %882 = vrot.lane.b32.xlu0 %v469, 32
    %v883 = vpop.permute.xlu0 %882
    %884 = vrot.lane.b32.xlu0 %v470, 32
    %v885 = vpop.permute.xlu0 %884
    %886 = vrot.lane.b32.xlu0 %v471, 32
    %v887 = vpop.permute.xlu0 %886
    %888 = vrot.lane.b32.xlu0 %v472, 32
    %v889 = vpop.permute.xlu0 %888
    %890 = vrot.lane.b32.xlu0 %v473, 32
    %v891 = vpop.permute.xlu0 %890
    %892 = vrot.lane.b32.xlu0 %v876, 32
    %v893 = vpop.permute.xlu0 %892
    %894 = vrot.lane.b32.xlu0 %v475, 32
    %v895 = vpop.permute.xlu0 %894
    %896 = vrot.lane.b32.xlu0 %v476, 32
    %v897 = vpop.permute.xlu0 %896
    %898 = vrot.lane.b32.xlu0 %v477, 32
    %v899 = vpop.permute.xlu0 %898
    %900 = vrot.lane.b32.xlu0 %v478, 32
    %v901 = vpop.permute.xlu0 %900
    %902 = vrot.lane.b32.xlu0 %v479, 32
    %v903 = vpop.permute.xlu0 %902
    %904 = vrot.lane.b32.xlu0 %v480, 32
    %v905 = vpop.permute.xlu0 %904
    %906 = vrot.lane.b32.xlu0 %v481, 32
    %v907 = vpop.permute.xlu0 %906
    %908 = vrot.lane.b32.xlu0 %v877, 32
    %v909 = vpop.permute.xlu0 %908
    %vm910 = vcmask 31744
    %v913 = vsel %vm910, %v215, %v403
    %v916 = vsel %vm910, %v217, %v405
    %v919 = vsel %vm910, %v219, %v407
    %v922 = vsel %vm910, %v221, %v409
    %v925 = vsel %vm910, %v223, %v411
    %v928 = vsel %vm910, %v225, %v413
    %v931 = vsel %vm910, %v227, %v415
    %v934 = vsel %vm910, %v229, %v417
    %v937 = vsel %vm910, %v232, %v419
    %v940 = vsel %vm910, %v234, %v421
    %v943 = vsel %vm910, %v236, %v423
    %v946 = vsel %vm910, %v238, %v425
    %v949 = vsel %vm910, %v240, %v427
    %v952 = vsel %vm910, %v242, %v429
    %v955 = vsel %vm910, %v244, %v431
    %v958 = vsel %vm910, %v246, %v433
    %vm959 = vcmask 64512
    %v961 = vsel %vm959, %v913, %v483
    %v963 = vsel %vm959, %v916, %v485
    %v965 = vsel %vm959, %v919, %v487
    %v967 = vsel %vm959, %v922, %v489
    %v969 = vsel %vm959, %v925, %v491
    %v971 = vsel %vm959, %v928, %v493
    %v973 = vsel %vm959, %v931, %v495
    %v975 = vsel %vm959, %v934, %v497
    %v977 = vsel %vm959, %v937, %v499
    %v979 = vsel %vm959, %v940, %v501
    %v981 = vsel %vm959, %v943, %v503
    %v983 = vsel %vm959, %v946, %v505
    %v985 = vsel %vm959, %v949, %v507
    %v987 = vsel %vm959, %v952, %v509
    %v989 = vsel %vm959, %v955, %v511
    %v991 = vsel %vm959, %v958, %v513
    %vm992 = vcmask 97280
    %v994 = vsel %vm992, %v961, %v563
    %v996 = vsel %vm992, %v963, %v565
    %v998 = vsel %vm992, %v965, %v567
    %v1000 = vsel %vm992, %v967, %v569
    %v1002 = vsel %vm992, %v969, %v571
    %v1004 = vsel %vm992, %v971, %v573
    %v1006 = vsel %vm992, %v973, %v575
    %v1008 = vsel %vm992, %v975, %v577
    %v1010 = vsel %vm992, %v977, %v579
    %v1012 = vsel %vm992, %v979, %v581
    %v1014 = vsel %vm992, %v981, %v583
    %v1016 = vsel %vm992, %v983, %v585
    %v1018 = vsel %vm992, %v985, %v587
    %v1020 = vsel %vm992, %v987, %v589
    %v1022 = vsel %vm992, %v989, %v591
    %v1024 = vsel %vm992, %v991, %v593
    %vm1025 = vcmask 130048
    %v1027 = vsel %vm1025, %v994, %v643
    %v1029 = vsel %vm1025, %v996, %v645
    %v1031 = vsel %vm1025, %v998, %v647
    %v1033 = vsel %vm1025, %v1000, %v649
    %v1035 = vsel %vm1025, %v1002, %v651
    %v1037 = vsel %vm1025, %v1004, %v653
    %v1039 = vsel %vm1025, %v1006, %v655
    %v1041 = vsel %vm1025, %v1008, %v657
    %v1043 = vsel %vm1025, %v1010, %v659
    %v1045 = vsel %vm1025, %v1012, %v661
    %v1047 = vsel %vm1025, %v1014, %v663
    %v1049 = vsel %vm1025, %v1016, %v665
    %v1051 = vsel %vm1025, %v1018, %v667
    %v1053 = vsel %vm1025, %v1020, %v669
    %v1055 = vsel %vm1025, %v1022, %v671
    %v1057 = vsel %vm1025, %v1024, %v673
    %vm1058 = vcmask 162816
    %v1060 = vsel %vm1058, %v1027, %v723
    %v1062 = vsel %vm1058, %v1029, %v725
    %v1064 = vsel %vm1058, %v1031, %v727
    %v1066 = vsel %vm1058, %v1033, %v729
    %v1068 = vsel %vm1058, %v1035, %v731
    %v1070 = vsel %vm1058, %v1037, %v733
    %v1072 = vsel %vm1058, %v1039, %v735
    %v1074 = vsel %vm1058, %v1041, %v737
    %v1076 = vsel %vm1058, %v1043, %v739
    %v1078 = vsel %vm1058, %v1045, %v741
    %v1080 = vsel %vm1058, %v1047, %v743
    %v1082 = vsel %vm1058, %v1049, %v745
    %v1084 = vsel %vm1058, %v1051, %v747
    %v1086 = vsel %vm1058, %v1053, %v749
    %v1088 = vsel %vm1058, %v1055, %v751
    %v1090 = vsel %vm1058, %v1057, %v753
    %vm1091 = vcmask 195584
    %v1093 = vsel %vm1091, %v1060, %v803
    %v1095 = vsel %vm1091, %v1062, %v805
    %v1097 = vsel %vm1091, %v1064, %v807
    %v1099 = vsel %vm1091, %v1066, %v809
    %v1101 = vsel %vm1091, %v1068, %v811
    %v1103 = vsel %vm1091, %v1070, %v813
    %v1105 = vsel %vm1091, %v1072, %v815
    %v1107 = vsel %vm1091, %v1074, %v817
    %v1109 = vsel %vm1091, %v1076, %v819
    %v1111 = vsel %vm1091, %v1078, %v821
    %v1113 = vsel %vm1091, %v1080, %v823
    %v1115 = vsel %vm1091, %v1082, %v825
    %v1117 = vsel %vm1091, %v1084, %v827
    %v1119 = vsel %vm1091, %v1086, %v829
    %v1121 = vsel %vm1091, %v1088, %v831
    %v1123 = vsel %vm1091, %v1090, %v833
    %vm1124 = vcmask 228352
    %v1126 = vsel %vm1124, %v1093, %v841
    %v1128 = vsel %vm1124, %v1095, %v843
    %v1130 = vsel %vm1124, %v1097, %v845
    %v1132 = vsel %vm1124, %v1099, %v847
    %v1134 = vsel %vm1124, %v1101, %v849
    %v1136 = vsel %vm1124, %v1103, %v851
    %v1138 = vsel %vm1124, %v1105, %v853
    %v1140 = vsel %vm1124, %v1107, %v855
    %v1142 = vsel %vm1124, %v1109, %v857
    %v1144 = vsel %vm1124, %v1111, %v859
    %v1146 = vsel %vm1124, %v1113, %v861
    %v1148 = vsel %vm1124, %v1115, %v863
    %v1150 = vsel %vm1124, %v1117, %v865
    %v1152 = vsel %vm1124, %v1119, %v867
    %v1154 = vsel %vm1124, %v1121, %v869
    %v1156 = vsel %vm1124, %v1123, %v871
    %vm1157 = vcmask 261120
    %v1159 = vsel %vm1157, %v1126, %v879
    %v1161 = vsel %vm1157, %v1128, %v881
    %v1163 = vsel %vm1157, %v1130, %v883
    %v1165 = vsel %vm1157, %v1132, %v885
    %v1167 = vsel %vm1157, %v1134, %v887
    %v1169 = vsel %vm1157, %v1136, %v889
    %v1171 = vsel %vm1157, %v1138, %v891
    %v1173 = vsel %vm1157, %v1140, %v893
    %v1175 = vsel %vm1157, %v1142, %v895
    %v1177 = vsel %vm1157, %v1144, %v897
    %v1179 = vsel %vm1157, %v1146, %v899
    %v1181 = vsel %vm1157, %v1148, %v901
    %v1183 = vsel %vm1157, %v1150, %v903
    %v1185 = vsel %vm1157, %v1152, %v905
    %v1187 = vsel %vm1157, %v1154, %v907
    %v1189 = vsel %vm1157, %v1156, %v909
    %v1191 = vlaneseq
    %v1192 = vshrl.u32 %v1191, 7
    %v1193 = vsub.s32 0, %v1192
    %v1194 = vrot.slane %v57, %v1193
    %v1212 = vcombine.low %v1159, %v1161
    %v1213 = vcombine.low %v1163, %v1165
    %v1215 = vunpack.c.l.s4 1983009808
    %v1216 = vunpack.c.0.s8 %v1215
    %v1217 = vlaneseq
    %v1218 = vshrl.u32 %v1217, 7
    %v1219 = vsub.s32 %v1216, %v1218
    %v1220 = vrot.slane %v1212, %v1219
    %v1222 = vunpack.c.l.s4 1983009808
    %v1223 = vunpack.c.0.s8 %v1222
    %v1224 = vlaneseq
    %v1225 = vshrl.u32 %v1224, 7
    %v1226 = vsub.s32 %v1223, %v1225
    %v1227 = vrot.slane %v1213, %v1226
    %v1228 = vcombine.low %v1220, %v1227
    %v1229 = vcombine.low %v1167, %v1169
    %v1230 = vcombine.low %v1171, %v1173
    %v1232 = vunpack.c.l.s4 1983009808
    %v1233 = vunpack.c.0.s8 %v1232
    %v1234 = vlaneseq
    %v1235 = vshrl.u32 %v1234, 7
    %v1236 = vsub.s32 %v1233, %v1235
    %v1237 = vrot.slane %v1229, %v1236
    %v1239 = vunpack.c.l.s4 1983009808
    %v1240 = vunpack.c.0.s8 %v1239
    %v1241 = vlaneseq
    %v1242 = vshrl.u32 %v1241, 7
    %v1243 = vsub.s32 %v1240, %v1242
    %v1244 = vrot.slane %v1230, %v1243
    %v1245 = vcombine.low %v1237, %v1244
    %v1246 = vcombine.low %v1175, %v1177
    %v1247 = vcombine.low %v1179, %v1181
    %v1249 = vunpack.c.l.s4 1983009808
    %v1250 = vunpack.c.0.s8 %v1249
    %v1251 = vlaneseq
    %v1252 = vshrl.u32 %v1251, 7
    %v1253 = vsub.s32 %v1250, %v1252
    %v1254 = vrot.slane %v1246, %v1253
    %v1256 = vunpack.c.l.s4 1983009808
    %v1257 = vunpack.c.0.s8 %v1256
    %v1258 = vlaneseq
    %v1259 = vshrl.u32 %v1258, 7
    %v1260 = vsub.s32 %v1257, %v1259
    %v1261 = vrot.slane %v1247, %v1260
    %v1262 = vcombine.low %v1254, %v1261
    %v1263 = vcombine.low %v1183, %v1185
    %v1264 = vcombine.low %v1187, %v1189
    %v1266 = vunpack.c.l.s4 1983009808
    %v1267 = vunpack.c.0.s8 %v1266
    %v1268 = vlaneseq
    %v1269 = vshrl.u32 %v1268, 7
    %v1270 = vsub.s32 %v1267, %v1269
    %v1271 = vrot.slane %v1263, %v1270
    %v1273 = vunpack.c.l.s4 1983009808
    %v1274 = vunpack.c.0.s8 %v1273
    %v1275 = vlaneseq
    %v1276 = vshrl.u32 %v1275, 7
    %v1277 = vsub.s32 %v1274, %v1276
    %v1278 = vrot.slane %v1264, %v1277
    %v1279 = vcombine.low %v1271, %v1278
    %v1285 = vunpack.c.l.b16 %v52
    %v1286 = vunpack.c.l.b16 %v53
    %v1287 = vunpack.c.l.b16 %v54
    %v1288 = vunpack.c.l.b16 %v55
    %v1289 = vunpack.c.l.b16 %v56
    %v1290 = vpack.c.b16 %v1286, %v1285
    %v1291 = vpack.c.b16 %v1288, %v1287
    %v1292 = vpack.c.b16 %v1289, %v1289
    %vm1295 = vcmask 293888
    %v1297 = vsel %vm1295, %v1228, 0
    %v1300 = vsel %vm1295, %v1245, 0
    %v1303 = vsel %vm1295, %v1262, 0
    %v1306 = vsel %vm1295, %v1279, 0
    %vm1308 = vcmask 1041408
    %v1310 = vsel %vm1308, %v1292, 0
    %1312 = vmatprep.subr.bf16.mxu0 0
    %1313 = vmatpush1.bf16.msra.mxu0 0
    %1314 = vmatprep.subr.bf16.mxu0 0
    %1315 = vmatpush1.bf16.msra.mxu0 0
    %1316 = vmatprep.subr.bf16.mxu0 0
    %1317 = vmatpush1.bf16.msra.mxu0 0
    %1318 = vmatprep.subr.bf16.mxu0 0
    %1319 = vmatpush1.bf16.msra.mxu0 0
    %1320 = vmatprep.subr.bf16.mxu0 0
    %1321 = vmatpush1.bf16.msra.mxu0 0
    %1322 = vmatprep.subr.bf16.mxu0 0
    %1323 = vmatpush1.bf16.msra.mxu0 %v1310
    %1324 = vmatprep.subr.bf16.mxu0 0
    %1325 = vmatpush1.bf16.msra.mxu0 %v1291
    %1326 = vmatprep.subr.bf16.mxu0 0
    %1327 = vmatpush1.bf16.msra.mxu0 %v1290
    %1328 = vmatprep.subr.bf16.mxu0 0
    %1329 = vmatpush2.bf16.msra.mxu0 0
    %1330 = vmatprep.subr.bf16.mxu0 0
    %1331 = vmatpush2.bf16.msra.mxu0 0
    %1332 = vmatprep.subr.bf16.mxu0 0
    %1333 = vmatpush2.bf16.msra.mxu0 0
    %1334 = vmatprep.subr.bf16.mxu0 0
    %1335 = vmatpush2.bf16.msra.mxu0 0
    %1336 = vmatprep.subr.bf16.mxu0 0
    %1337 = vmatpush2.bf16.msra.mxu0 0
    %1338 = vmatprep.subr.bf16.mxu0 0
    %1339 = vmatpush2.bf16.msra.mxu0 0
    %1340 = vmatprep.subr.bf16.mxu0 0
    %1341 = vmatpush2.bf16.msra.mxu0 0
    %1342 = vmatprep.subr.bf16.mxu0 0
    %1343 = vmatpush2.bf16.msra.mxu0 0
    %1344 = vmatprep.mubr.bf16.mxu0 0
    %1345 = vmatmul.mubr.bf16.gmra.mxu0 %v1297
    %v1346 = vpop.f32.mrf.mxu0
    %v1347 = vadd.f32 %v1194, %v1346
    %v1348 = vpop.f32.mrf.mxu0
    %v1349 = vpop.f32.mrf.mxu0
    %v1350 = vadd.f32 %v1194, %v1349
    %v1351 = vpop.f32.mrf.mxu0
    %1352 = vmatprep.mubr.bf16.mxu0 0
    %1353 = vmatmul.mubr.bf16.gmra.mxu0 %v1300
    %v1354 = vpop.f32.mrf.mxu0
    %v1355 = vadd.f32 %v1194, %v1354
    %v1356 = vpop.f32.mrf.mxu0
    %v1357 = vpop.f32.mrf.mxu0
    %v1358 = vadd.f32 %v1194, %v1357
    %v1359 = vpop.f32.mrf.mxu0
    %1360 = vmatprep.mubr.bf16.mxu0 0
    %1361 = vmatmul.mubr.bf16.gmra.mxu0 %v1303
    %v1362 = vpop.f32.mrf.mxu0
    %v1363 = vadd.f32 %v1194, %v1362
    %v1364 = vpop.f32.mrf.mxu0
    %v1365 = vpop.f32.mrf.mxu0
    %v1366 = vadd.f32 %v1194, %v1365
    %v1367 = vpop.f32.mrf.mxu0
    %1368 = vmatprep.mubr.bf16.mxu0 0
    %1369 = vmatmul.mubr.bf16.gmra.mxu0 %v1306
    %v1370 = vpop.f32.mrf.mxu0
    %v1371 = vadd.f32 %v1194, %v1370
    %v1372 = vpop.f32.mrf.mxu0
    %v1373 = vpop.f32.mrf.mxu0
    %v1374 = vadd.f32 %v1194, %v1373
    %v1375 = vpop.f32.mrf.mxu0
    %1376 = vdwg.mxu0
    %v1377 = vmax.f32 %v1347, 0.0
    %v1378 = vmax.f32 %v1350, 0.0
    %v1379 = vmax.f32 %v1355, 0.0
    %v1380 = vmax.f32 %v1358, 0.0
    %v1381 = vmax.f32 %v1363, 0.0
    %v1382 = vmax.f32 %v1366, 0.0
    %v1383 = vmax.f32 %v1371, 0.0
    %v1384 = vmax.f32 %v1374, 0.0
    %v1385 = vld [vmem:[%s1] sm:$0xf]
    %v1386 = vld [vmem:[%s1 + $0x4] sm:$0xf]
    %v1387 = vld [vmem:[%s1 + $0x8] sm:$0xf]
    %v1388 = vld [vmem:[%s1 + $0xc] sm:$0xf]
    %v1389 = vld [vmem:[%s1 + $0x20] sm:$0xf]
    %v1390 = vld [vmem:[%s1 + $0x24] sm:$0xf]
    %v1391 = vld [vmem:[%s1 + $0x28] sm:$0xf]
    %v1392 = vld [vmem:[%s1 + $0x2c] sm:$0xf]
    %v1394 = vlaneseq
    %v1395 = vshrl.u32 %v1394, 7
    %v1396 = vsub.s32 0, %v1395
    %v1397 = vrot.slane %v59, %v1396
    %v1407 = vunpack.c.l.b16 %v1385
    %v1408 = vunpack.c.l.b16 %v1386
    %v1409 = vunpack.c.l.b16 %v1387
    %v1410 = vunpack.c.l.b16 %v1388
    %v1411 = vunpack.c.l.b16 %v1389
    %v1412 = vunpack.c.l.b16 %v1390
    %v1413 = vunpack.c.l.b16 %v1391
    %v1414 = vunpack.c.l.b16 %v1392
    %v1415 = vpack.c.b16 %v1408, %v1407
    %v1416 = vpack.c.b16 %v1410, %v1409
    %v1417 = vpack.c.b16 %v1412, %v1411
    %v1418 = vpack.c.b16 %v1414, %v1413
    %v1420 = vsel %vm959, %v1415, 0
    %v1423 = vsel %vm959, %v1416, 0
    %v1426 = vsel %vm959, %v1417, 0
    %v1429 = vsel %vm959, %v1418, 0
    %vm1431 = vcmask 1043456
    %v1433 = vsel %vm1431, %v58, 0
    %1435 = vmatprep.subr.bf16.mxu0 0
    %1436 = vmatpush1.bf16.msra.mxu0 0
    %1437 = vmatprep.subr.bf16.mxu0 0
    %1438 = vmatpush1.bf16.msra.mxu0 0
    %1439 = vmatprep.subr.bf16.mxu0 0
    %1440 = vmatpush1.bf16.msra.mxu0 0
    %1441 = vmatprep.subr.bf16.mxu0 0
    %1442 = vmatpush1.bf16.msra.mxu0 0
    %1443 = vmatprep.subr.bf16.mxu0 0
    %1444 = vmatpush1.bf16.msra.mxu0 0
    %1445 = vmatprep.subr.bf16.mxu0 0
    %1446 = vmatpush1.bf16.msra.mxu0 0
    %1447 = vmatprep.subr.bf16.mxu0 0
    %1448 = vmatpush1.bf16.msra.mxu0 0
    %1449 = vmatprep.subr.bf16.mxu0 0
    %1450 = vmatpush1.bf16.msra.mxu0 %v1433
    %1451 = vmatprep.subr.bf16.mxu0 0
    %1452 = vmatpush2.bf16.msra.mxu0 0
    %1453 = vmatprep.subr.bf16.mxu0 0
    %1454 = vmatpush2.bf16.msra.mxu0 0
    %1455 = vmatprep.subr.bf16.mxu0 0
    %1456 = vmatpush2.bf16.msra.mxu0 0
    %1457 = vmatprep.subr.bf16.mxu0 0
    %1458 = vmatpush2.bf16.msra.mxu0 0
    %1459 = vmatprep.subr.bf16.mxu0 0
    %1460 = vmatpush2.bf16.msra.mxu0 0
    %1461 = vmatprep.subr.bf16.mxu0 0
    %1462 = vmatpush2.bf16.msra.mxu0 0
    %1463 = vmatprep.subr.bf16.mxu0 0
    %1464 = vmatpush2.bf16.msra.mxu0 0
    %1465 = vmatprep.subr.bf16.mxu0 0
    %1466 = vmatpush2.bf16.msra.mxu0 0
    %1467 = vmatprep.mubr.bf16.mxu0 0
    %1468 = vmatmul.mubr.bf16.gmra.mxu0 %v1420
    %v1469 = vpop.f32.mrf.mxu0
    %v1470 = vadd.f32 %v1397, %v1469
    %v1471 = vpop.f32.mrf.mxu0
    %v1472 = vpop.f32.mrf.mxu0
    %v1473 = vadd.f32 %v1397, %v1472
    %v1474 = vpop.f32.mrf.mxu0
    %1475 = vmatprep.mubr.bf16.mxu0 0
    %1476 = vmatmul.mubr.bf16.gmra.mxu0 %v1423
    %v1477 = vpop.f32.mrf.mxu0
    %v1478 = vadd.f32 %v1397, %v1477
    %v1479 = vpop.f32.mrf.mxu0
    %v1480 = vpop.f32.mrf.mxu0
    %v1481 = vadd.f32 %v1397, %v1480
    %v1482 = vpop.f32.mrf.mxu0
    %1483 = vmatprep.mubr.bf16.mxu0 0
    %1484 = vmatmul.mubr.bf16.gmra.mxu0 %v1426
    %v1485 = vpop.f32.mrf.mxu0
    %v1486 = vadd.f32 %v1397, %v1485
    %v1487 = vpop.f32.mrf.mxu0
    %v1488 = vpop.f32.mrf.mxu0
    %v1489 = vadd.f32 %v1397, %v1488
    %v1490 = vpop.f32.mrf.mxu0
    %1491 = vmatprep.mubr.bf16.mxu0 0
    %1492 = vmatmul.mubr.bf16.gmra.mxu0 %v1429
    %v1493 = vpop.f32.mrf.mxu0
    %v1494 = vadd.f32 %v1397, %v1493
    %v1495 = vpop.f32.mrf.mxu0
    %v1496 = vpop.f32.mrf.mxu0
    %v1497 = vadd.f32 %v1397, %v1496
    %v1498 = vpop.f32.mrf.mxu0
    %1499 = vdwg.mxu0
    %v1500 = vmax.f32 %v1470, 0.0
    %v1501 = vmax.f32 %v1473, 0.0
    %v1502 = vmax.f32 %v1478, 0.0
    %v1503 = vmax.f32 %v1481, 0.0
    %v1504 = vmax.f32 %v1486, 0.0
    %v1505 = vmax.f32 %v1489, 0.0
    %v1506 = vmax.f32 %v1494, 0.0
    %v1507 = vmax.f32 %v1497, 0.0
    %v1508 = vadd.f32 %v1377, %v1500
    %v1509 = vadd.f32 %v1378, %v1501
    %v1510 = vadd.f32 %v1379, %v1502
    %v1511 = vadd.f32 %v1380, %v1503
    %v1512 = vadd.f32 %v1381, %v1504
    %v1513 = vadd.f32 %v1382, %v1505
    %v1514 = vadd.f32 %v1383, %v1506
    %v1515 = vadd.f32 %v1384, %v1507
    %v1516 = vpack.c.bf16 %v1509, %v1508
    %v1517 = vpack.c.bf16 %v1511, %v1510
    %v1518 = vpack.c.bf16 %v1513, %v1512
    %v1519 = vpack.c.bf16 %v1515, %v1514
    %v1524 = vcombine.high %v1516, %v1516
    %v1526 = vunpack.c.l.s4 1983009808
    %v1527 = vunpack.c.0.s8 %v1526
    %v1528 = vlaneseq
    %v1529 = vshrl.u32 %v1528, 7
    %v1530 = vsub.s32 %v1527, %v1529
    %v1531 = vrot.slane %v1516, %v1530
    %v1533 = vunpack.c.l.s4 1983009808
    %v1534 = vunpack.c.0.s8 %v1533
    %v1535 = vlaneseq
    %v1536 = vshrl.u32 %v1535, 7
    %v1537 = vsub.s32 %v1534, %v1536
    %v1538 = vrot.slane %v1524, %v1537
    %v1539 = vcombine.high %v1531, %v1531
    %v1540 = vcombine.high %v1538, %v1538
    %v1541 = vcombine.high %v1517, %v1517
    %v1543 = vunpack.c.l.s4 1983009808
    %v1544 = vunpack.c.0.s8 %v1543
    %v1545 = vlaneseq
    %v1546 = vshrl.u32 %v1545, 7
    %v1547 = vsub.s32 %v1544, %v1546
    %v1548 = vrot.slane %v1517, %v1547
    %v1550 = vunpack.c.l.s4 1983009808
    %v1551 = vunpack.c.0.s8 %v1550
    %v1552 = vlaneseq
    %v1553 = vshrl.u32 %v1552, 7
    %v1554 = vsub.s32 %v1551, %v1553
    %v1555 = vrot.slane %v1541, %v1554
    %v1556 = vcombine.high %v1548, %v1548
    %v1557 = vcombine.high %v1555, %v1555
    %v1558 = vcombine.high %v1518, %v1518
    %v1560 = vunpack.c.l.s4 1983009808
    %v1561 = vunpack.c.0.s8 %v1560
    %v1562 = vlaneseq
    %v1563 = vshrl.u32 %v1562, 7
    %v1564 = vsub.s32 %v1561, %v1563
    %v1565 = vrot.slane %v1518, %v1564
    %v1567 = vunpack.c.l.s4 1983009808
    %v1568 = vunpack.c.0.s8 %v1567
    %v1569 = vlaneseq
    %v1570 = vshrl.u32 %v1569, 7
    %v1571 = vsub.s32 %v1568, %v1570
    %v1572 = vrot.slane %v1558, %v1571
    %v1573 = vcombine.high %v1565, %v1565
    %v1574 = vcombine.high %v1572, %v1572
    %v1575 = vcombine.high %v1519, %v1519
    %v1577 = vunpack.c.l.s4 1983009808
    %v1578 = vunpack.c.0.s8 %v1577
    %v1579 = vlaneseq
    %v1580 = vshrl.u32 %v1579, 7
    %v1581 = vsub.s32 %v1578, %v1580
    %v1582 = vrot.slane %v1519, %v1581
    %v1584 = vunpack.c.l.s4 1983009808
    %v1585 = vunpack.c.0.s8 %v1584
    %v1586 = vlaneseq
    %v1587 = vshrl.u32 %v1586, 7
    %v1588 = vsub.s32 %v1585, %v1587
    %v1589 = vrot.slane %v1575, %v1588
    %v1590 = vcombine.high %v1582, %v1582
    %v1591 = vcombine.high %v1589, %v1589
    %v1593 = vunpack.c.l.s4 1983009808
    %v1594 = vunpack.c.0.s8 %v1593
    %v1595 = vlaneseq
    %v1596 = vshrl.u32 %v1595, 7
    %v1597 = vsub.s32 %v1594, %v1596
    %v1598 = vrot.slane %v1531, %v1597
    %v1600 = vunpack.c.l.s4 1983009808
    %v1601 = vunpack.c.0.s8 %v1600
    %v1602 = vlaneseq
    %v1603 = vshrl.u32 %v1602, 7
    %v1604 = vsub.s32 %v1601, %v1603
    %v1605 = vrot.slane %v1539, %v1604
    %v1607 = vunpack.c.l.s4 1983009808
    %v1608 = vunpack.c.0.s8 %v1607
    %v1609 = vlaneseq
    %v1610 = vshrl.u32 %v1609, 7
    %v1611 = vsub.s32 %v1608, %v1610
    %v1612 = vrot.slane %v1538, %v1611
    %v1614 = vunpack.c.l.s4 1983009808
    %v1615 = vunpack.c.0.s8 %v1614
    %v1616 = vlaneseq
    %v1617 = vshrl.u32 %v1616, 7
    %v1618 = vsub.s32 %v1615, %v1617
    %v1619 = vrot.slane %v1540, %v1618
    %v1621 = vunpack.c.l.s4 1983009808
    %v1622 = vunpack.c.0.s8 %v1621
    %v1623 = vlaneseq
    %v1624 = vshrl.u32 %v1623, 7
    %v1625 = vsub.s32 %v1622, %v1624
    %v1626 = vrot.slane %v1548, %v1625
    %v1628 = vunpack.c.l.s4 1983009808
    %v1629 = vunpack.c.0.s8 %v1628
    %v1630 = vlaneseq
    %v1631 = vshrl.u32 %v1630, 7
    %v1632 = vsub.s32 %v1629, %v1631
    %v1633 = vrot.slane %v1556, %v1632
    %v1635 = vunpack.c.l.s4 1983009808
    %v1636 = vunpack.c.0.s8 %v1635
    %v1637 = vlaneseq
    %v1638 = vshrl.u32 %v1637, 7
    %v1639 = vsub.s32 %v1636, %v1638
    %v1640 = vrot.slane %v1555, %v1639
    %v1642 = vunpack.c.l.s4 1983009808
    %v1643 = vunpack.c.0.s8 %v1642
    %v1644 = vlaneseq
    %v1645 = vshrl.u32 %v1644, 7
    %v1646 = vsub.s32 %v1643, %v1645
    %v1647 = vrot.slane %v1557, %v1646
    %v1649 = vunpack.c.l.s4 1983009808
    %v1650 = vunpack.c.0.s8 %v1649
    %v1651 = vlaneseq
    %v1652 = vshrl.u32 %v1651, 7
    %v1653 = vsub.s32 %v1650, %v1652
    %v1654 = vrot.slane %v1565, %v1653
    %v1656 = vunpack.c.l.s4 1983009808
    %v1657 = vunpack.c.0.s8 %v1656
    %v1658 = vlaneseq
    %v1659 = vshrl.u32 %v1658, 7
    %v1660 = vsub.s32 %v1657, %v1659
    %v1661 = vrot.slane %v1573, %v1660
    %v1663 = vunpack.c.l.s4 1983009808
    %v1664 = vunpack.c.0.s8 %v1663
    %v1665 = vlaneseq
    %v1666 = vshrl.u32 %v1665, 7
    %v1667 = vsub.s32 %v1664, %v1666
    %v1668 = vrot.slane %v1572, %v1667
    %v1670 = vunpack.c.l.s4 1983009808
    %v1671 = vunpack.c.0.s8 %v1670
    %v1672 = vlaneseq
    %v1673 = vshrl.u32 %v1672, 7
    %v1674 = vsub.s32 %v1671, %v1673
    %v1675 = vrot.slane %v1574, %v1674
    %v1677 = vunpack.c.l.s4 1983009808
    %v1678 = vunpack.c.0.s8 %v1677
    %v1679 = vlaneseq
    %v1680 = vshrl.u32 %v1679, 7
    %v1681 = vsub.s32 %v1678, %v1680
    %v1682 = vrot.slane %v1582, %v1681
    %v1684 = vunpack.c.l.s4 1983009808
    %v1685 = vunpack.c.0.s8 %v1684
    %v1686 = vlaneseq
    %v1687 = vshrl.u32 %v1686, 7
    %v1688 = vsub.s32 %v1685, %v1687
    %v1689 = vrot.slane %v1590, %v1688
    %v1691 = vunpack.c.l.s4 1983009808
    %v1692 = vunpack.c.0.s8 %v1691
    %v1693 = vlaneseq
    %v1694 = vshrl.u32 %v1693, 7
    %v1695 = vsub.s32 %v1692, %v1694
    %v1696 = vrot.slane %v1589, %v1695
    %v1698 = vunpack.c.l.s4 1983009808
    %v1699 = vunpack.c.0.s8 %v1698
    %v1700 = vlaneseq
    %v1701 = vshrl.u32 %v1700, 7
    %v1702 = vsub.s32 %v1699, %v1701
    %v1703 = vrot.slane %v1591, %v1702
    %v1705 = vshrl.u32 %v1598, 16
    %v1707 = vrot.slane %v1705, 7
    %v1708 = vshll.u32 %v1598, 16
    %v1710 = vor.u32 %v1707, %v1708
    %v1712 = vshrl.u32 %v1605, 16
    %v1714 = vrot.slane %v1712, 7
    %v1715 = vshll.u32 %v1605, 16
    %v1717 = vor.u32 %v1714, %v1715
    %v1719 = vshrl.u32 %v1612, 16
    %v1721 = vrot.slane %v1719, 7
    %v1722 = vshll.u32 %v1612, 16
    %v1724 = vor.u32 %v1721, %v1722
    %v1726 = vshrl.u32 %v1619, 16
    %v1728 = vrot.slane %v1726, 7
    %v1729 = vshll.u32 %v1619, 16
    %v1731 = vor.u32 %v1728, %v1729
    %v1733 = vshrl.u32 %v1626, 16
    %v1735 = vrot.slane %v1733, 7
    %v1736 = vshll.u32 %v1626, 16
    %v1738 = vor.u32 %v1735, %v1736
    %v1740 = vshrl.u32 %v1633, 16
    %v1742 = vrot.slane %v1740, 7
    %v1743 = vshll.u32 %v1633, 16
    %v1745 = vor.u32 %v1742, %v1743
    %v1747 = vshrl.u32 %v1640, 16
    %v1749 = vrot.slane %v1747, 7
    %v1750 = vshll.u32 %v1640, 16
    %v1752 = vor.u32 %v1749, %v1750
    %v1754 = vshrl.u32 %v1647, 16
    %v1756 = vrot.slane %v1754, 7
    %v1757 = vshll.u32 %v1647, 16
    %v1759 = vor.u32 %v1756, %v1757
    %v1761 = vshrl.u32 %v1654, 16
    %v1763 = vrot.slane %v1761, 7
    %v1764 = vshll.u32 %v1654, 16
    %v1766 = vor.u32 %v1763, %v1764
    %v1768 = vshrl.u32 %v1661, 16
    %v1770 = vrot.slane %v1768, 7
    %v1771 = vshll.u32 %v1661, 16
    %v1773 = vor.u32 %v1770, %v1771
    %v1775 = vshrl.u32 %v1668, 16
    %v1777 = vrot.slane %v1775, 7
    %v1778 = vshll.u32 %v1668, 16
    %v1780 = vor.u32 %v1777, %v1778
    %v1782 = vshrl.u32 %v1675, 16
    %v1784 = vrot.slane %v1782, 7
    %v1785 = vshll.u32 %v1675, 16
    %v1787 = vor.u32 %v1784, %v1785
    %v1789 = vshrl.u32 %v1682, 16
    %v1791 = vrot.slane %v1789, 7
    %v1792 = vshll.u32 %v1682, 16
    %v1794 = vor.u32 %v1791, %v1792
    %v1796 = vshrl.u32 %v1689, 16
    %v1798 = vrot.slane %v1796, 7
    %v1799 = vshll.u32 %v1689, 16
    %v1801 = vor.u32 %v1798, %v1799
    %v1803 = vshrl.u32 %v1696, 16
    %v1805 = vrot.slane %v1803, 7
    %v1806 = vshll.u32 %v1696, 16
    %v1808 = vor.u32 %v1805, %v1806
    %v1810 = vshrl.u32 %v1703, 16
    %v1812 = vrot.slane %v1810, 7
    %v1813 = vshll.u32 %v1703, 16
    %v1815 = vor.u32 %v1812, %v1813
    %s1832 = scalar_lea.vmem [#allocation2], 4
    %vm1833 = vsmask.f32 2306
    %vm1834 = vmand %vm92, %vm1833
    %v1835 = vld [vmem:[%s1832] sm:$0x7]
    %v1836 = vsel %vm1834, %v1710, %v1835
    %1837 = vst [vmem:[%s1832] sm:$0x7] %v1836
    %v1838 = vld [vmem:[%s1832 + $0x4] sm:$0x7]
    %v1839 = vsel %vm1834, %v1717, %v1838
    %1840 = vst [vmem:[%s1832 + $0x4] sm:$0x7] %v1839
    %v1841 = vld [vmem:[%s1832 + $0x8] sm:$0x7]
    %v1842 = vsel %vm1834, %v1724, %v1841
    %1843 = vst [vmem:[%s1832 + $0x8] sm:$0x7] %v1842
    %v1844 = vld [vmem:[%s1832 + $0xc] sm:$0x7]
    %v1845 = vsel %vm1834, %v1731, %v1844
    %1846 = vst [vmem:[%s1832 + $0xc] sm:$0x7] %v1845
    %v1847 = vld [vmem:[%s1832 + $0x10] sm:$0x7]
    %v1848 = vsel %vm1834, %v1738, %v1847
    %1849 = vst [vmem:[%s1832 + $0x10] sm:$0x7] %v1848
    %v1850 = vld [vmem:[%s1832 + $0x14] sm:$0x7]
    %v1851 = vsel %vm1834, %v1745, %v1850
    %1852 = vst [vmem:[%s1832 + $0x14] sm:$0x7] %v1851
    %v1853 = vld [vmem:[%s1832 + $0x18] sm:$0x7]
    %v1854 = vsel %vm1834, %v1752, %v1853
    %1855 = vst [vmem:[%s1832 + $0x18] sm:$0x7] %v1854
    %v1856 = vld [vmem:[%s1832 + $0x1c] sm:$0x7]
    %v1857 = vsel %vm1834, %v1759, %v1856
    %1858 = vst [vmem:[%s1832 + $0x1c] sm:$0x7] %v1857
    %v1859 = vld [vmem:[%s1832 + $0x28] sm:$0x7]
    %v1860 = vsel %vm1834, %v1766, %v1859
    %1861 = vst [vmem:[%s1832 + $0x28] sm:$0x7] %v1860
    %v1862 = vld [vmem:[%s1832 + $0x2c] sm:$0x7]
    %v1863 = vsel %vm1834, %v1773, %v1862
    %1864 = vst [vmem:[%s1832 + $0x2c] sm:$0x7] %v1863
    %v1865 = vld [vmem:[%s1832 + $0x30] sm:$0x7]
    %v1866 = vsel %vm1834, %v1780, %v1865
    %1867 = vst [vmem:[%s1832 + $0x30] sm:$0x7] %v1866
    %v1868 = vld [vmem:[%s1832 + $0x34] sm:$0x7]
    %v1869 = vsel %vm1834, %v1787, %v1868
    %1870 = vst [vmem:[%s1832 + $0x34] sm:$0x7] %v1869
    %v1871 = vld [vmem:[%s1832 + $0x38] sm:$0x7]
    %v1872 = vsel %vm1834, %v1794, %v1871
    %1873 = vst [vmem:[%s1832 + $0x38] sm:$0x7] %v1872
    %v1874 = vld [vmem:[%s1832 + $0x3c] sm:$0x7]
    %v1875 = vsel %vm1834, %v1801, %v1874
    %1876 = vst [vmem:[%s1832 + $0x3c] sm:$0x7] %v1875
    %v1877 = vld [vmem:[%s1832 + $0x40] sm:$0x7]
    %v1878 = vsel %vm1834, %v1808, %v1877
    %1879 = vst [vmem:[%s1832 + $0x40] sm:$0x7] %v1878
    %v1880 = vld [vmem:[%s1832 + $0x44] sm:$0x7]
    %v1881 = vsel %vm1834, %v1815, %v1880
    %1882 = vst [vmem:[%s1832 + $0x44] sm:$0x7] %v1881
    %v1899 = vunpack.c.l.b16 %v320
    %v1900 = vunpack.c.l.b16 %v322
    %v1901 = vunpack.c.l.b16 %v324
    %v1902 = vunpack.c.l.b16 %v326
    %v1903 = vunpack.c.l.b16 %v328
    %v1904 = vunpack.c.l.b16 %v330
    %v1905 = vunpack.c.l.b16 %v332
    %v1906 = vunpack.c.l.b16 %v334
    %v1907 = vunpack.c.l.b16 %v337
    %v1908 = vunpack.c.l.b16 %v339
    %v1909 = vunpack.c.l.b16 %v341
    %v1910 = vunpack.c.l.b16 %v343
    %v1911 = vunpack.c.l.b16 %v345
    %v1912 = vunpack.c.l.b16 %v347
    %v1913 = vunpack.c.l.b16 %v349
    %v1914 = vunpack.c.l.b16 %v351
    %v1915 = vpack.c.b16 %v1899, %v1899
    %v1916 = vpack.c.b16 %v1900, %v1900
    %v1917 = vpack.c.b16 %v1901, %v1901
    %v1918 = vpack.c.b16 %v1902, %v1902
    %v1919 = vpack.c.b16 %v1903, %v1903
    %v1920 = vpack.c.b16 %v1904, %v1904
    %v1921 = vpack.c.b16 %v1905, %v1905
    %v1922 = vpack.c.b16 %v1906, %v1906
    %v1923 = vpack.c.b16 %v1907, %v1907
    %v1924 = vpack.c.b16 %v1908, %v1908
    %v1925 = vpack.c.b16 %v1909, %v1909
    %v1926 = vpack.c.b16 %v1910, %v1910
    %v1927 = vpack.c.b16 %v1911, %v1911
    %v1928 = vpack.c.b16 %v1912, %v1912
    %v1929 = vpack.c.b16 %v1913, %v1913
    %v1930 = vpack.c.b16 %v1914, %v1914
    %1931 = vrot.lane.b32.xlu0 %v1915, 4
    %v1932 = vpop.permute.xlu0 %1931
    %1933 = vrot.lane.b32.xlu0 %v1916, 4
    %v1934 = vpop.permute.xlu0 %1933
    %1935 = vrot.lane.b32.xlu0 %v1917, 4
    %v1936 = vpop.permute.xlu0 %1935
    %1937 = vrot.lane.b32.xlu0 %v1918, 4
    %v1938 = vpop.permute.xlu0 %1937
    %1939 = vrot.lane.b32.xlu0 %v1919, 4
    %v1940 = vpop.permute.xlu0 %1939
    %1941 = vrot.lane.b32.xlu0 %v1920, 4
    %v1942 = vpop.permute.xlu0 %1941
    %1943 = vrot.lane.b32.xlu0 %v1921, 4
    %v1944 = vpop.permute.xlu0 %1943
    %1945 = vrot.lane.b32.xlu0 %v1922, 4
    %v1946 = vpop.permute.xlu0 %1945
    %1947 = vrot.lane.b32.xlu0 %v1923, 4
    %v1948 = vpop.permute.xlu0 %1947
    %1949 = vrot.lane.b32.xlu0 %v1924, 4
    %v1950 = vpop.permute.xlu0 %1949
    %1951 = vrot.lane.b32.xlu0 %v1925, 4
    %v1952 = vpop.permute.xlu0 %1951
    %1953 = vrot.lane.b32.xlu0 %v1926, 4
    %v1954 = vpop.permute.xlu0 %1953
    %1955 = vrot.lane.b32.xlu0 %v1927, 4
    %v1956 = vpop.permute.xlu0 %1955
    %1957 = vrot.lane.b32.xlu0 %v1928, 4
    %v1958 = vpop.permute.xlu0 %1957
    %1959 = vrot.lane.b32.xlu0 %v1929, 4
    %v1960 = vpop.permute.xlu0 %1959
    %1961 = vrot.lane.b32.xlu0 %v1930, 4
    %v1962 = vpop.permute.xlu0 %1961
    %v1965 = vunpack.c.l.b16 %v215
    %v1966 = vunpack.c.l.b16 %v232
    %v1967 = vpack.c.b16 %v1965, %v1965
    %v1968 = vpack.c.b16 %v1966, %v1966
    %v1970 = vshrl.u32 %v1967, 16
    %v1972 = vshll.u32 %v1967, 16
    %v1974 = vrot.slane %v1972, 1
    %v1975 = vor.u32 %v1970, %v1974
    %v1977 = vshrl.u32 %v786, 16
    %v1979 = vshll.u32 %v786, 16
    %v1981 = vrot.slane %v1979, 1
    %v1982 = vor.u32 %v1977, %v1981
    %v1984 = vshrl.u32 %v787, 16
    %v1986 = vshll.u32 %v787, 16
    %v1988 = vrot.slane %v1986, 1
    %v1989 = vor.u32 %v1984, %v1988
    %v1991 = vshrl.u32 %v788, 16
    %v1993 = vshll.u32 %v788, 16
    %v1995 = vrot.slane %v1993, 1
    %v1996 = vor.u32 %v1991, %v1995
    %v1998 = vshrl.u32 %v789, 16
    %v2000 = vshll.u32 %v789, 16
    %v2002 = vrot.slane %v2000, 1
    %v2003 = vor.u32 %v1998, %v2002
    %v2005 = vshrl.u32 %v790, 16
    %v2007 = vshll.u32 %v790, 16
    %v2009 = vrot.slane %v2007, 1
    %v2010 = vor.u32 %v2005, %v2009
    %v2012 = vshrl.u32 %v791, 16
    %v2014 = vshll.u32 %v791, 16
    %v2016 = vrot.slane %v2014, 1
    %v2017 = vor.u32 %v2012, %v2016
    %v2019 = vshrl.u32 %v792, 16
    %v2021 = vshll.u32 %v792, 16
    %v2023 = vrot.slane %v2021, 1
    %v2024 = vor.u32 %v2019, %v2023
    %v2026 = vshrl.u32 %v1968, 16
    %v2028 = vshll.u32 %v1968, 16
    %v2030 = vrot.slane %v2028, 1
    %v2031 = vor.u32 %v2026, %v2030
    %v2033 = vshrl.u32 %v794, 16
    %v2035 = vshll.u32 %v794, 16
    %v2037 = vrot.slane %v2035, 1
    %v2038 = vor.u32 %v2033, %v2037
    %v2040 = vshrl.u32 %v795, 16
    %v2042 = vshll.u32 %v795, 16
    %v2044 = vrot.slane %v2042, 1
    %v2045 = vor.u32 %v2040, %v2044
    %v2047 = vshrl.u32 %v796, 16
    %v2049 = vshll.u32 %v796, 16
    %v2051 = vrot.slane %v2049, 1
    %v2052 = vor.u32 %v2047, %v2051
    %v2054 = vshrl.u32 %v797, 16
    %v2056 = vshll.u32 %v797, 16
    %v2058 = vrot.slane %v2056, 1
    %v2059 = vor.u32 %v2054, %v2058
    %v2061 = vshrl.u32 %v798, 16
    %v2063 = vshll.u32 %v798, 16
    %v2065 = vrot.slane %v2063, 1
    %v2066 = vor.u32 %v2061, %v2065
    %v2068 = vshrl.u32 %v799, 16
    %v2070 = vshll.u32 %v799, 16
    %v2072 = vrot.slane %v2070, 1
    %v2073 = vor.u32 %v2068, %v2072
    %v2075 = vshrl.u32 %v800, 16
    %v2077 = vshll.u32 %v800, 16
    %v2079 = vrot.slane %v2077, 1
    %v2080 = vor.u32 %v2075, %v2079
    %2081 = vrot.lane.b32.xlu0 %v1975, 8
    %v2082 = vpop.permute.xlu0 %2081
    %2083 = vrot.lane.b32.xlu0 %v1982, 8
    %v2084 = vpop.permute.xlu0 %2083
    %2085 = vrot.lane.b32.xlu0 %v1989, 8
    %v2086 = vpop.permute.xlu0 %2085
    %2087 = vrot.lane.b32.xlu0 %v1996, 8
    %v2088 = vpop.permute.xlu0 %2087
    %2089 = vrot.lane.b32.xlu0 %v2003, 8
    %v2090 = vpop.permute.xlu0 %2089
    %2091 = vrot.lane.b32.xlu0 %v2010, 8
    %v2092 = vpop.permute.xlu0 %2091
    %2093 = vrot.lane.b32.xlu0 %v2017, 8
    %v2094 = vpop.permute.xlu0 %2093
    %2095 = vrot.lane.b32.xlu0 %v2024, 8
    %v2096 = vpop.permute.xlu0 %2095
    %2097 = vrot.lane.b32.xlu0 %v2031, 8
    %v2098 = vpop.permute.xlu0 %2097
    %2099 = vrot.lane.b32.xlu0 %v2038, 8
    %v2100 = vpop.permute.xlu0 %2099
    %2101 = vrot.lane.b32.xlu0 %v2045, 8
    %v2102 = vpop.permute.xlu0 %2101
    %2103 = vrot.lane.b32.xlu0 %v2052, 8
    %v2104 = vpop.permute.xlu0 %2103
    %2105 = vrot.lane.b32.xlu0 %v2059, 8
    %v2106 = vpop.permute.xlu0 %2105
    %2107 = vrot.lane.b32.xlu0 %v2066, 8
    %v2108 = vpop.permute.xlu0 %2107
    %2109 = vrot.lane.b32.xlu0 %v2073, 8
    %v2110 = vpop.permute.xlu0 %2109
    %2111 = vrot.lane.b32.xlu0 %v2080, 8
    %v2112 = vpop.permute.xlu0 %2111
    %2113 = vrot.lane.b32.xlu0 %v706, 12
    %v2114 = vpop.permute.xlu0 %2113
    %2115 = vrot.lane.b32.xlu0 %v707, 12
    %v2116 = vpop.permute.xlu0 %2115
    %2117 = vrot.lane.b32.xlu0 %v708, 12
    %v2118 = vpop.permute.xlu0 %2117
    %2119 = vrot.lane.b32.xlu0 %v709, 12
    %v2120 = vpop.permute.xlu0 %2119
    %2121 = vrot.lane.b32.xlu0 %v710, 12
    %v2122 = vpop.permute.xlu0 %2121
    %2123 = vrot.lane.b32.xlu0 %v711, 12
    %v2124 = vpop.permute.xlu0 %2123
    %2125 = vrot.lane.b32.xlu0 %v712, 12
    %v2126 = vpop.permute.xlu0 %2125
    %2127 = vrot.lane.b32.xlu0 %v713, 12
    %v2128 = vpop.permute.xlu0 %2127
    %2129 = vrot.lane.b32.xlu0 %v714, 12
    %v2130 = vpop.permute.xlu0 %2129
    %2131 = vrot.lane.b32.xlu0 %v715, 12
    %v2132 = vpop.permute.xlu0 %2131
    %2133 = vrot.lane.b32.xlu0 %v716, 12
    %v2134 = vpop.permute.xlu0 %2133
    %2135 = vrot.lane.b32.xlu0 %v717, 12
    %v2136 = vpop.permute.xlu0 %2135
    %2137 = vrot.lane.b32.xlu0 %v718, 12
    %v2138 = vpop.permute.xlu0 %2137
    %2139 = vrot.lane.b32.xlu0 %v719, 12
    %v2140 = vpop.permute.xlu0 %2139
    %2141 = vrot.lane.b32.xlu0 %v720, 12
    %v2142 = vpop.permute.xlu0 %2141
    %2143 = vrot.lane.b32.xlu0 %v721, 12
    %v2144 = vpop.permute.xlu0 %2143
    %v2161 = vunpack.c.l.b16 %v321
    %v2162 = vunpack.c.l.b16 %v323
    %v2163 = vunpack.c.l.b16 %v325
    %v2164 = vunpack.c.l.b16 %v327
    %v2165 = vunpack.c.l.b16 %v329
    %v2166 = vunpack.c.l.b16 %v331
    %v2167 = vunpack.c.l.b16 %v333
    %v2168 = vunpack.c.l.b16 %v335
    %v2169 = vunpack.c.l.b16 %v338
    %v2170 = vunpack.c.l.b16 %v340
    %v2171 = vunpack.c.l.b16 %v342
    %v2172 = vunpack.c.l.b16 %v344
    %v2173 = vunpack.c.l.b16 %v346
    %v2174 = vunpack.c.l.b16 %v348
    %v2175 = vunpack.c.l.b16 %v350
    %v2176 = vunpack.c.l.b16 %v352
    %v2177 = vpack.c.b16 %v2161, %v2161
    %v2178 = vpack.c.b16 %v2162, %v2162
    %v2179 = vpack.c.b16 %v2163, %v2163
    %v2180 = vpack.c.b16 %v2164, %v2164
    %v2181 = vpack.c.b16 %v2165, %v2165
    %v2182 = vpack.c.b16 %v2166, %v2166
    %v2183 = vpack.c.b16 %v2167, %v2167
    %v2184 = vpack.c.b16 %v2168, %v2168
    %v2185 = vpack.c.b16 %v2169, %v2169
    %v2186 = vpack.c.b16 %v2170, %v2170
    %v2187 = vpack.c.b16 %v2171, %v2171
    %v2188 = vpack.c.b16 %v2172, %v2172
    %v2189 = vpack.c.b16 %v2173, %v2173
    %v2190 = vpack.c.b16 %v2174, %v2174
    %v2191 = vpack.c.b16 %v2175, %v2175
    %v2192 = vpack.c.b16 %v2176, %v2176
    %2193 = vrot.lane.b32.xlu0 %v2177, 16
    %v2194 = vpop.permute.xlu0 %2193
    %2195 = vrot.lane.b32.xlu0 %v2178, 16
    %v2196 = vpop.permute.xlu0 %2195
    %2197 = vrot.lane.b32.xlu0 %v2179, 16
    %v2198 = vpop.permute.xlu0 %2197
    %2199 = vrot.lane.b32.xlu0 %v2180, 16
    %v2200 = vpop.permute.xlu0 %2199
    %2201 = vrot.lane.b32.xlu0 %v2181, 16
    %v2202 = vpop.permute.xlu0 %2201
    %2203 = vrot.lane.b32.xlu0 %v2182, 16
    %v2204 = vpop.permute.xlu0 %2203
    %2205 = vrot.lane.b32.xlu0 %v2183, 16
    %v2206 = vpop.permute.xlu0 %2205
    %2207 = vrot.lane.b32.xlu0 %v2184, 16
    %v2208 = vpop.permute.xlu0 %2207
    %2209 = vrot.lane.b32.xlu0 %v2185, 16
    %v2210 = vpop.permute.xlu0 %2209
    %2211 = vrot.lane.b32.xlu0 %v2186, 16
    %v2212 = vpop.permute.xlu0 %2211
    %2213 = vrot.lane.b32.xlu0 %v2187, 16
    %v2214 = vpop.permute.xlu0 %2213
    %2215 = vrot.lane.b32.xlu0 %v2188, 16
    %v2216 = vpop.permute.xlu0 %2215
    %2217 = vrot.lane.b32.xlu0 %v2189, 16
    %v2218 = vpop.permute.xlu0 %2217
    %2219 = vrot.lane.b32.xlu0 %v2190, 16
    %v2220 = vpop.permute.xlu0 %2219
    %2221 = vrot.lane.b32.xlu0 %v2191, 16
    %v2222 = vpop.permute.xlu0 %2221
    %2223 = vrot.lane.b32.xlu0 %v2192, 16
    %v2224 = vpop.permute.xlu0 %2223
    %v2226 = vshrl.u32 %v546, 16
    %v2228 = vshll.u32 %v546, 16
    %v2230 = vrot.slane %v2228, 1
    %v2231 = vor.u32 %v2226, %v2230
    %v2233 = vshrl.u32 %v547, 16
    %v2235 = vshll.u32 %v547, 16
    %v2237 = vrot.slane %v2235, 1
    %v2238 = vor.u32 %v2233, %v2237
    %v2240 = vshrl.u32 %v548, 16
    %v2242 = vshll.u32 %v548, 16
    %v2244 = vrot.slane %v2242, 1
    %v2245 = vor.u32 %v2240, %v2244
    %v2247 = vshrl.u32 %v549, 16
    %v2249 = vshll.u32 %v549, 16
    %v2251 = vrot.slane %v2249, 1
    %v2252 = vor.u32 %v2247, %v2251
    %v2254 = vshrl.u32 %v550, 16
    %v2256 = vshll.u32 %v550, 16
    %v2258 = vrot.slane %v2256, 1
    %v2259 = vor.u32 %v2254, %v2258
    %v2261 = vshrl.u32 %v551, 16
    %v2263 = vshll.u32 %v551, 16
    %v2265 = vrot.slane %v2263, 1
    %v2266 = vor.u32 %v2261, %v2265
    %v2268 = vshrl.u32 %v552, 16
    %v2270 = vshll.u32 %v552, 16
    %v2272 = vrot.slane %v2270, 1
    %v2273 = vor.u32 %v2268, %v2272
    %v2275 = vshrl.u32 %v553, 16
    %v2277 = vshll.u32 %v553, 16
    %v2279 = vrot.slane %v2277, 1
    %v2280 = vor.u32 %v2275, %v2279
    %v2282 = vshrl.u32 %v554, 16
    %v2284 = vshll.u32 %v554, 16
    %v2286 = vrot.slane %v2284, 1
    %v2287 = vor.u32 %v2282, %v2286
    %v2289 = vshrl.u32 %v555, 16
    %v2291 = vshll.u32 %v555, 16
    %v2293 = vrot.slane %v2291, 1
    %v2294 = vor.u32 %v2289, %v2293
    %v2296 = vshrl.u32 %v556, 16
    %v2298 = vshll.u32 %v556, 16
    %v2300 = vrot.slane %v2298, 1
    %v2301 = vor.u32 %v2296, %v2300
    %v2303 = vshrl.u32 %v557, 16
    %v2305 = vshll.u32 %v557, 16
    %v2307 = vrot.slane %v2305, 1
    %v2308 = vor.u32 %v2303, %v2307
    %v2310 = vshrl.u32 %v558, 16
    %v2312 = vshll.u32 %v558, 16
    %v2314 = vrot.slane %v2312, 1
    %v2315 = vor.u32 %v2310, %v2314
    %v2317 = vshrl.u32 %v559, 16
    %v2319 = vshll.u32 %v559, 16
    %v2321 = vrot.slane %v2319, 1
    %v2322 = vor.u32 %v2317, %v2321
    %v2324 = vshrl.u32 %v560, 16
    %v2326 = vshll.u32 %v560, 16
    %v2328 = vrot.slane %v2326, 1
    %v2329 = vor.u32 %v2324, %v2328
    %v2331 = vshrl.u32 %v561, 16
    %v2333 = vshll.u32 %v561, 16
    %v2335 = vrot.slane %v2333, 1
    %v2336 = vor.u32 %v2331, %v2335
    %2337 = vrot.lane.b32.xlu0 %v2231, 20
    %v2338 = vpop.permute.xlu0 %2337
    %2339 = vrot.lane.b32.xlu0 %v2238, 20
    %v2340 = vpop.permute.xlu0 %2339
    %2341 = vrot.lane.b32.xlu0 %v2245, 20
    %v2342 = vpop.permute.xlu0 %2341
    %2343 = vrot.lane.b32.xlu0 %v2252, 20
    %v2344 = vpop.permute.xlu0 %2343
    %2345 = vrot.lane.b32.xlu0 %v2259, 20
    %v2346 = vpop.permute.xlu0 %2345
    %2347 = vrot.lane.b32.xlu0 %v2266, 20
    %v2348 = vpop.permute.xlu0 %2347
    %2349 = vrot.lane.b32.xlu0 %v2273, 20
    %v2350 = vpop.permute.xlu0 %2349
    %2351 = vrot.lane.b32.xlu0 %v2280, 20
    %v2352 = vpop.permute.xlu0 %2351
    %2353 = vrot.lane.b32.xlu0 %v2287, 20
    %v2354 = vpop.permute.xlu0 %2353
    %2355 = vrot.lane.b32.xlu0 %v2294, 20
    %v2356 = vpop.permute.xlu0 %2355
    %2357 = vrot.lane.b32.xlu0 %v2301, 20
    %v2358 = vpop.permute.xlu0 %2357
    %2359 = vrot.lane.b32.xlu0 %v2308, 20
    %v2360 = vpop.permute.xlu0 %2359
    %2361 = vrot.lane.b32.xlu0 %v2315, 20
    %v2362 = vpop.permute.xlu0 %2361
    %2363 = vrot.lane.b32.xlu0 %v2322, 20
    %v2364 = vpop.permute.xlu0 %2363
    %2365 = vrot.lane.b32.xlu0 %v2329, 20
    %v2366 = vpop.permute.xlu0 %2365
    %2367 = vrot.lane.b32.xlu0 %v2336, 20
    %v2368 = vpop.permute.xlu0 %2367
    %2369 = vrot.lane.b32.xlu0 %v467, 24
    %v2370 = vpop.permute.xlu0 %2369
    %2371 = vrot.lane.b32.xlu0 %v468, 24
    %v2372 = vpop.permute.xlu0 %2371
    %2373 = vrot.lane.b32.xlu0 %v469, 24
    %v2374 = vpop.permute.xlu0 %2373
    %2375 = vrot.lane.b32.xlu0 %v470, 24
    %v2376 = vpop.permute.xlu0 %2375
    %2377 = vrot.lane.b32.xlu0 %v471, 24
    %v2378 = vpop.permute.xlu0 %2377
    %2379 = vrot.lane.b32.xlu0 %v472, 24
    %v2380 = vpop.permute.xlu0 %2379
    %2381 = vrot.lane.b32.xlu0 %v473, 24
    %v2382 = vpop.permute.xlu0 %2381
    %2383 = vrot.lane.b32.xlu0 %v876, 24
    %v2384 = vpop.permute.xlu0 %2383
    %2385 = vrot.lane.b32.xlu0 %v475, 24
    %v2386 = vpop.permute.xlu0 %2385
    %2387 = vrot.lane.b32.xlu0 %v476, 24
    %v2388 = vpop.permute.xlu0 %2387
    %2389 = vrot.lane.b32.xlu0 %v477, 24
    %v2390 = vpop.permute.xlu0 %2389
    %2391 = vrot.lane.b32.xlu0 %v478, 24
    %v2392 = vpop.permute.xlu0 %2391
    %2393 = vrot.lane.b32.xlu0 %v479, 24
    %v2394 = vpop.permute.xlu0 %2393
    %2395 = vrot.lane.b32.xlu0 %v480, 24
    %v2396 = vpop.permute.xlu0 %2395
    %2397 = vrot.lane.b32.xlu0 %v481, 24
    %v2398 = vpop.permute.xlu0 %2397
    %2399 = vrot.lane.b32.xlu0 %v877, 24
    %v2400 = vpop.permute.xlu0 %2399
    %v2403 = vunpack.c.l.b16 %v336
    %v2404 = vunpack.c.l.b16 %v353
    %v2405 = vpack.c.b16 %v2403, %v2403
    %v2406 = vpack.c.b16 %v2404, %v2404
    %2407 = vrot.lane.b32.xlu0 %v1916, 28
    %v2408 = vpop.permute.xlu0 %2407
    %2409 = vrot.lane.b32.xlu0 %v1917, 28
    %v2410 = vpop.permute.xlu0 %2409
    %2411 = vrot.lane.b32.xlu0 %v1918, 28
    %v2412 = vpop.permute.xlu0 %2411
    %2413 = vrot.lane.b32.xlu0 %v1919, 28
    %v2414 = vpop.permute.xlu0 %2413
    %2415 = vrot.lane.b32.xlu0 %v1920, 28
    %v2416 = vpop.permute.xlu0 %2415
    %2417 = vrot.lane.b32.xlu0 %v1921, 28
    %v2418 = vpop.permute.xlu0 %2417
    %2419 = vrot.lane.b32.xlu0 %v1922, 28
    %v2420 = vpop.permute.xlu0 %2419
    %2421 = vrot.lane.b32.xlu0 %v2405, 28
    %v2422 = vpop.permute.xlu0 %2421
    %2423 = vrot.lane.b32.xlu0 %v1924, 28
    %v2424 = vpop.permute.xlu0 %2423
    %2425 = vrot.lane.b32.xlu0 %v1925, 28
    %v2426 = vpop.permute.xlu0 %2425
    %2427 = vrot.lane.b32.xlu0 %v1926, 28
    %v2428 = vpop.permute.xlu0 %2427
    %2429 = vrot.lane.b32.xlu0 %v1927, 28
    %v2430 = vpop.permute.xlu0 %2429
    %2431 = vrot.lane.b32.xlu0 %v1928, 28
    %v2432 = vpop.permute.xlu0 %2431
    %2433 = vrot.lane.b32.xlu0 %v1929, 28
    %v2434 = vpop.permute.xlu0 %2433
    %2435 = vrot.lane.b32.xlu0 %v1930, 28
    %v2436 = vpop.permute.xlu0 %2435
    %2437 = vrot.lane.b32.xlu0 %v2406, 28
    %v2438 = vpop.permute.xlu0 %2437
    %v2440 = vshrl.u32 %v793, 16
    %v2442 = vshll.u32 %v793, 16
    %v2444 = vrot.slane %v2442, 1
    %v2445 = vor.u32 %v2440, %v2444
    %v2447 = vshrl.u32 %v801, 16
    %v2449 = vshll.u32 %v801, 16
    %v2451 = vrot.slane %v2449, 1
    %v2452 = vor.u32 %v2447, %v2451
    %2453 = vrot.lane.b32.xlu0 %v1982, 32
    %v2454 = vpop.permute.xlu0 %2453
    %2455 = vrot.lane.b32.xlu0 %v1989, 32
    %v2456 = vpop.permute.xlu0 %2455
    %2457 = vrot.lane.b32.xlu0 %v1996, 32
    %v2458 = vpop.permute.xlu0 %2457
    %2459 = vrot.lane.b32.xlu0 %v2003, 32
    %v2460 = vpop.permute.xlu0 %2459
    %2461 = vrot.lane.b32.xlu0 %v2010, 32
    %v2462 = vpop.permute.xlu0 %2461
    %2463 = vrot.lane.b32.xlu0 %v2017, 32
    %v2464 = vpop.permute.xlu0 %2463
    %2465 = vrot.lane.b32.xlu0 %v2024, 32
    %v2466 = vpop.permute.xlu0 %2465
    %2467 = vrot.lane.b32.xlu0 %v2445, 32
    %v2468 = vpop.permute.xlu0 %2467
    %2469 = vrot.lane.b32.xlu0 %v2038, 32
    %v2470 = vpop.permute.xlu0 %2469
    %2471 = vrot.lane.b32.xlu0 %v2045, 32
    %v2472 = vpop.permute.xlu0 %2471
    %2473 = vrot.lane.b32.xlu0 %v2052, 32
    %v2474 = vpop.permute.xlu0 %2473
    %2475 = vrot.lane.b32.xlu0 %v2059, 32
    %v2476 = vpop.permute.xlu0 %2475
    %2477 = vrot.lane.b32.xlu0 %v2066, 32
    %v2478 = vpop.permute.xlu0 %2477
    %2479 = vrot.lane.b32.xlu0 %v2073, 32
    %v2480 = vpop.permute.xlu0 %2479
    %2481 = vrot.lane.b32.xlu0 %v2080, 32
    %v2482 = vpop.permute.xlu0 %2481
    %2483 = vrot.lane.b32.xlu0 %v2452, 32
    %v2484 = vpop.permute.xlu0 %2483
    %v2487 = vsel %vm910, %v285, %v1932
    %v2490 = vsel %vm910, %v287, %v1934
    %v2493 = vsel %vm910, %v289, %v1936
    %v2496 = vsel %vm910, %v291, %v1938
    %v2499 = vsel %vm910, %v293, %v1940
    %v2502 = vsel %vm910, %v295, %v1942
    %v2505 = vsel %vm910, %v297, %v1944
    %v2508 = vsel %vm910, %v299, %v1946
    %v2511 = vsel %vm910, %v302, %v1948
    %v2514 = vsel %vm910, %v304, %v1950
    %v2517 = vsel %vm910, %v306, %v1952
    %v2520 = vsel %vm910, %v308, %v1954
    %v2523 = vsel %vm910, %v310, %v1956
    %v2526 = vsel %vm910, %v312, %v1958
    %v2529 = vsel %vm910, %v314, %v1960
    %v2532 = vsel %vm910, %v316, %v1962
    %v2534 = vsel %vm959, %v2487, %v2082
    %v2536 = vsel %vm959, %v2490, %v2084
    %v2538 = vsel %vm959, %v2493, %v2086
    %v2540 = vsel %vm959, %v2496, %v2088
    %v2542 = vsel %vm959, %v2499, %v2090
    %v2544 = vsel %vm959, %v2502, %v2092
    %v2546 = vsel %vm959, %v2505, %v2094
    %v2548 = vsel %vm959, %v2508, %v2096
    %v2550 = vsel %vm959, %v2511, %v2098
    %v2552 = vsel %vm959, %v2514, %v2100
    %v2554 = vsel %vm959, %v2517, %v2102
    %v2556 = vsel %vm959, %v2520, %v2104
    %v2558 = vsel %vm959, %v2523, %v2106
    %v2560 = vsel %vm959, %v2526, %v2108
    %v2562 = vsel %vm959, %v2529, %v2110
    %v2564 = vsel %vm959, %v2532, %v2112
    %v2566 = vsel %vm992, %v2534, %v2114
    %v2568 = vsel %vm992, %v2536, %v2116
    %v2570 = vsel %vm992, %v2538, %v2118
    %v2572 = vsel %vm992, %v2540, %v2120
    %v2574 = vsel %vm992, %v2542, %v2122
    %v2576 = vsel %vm992, %v2544, %v2124
    %v2578 = vsel %vm992, %v2546, %v2126
    %v2580 = vsel %vm992, %v2548, %v2128
    %v2582 = vsel %vm992, %v2550, %v2130
    %v2584 = vsel %vm992, %v2552, %v2132
    %v2586 = vsel %vm992, %v2554, %v2134
    %v2588 = vsel %vm992, %v2556, %v2136
    %v2590 = vsel %vm992, %v2558, %v2138
    %v2592 = vsel %vm992, %v2560, %v2140
    %v2594 = vsel %vm992, %v2562, %v2142
    %v2596 = vsel %vm992, %v2564, %v2144
    %v2598 = vsel %vm1025, %v2566, %v2194
    %v2600 = vsel %vm1025, %v2568, %v2196
    %v2602 = vsel %vm1025, %v2570, %v2198
    %v2604 = vsel %vm1025, %v2572, %v2200
    %v2606 = vsel %vm1025, %v2574, %v2202
    %v2608 = vsel %vm1025, %v2576, %v2204
    %v2610 = vsel %vm1025, %v2578, %v2206
    %v2612 = vsel %vm1025, %v2580, %v2208
    %v2614 = vsel %vm1025, %v2582, %v2210
    %v2616 = vsel %vm1025, %v2584, %v2212
    %v2618 = vsel %vm1025, %v2586, %v2214
    %v2620 = vsel %vm1025, %v2588, %v2216
    %v2622 = vsel %vm1025, %v2590, %v2218
    %v2624 = vsel %vm1025, %v2592, %v2220
    %v2626 = vsel %vm1025, %v2594, %v2222
    %v2628 = vsel %vm1025, %v2596, %v2224
    %v2630 = vsel %vm1058, %v2598, %v2338
    %v2632 = vsel %vm1058, %v2600, %v2340
    %v2634 = vsel %vm1058, %v2602, %v2342
    %v2636 = vsel %vm1058, %v2604, %v2344
    %v2638 = vsel %vm1058, %v2606, %v2346
    %v2640 = vsel %vm1058, %v2608, %v2348
    %v2642 = vsel %vm1058, %v2610, %v2350
    %v2644 = vsel %vm1058, %v2612, %v2352
    %v2646 = vsel %vm1058, %v2614, %v2354
    %v2648 = vsel %vm1058, %v2616, %v2356
    %v2650 = vsel %vm1058, %v2618, %v2358
    %v2652 = vsel %vm1058, %v2620, %v2360
    %v2654 = vsel %vm1058, %v2622, %v2362
    %v2656 = vsel %vm1058, %v2624, %v2364
    %v2658 = vsel %vm1058, %v2626, %v2366
    %v2660 = vsel %vm1058, %v2628, %v2368
    %v2662 = vsel %vm1091, %v2630, %v2370
    %v2664 = vsel %vm1091, %v2632, %v2372
    %v2666 = vsel %vm1091, %v2634, %v2374
    %v2668 = vsel %vm1091, %v2636, %v2376
    %v2670 = vsel %vm1091, %v2638, %v2378
    %v2672 = vsel %vm1091, %v2640, %v2380
    %v2674 = vsel %vm1091, %v2642, %v2382
    %v2676 = vsel %vm1091, %v2644, %v2384
    %v2678 = vsel %vm1091, %v2646, %v2386
    %v2680 = vsel %vm1091, %v2648, %v2388
    %v2682 = vsel %vm1091, %v2650, %v2390
    %v2684 = vsel %vm1091, %v2652, %v2392
    %v2686 = vsel %vm1091, %v2654, %v2394
    %v2688 = vsel %vm1091, %v2656, %v2396
    %v2690 = vsel %vm1091, %v2658, %v2398
    %v2692 = vsel %vm1091, %v2660, %v2400
    %v2694 = vsel %vm1124, %v2662, %v2408
    %v2696 = vsel %vm1124, %v2664, %v2410
    %v2698 = vsel %vm1124, %v2666, %v2412
    %v2700 = vsel %vm1124, %v2668, %v2414
    %v2702 = vsel %vm1124, %v2670, %v2416
    %v2704 = vsel %vm1124, %v2672, %v2418
    %v2706 = vsel %vm1124, %v2674, %v2420
    %v2708 = vsel %vm1124, %v2676, %v2422
    %v2710 = vsel %vm1124, %v2678, %v2424
    %v2712 = vsel %vm1124, %v2680, %v2426
    %v2714 = vsel %vm1124, %v2682, %v2428
    %v2716 = vsel %vm1124, %v2684, %v2430
    %v2718 = vsel %vm1124, %v2686, %v2432
    %v2720 = vsel %vm1124, %v2688, %v2434
    %v2722 = vsel %vm1124, %v2690, %v2436
    %v2724 = vsel %vm1124, %v2692, %v2438
    %v2726 = vsel %vm1157, %v2694, %v2454
    %v2728 = vsel %vm1157, %v2696, %v2456
    %v2730 = vsel %vm1157, %v2698, %v2458
    %v2732 = vsel %vm1157, %v2700, %v2460
    %v2734 = vsel %vm1157, %v2702, %v2462
    %v2736 = vsel %vm1157, %v2704, %v2464
    %v2738 = vsel %vm1157, %v2706, %v2466
    %v2740 = vsel %vm1157, %v2708, %v2468
    %v2742 = vsel %vm1157, %v2710, %v2470
    %v2744 = vsel %vm1157, %v2712, %v2472
    %v2746 = vsel %vm1157, %v2714, %v2474
    %v2748 = vsel %vm1157, %v2716, %v2476
    %v2750 = vsel %vm1157, %v2718, %v2478
    %v2752 = vsel %vm1157, %v2720, %v2480
    %v2754 = vsel %vm1157, %v2722, %v2482
    %v2756 = vsel %vm1157, %v2724, %v2484
    %v2773 = vcombine.low %v2726, %v2728
    %v2774 = vcombine.low %v2730, %v2732
    %v2776 = vunpack.c.l.s4 1983009808
    %v2777 = vunpack.c.0.s8 %v2776
    %v2778 = vlaneseq
    %v2779 = vshrl.u32 %v2778, 7
    %v2780 = vsub.s32 %v2777, %v2779
    %v2781 = vrot.slane %v2773, %v2780
    %v2783 = vunpack.c.l.s4 1983009808
    %v2784 = vunpack.c.0.s8 %v2783
    %v2785 = vlaneseq
    %v2786 = vshrl.u32 %v2785, 7
    %v2787 = vsub.s32 %v2784, %v2786
    %v2788 = vrot.slane %v2774, %v2787
    %v2789 = vcombine.low %v2781, %v2788
    %v2790 = vcombine.low %v2734, %v2736
    %v2791 = vcombine.low %v2738, %v2740
    %v2793 = vunpack.c.l.s4 1983009808
    %v2794 = vunpack.c.0.s8 %v2793
    %v2795 = vlaneseq
    %v2796 = vshrl.u32 %v2795, 7
    %v2797 = vsub.s32 %v2794, %v2796
    %v2798 = vrot.slane %v2790, %v2797
    %v2800 = vunpack.c.l.s4 1983009808
    %v2801 = vunpack.c.0.s8 %v2800
    %v2802 = vlaneseq
    %v2803 = vshrl.u32 %v2802, 7
    %v2804 = vsub.s32 %v2801, %v2803
    %v2805 = vrot.slane %v2791, %v2804
    %v2806 = vcombine.low %v2798, %v2805
    %v2807 = vcombine.low %v2742, %v2744
    %v2808 = vcombine.low %v2746, %v2748
    %v2810 = vunpack.c.l.s4 1983009808
    %v2811 = vunpack.c.0.s8 %v2810
    %v2812 = vlaneseq
    %v2813 = vshrl.u32 %v2812, 7
    %v2814 = vsub.s32 %v2811, %v2813
    %v2815 = vrot.slane %v2807, %v2814
    %v2817 = vunpack.c.l.s4 1983009808
    %v2818 = vunpack.c.0.s8 %v2817
    %v2819 = vlaneseq
    %v2820 = vshrl.u32 %v2819, 7
    %v2821 = vsub.s32 %v2818, %v2820
    %v2822 = vrot.slane %v2808, %v2821
    %v2823 = vcombine.low %v2815, %v2822
    %v2824 = vcombine.low %v2750, %v2752
    %v2825 = vcombine.low %v2754, %v2756
    %v2827 = vunpack.c.l.s4 1983009808
    %v2828 = vunpack.c.0.s8 %v2827
    %v2829 = vlaneseq
    %v2830 = vshrl.u32 %v2829, 7
    %v2831 = vsub.s32 %v2828, %v2830
    %v2832 = vrot.slane %v2824, %v2831
    %v2834 = vunpack.c.l.s4 1983009808
    %v2835 = vunpack.c.0.s8 %v2834
    %v2836 = vlaneseq
    %v2837 = vshrl.u32 %v2836, 7
    %v2838 = vsub.s32 %v2835, %v2837
    %v2839 = vrot.slane %v2825, %v2838
    %v2840 = vcombine.low %v2832, %v2839
    %v2842 = vsel %vm1295, %v2789, 0
    %v2845 = vsel %vm1295, %v2806, 0
    %v2848 = vsel %vm1295, %v2823, 0
    %v2851 = vsel %vm1295, %v2840, 0
    %2853 = vmatprep.subr.bf16.mxu0 0
    %2854 = vmatpush1.bf16.msra.mxu0 0
    %2855 = vmatprep.subr.bf16.mxu0 0
    %2856 = vmatpush1.bf16.msra.mxu0 0
    %2857 = vmatprep.subr.bf16.mxu0 0
    %2858 = vmatpush1.bf16.msra.mxu0 0
    %2859 = vmatprep.subr.bf16.mxu0 0
    %2860 = vmatpush1.bf16.msra.mxu0 0
    %2861 = vmatprep.subr.bf16.mxu0 0
    %2862 = vmatpush1.bf16.msra.mxu0 0
    %2863 = vmatprep.subr.bf16.mxu0 0
    %2864 = vmatpush1.bf16.msra.mxu0 %v1310
    %2865 = vmatprep.subr.bf16.mxu0 0
    %2866 = vmatpush1.bf16.msra.mxu0 %v1291
    %2867 = vmatprep.subr.bf16.mxu0 0
    %2868 = vmatpush1.bf16.msra.mxu0 %v1290
    %2869 = vmatprep.subr.bf16.mxu0 0
    %2870 = vmatpush2.bf16.msra.mxu0 0
    %2871 = vmatprep.subr.bf16.mxu0 0
    %2872 = vmatpush2.bf16.msra.mxu0 0
    %2873 = vmatprep.subr.bf16.mxu0 0
    %2874 = vmatpush2.bf16.msra.mxu0 0
    %2875 = vmatprep.subr.bf16.mxu0 0
    %2876 = vmatpush2.bf16.msra.mxu0 0
    %2877 = vmatprep.subr.bf16.mxu0 0
    %2878 = vmatpush2.bf16.msra.mxu0 0
    %2879 = vmatprep.subr.bf16.mxu0 0
    %2880 = vmatpush2.bf16.msra.mxu0 0
    %2881 = vmatprep.subr.bf16.mxu0 0
    %2882 = vmatpush2.bf16.msra.mxu0 0
    %2883 = vmatprep.subr.bf16.mxu0 0
    %2884 = vmatpush2.bf16.msra.mxu0 0
    %2885 = vmatprep.mubr.bf16.mxu0 0
    %2886 = vmatmul.mubr.bf16.gmra.mxu0 %v2842
    %v2887 = vpop.f32.mrf.mxu0
    %v2888 = vadd.f32 %v1194, %v2887
    %v2889 = vpop.f32.mrf.mxu0
    %v2890 = vpop.f32.mrf.mxu0
    %v2891 = vadd.f32 %v1194, %v2890
    %v2892 = vpop.f32.mrf.mxu0
    %2893 = vmatprep.mubr.bf16.mxu0 0
    %2894 = vmatmul.mubr.bf16.gmra.mxu0 %v2845
    %v2895 = vpop.f32.mrf.mxu0
    %v2896 = vadd.f32 %v1194, %v2895
    %v2897 = vpop.f32.mrf.mxu0
    %v2898 = vpop.f32.mrf.mxu0
    %v2899 = vadd.f32 %v1194, %v2898
    %v2900 = vpop.f32.mrf.mxu0
    %2901 = vmatprep.mubr.bf16.mxu0 0
    %2902 = vmatmul.mubr.bf16.gmra.mxu0 %v2848
    %v2903 = vpop.f32.mrf.mxu0
    %v2904 = vadd.f32 %v1194, %v2903
    %v2905 = vpop.f32.mrf.mxu0
    %v2906 = vpop.f32.mrf.mxu0
    %v2907 = vadd.f32 %v1194, %v2906
    %v2908 = vpop.f32.mrf.mxu0
    %2909 = vmatprep.mubr.bf16.mxu0 0
    %2910 = vmatmul.mubr.bf16.gmra.mxu0 %v2851
    %v2911 = vpop.f32.mrf.mxu0
    %v2912 = vadd.f32 %v1194, %v2911
    %v2913 = vpop.f32.mrf.mxu0
    %v2914 = vpop.f32.mrf.mxu0
    %v2915 = vadd.f32 %v1194, %v2914
    %v2916 = vpop.f32.mrf.mxu0
    %2917 = vdwg.mxu0
    %v2918 = vmax.f32 %v2888, 0.0
    %v2919 = vmax.f32 %v2891, 0.0
    %v2920 = vmax.f32 %v2896, 0.0
    %v2921 = vmax.f32 %v2899, 0.0
    %v2922 = vmax.f32 %v2904, 0.0
    %v2923 = vmax.f32 %v2907, 0.0
    %v2924 = vmax.f32 %v2912, 0.0
    %v2925 = vmax.f32 %v2915, 0.0
    %s2926 = scalar_lea.vmem %s1, 16
    %v2927 = vld [vmem:[%s2926] sm:$0xf]
    %v2928 = vld [vmem:[%s2926 + $0x4] sm:$0xf]
    %v2929 = vld [vmem:[%s2926 + $0x8] sm:$0xf]
    %v2930 = vld [vmem:[%s2926 + $0xc] sm:$0xf]
    %v2931 = vld [vmem:[%s2926 + $0x20] sm:$0xf]
    %v2932 = vld [vmem:[%s2926 + $0x24] sm:$0xf]
    %v2933 = vld [vmem:[%s2926 + $0x28] sm:$0xf]
    %v2934 = vld [vmem:[%s2926 + $0x2c] sm:$0xf]
    %v2943 = vunpack.c.l.b16 %v2927
    %v2944 = vunpack.c.l.b16 %v2928
    %v2945 = vunpack.c.l.b16 %v2929
    %v2946 = vunpack.c.l.b16 %v2930
    %v2947 = vunpack.c.l.b16 %v2931
    %v2948 = vunpack.c.l.b16 %v2932
    %v2949 = vunpack.c.l.b16 %v2933
    %v2950 = vunpack.c.l.b16 %v2934
    %v2951 = vpack.c.b16 %v2944, %v2943
    %v2952 = vpack.c.b16 %v2946, %v2945
    %v2953 = vpack.c.b16 %v2948, %v2947
    %v2954 = vpack.c.b16 %v2950, %v2949
    %v2956 = vsel %vm959, %v2951, 0
    %v2959 = vsel %vm959, %v2952, 0
    %v2962 = vsel %vm959, %v2953, 0
    %v2965 = vsel %vm959, %v2954, 0
    %2967 = vmatprep.subr.bf16.mxu0 0
    %2968 = vmatpush1.bf16.msra.mxu0 0
    %2969 = vmatprep.subr.bf16.mxu0 0
    %2970 = vmatpush1.bf16.msra.mxu0 0
    %2971 = vmatprep.subr.bf16.mxu0 0
    %2972 = vmatpush1.bf16.msra.mxu0 0
    %2973 = vmatprep.subr.bf16.mxu0 0
    %2974 = vmatpush1.bf16.msra.mxu0 0
    %2975 = vmatprep.subr.bf16.mxu0 0
    %2976 = vmatpush1.bf16.msra.mxu0 0
    %2977 = vmatprep.subr.bf16.mxu0 0
    %2978 = vmatpush1.bf16.msra.mxu0 0
    %2979 = vmatprep.subr.bf16.mxu0 0
    %2980 = vmatpush1.bf16.msra.mxu0 0
    %2981 = vmatprep.subr.bf16.mxu0 0
    %2982 = vmatpush1.bf16.msra.mxu0 %v1433
    %2983 = vmatprep.subr.bf16.mxu0 0
    %2984 = vmatpush2.bf16.msra.mxu0 0
    %2985 = vmatprep.subr.bf16.mxu0 0
    %2986 = vmatpush2.bf16.msra.mxu0 0
    %2987 = vmatprep.subr.bf16.mxu0 0
    %2988 = vmatpush2.bf16.msra.mxu0 0
    %2989 = vmatprep.subr.bf16.mxu0 0
    %2990 = vmatpush2.bf16.msra.mxu0 0
    %2991 = vmatprep.subr.bf16.mxu0 0
    %2992 = vmatpush2.bf16.msra.mxu0 0
    %2993 = vmatprep.subr.bf16.mxu0 0
    %2994 = vmatpush2.bf16.msra.mxu0 0
    %2995 = vmatprep.subr.bf16.mxu0 0
    %2996 = vmatpush2.bf16.msra.mxu0 0
    %2997 = vmatprep.subr.bf16.mxu0 0
    %2998 = vmatpush2.bf16.msra.mxu0 0
    %2999 = vmatprep.mubr.bf16.mxu0 0
    %3000 = vmatmul.mubr.bf16.gmra.mxu0 %v2956
    %v3001 = vpop.f32.mrf.mxu0
    %v3002 = vadd.f32 %v1397, %v3001
    %v3003 = vpop.f32.mrf.mxu0
    %v3004 = vpop.f32.mrf.mxu0
    %v3005 = vadd.f32 %v1397, %v3004
    %v3006 = vpop.f32.mrf.mxu0
    %3007 = vmatprep.mubr.bf16.mxu0 0
    %3008 = vmatmul.mubr.bf16.gmra.mxu0 %v2959
    %v3009 = vpop.f32.mrf.mxu0
    %v3010 = vadd.f32 %v1397, %v3009
    %v3011 = vpop.f32.mrf.mxu0
    %v3012 = vpop.f32.mrf.mxu0
    %v3013 = vadd.f32 %v1397, %v3012
    %v3014 = vpop.f32.mrf.mxu0
    %3015 = vmatprep.mubr.bf16.mxu0 0
    %3016 = vmatmul.mubr.bf16.gmra.mxu0 %v2962
    %v3017 = vpop.f32.mrf.mxu0
    %v3018 = vadd.f32 %v1397, %v3017
    %v3019 = vpop.f32.mrf.mxu0
    %v3020 = vpop.f32.mrf.mxu0
    %v3021 = vadd.f32 %v1397, %v3020
    %v3022 = vpop.f32.mrf.mxu0
    %3023 = vmatprep.mubr.bf16.mxu0 0
    %3024 = vmatmul.mubr.bf16.gmra.mxu0 %v2965
    %v3025 = vpop.f32.mrf.mxu0
    %v3026 = vadd.f32 %v1397, %v3025
    %v3027 = vpop.f32.mrf.mxu0
    %v3028 = vpop.f32.mrf.mxu0
    %v3029 = vadd.f32 %v1397, %v3028
    %v3030 = vpop.f32.mrf.mxu0
    %3031 = vdwg.mxu0
    %v3032 = vmax.f32 %v3002, 0.0
    %v3033 = vmax.f32 %v3005, 0.0
    %v3034 = vmax.f32 %v3010, 0.0
    %v3035 = vmax.f32 %v3013, 0.0
    %v3036 = vmax.f32 %v3018, 0.0
    %v3037 = vmax.f32 %v3021, 0.0
    %v3038 = vmax.f32 %v3026, 0.0
    %v3039 = vmax.f32 %v3029, 0.0
    %v3040 = vadd.f32 %v2918, %v3032
    %v3041 = vadd.f32 %v2919, %v3033
    %v3042 = vadd.f32 %v2920, %v3034
    %v3043 = vadd.f32 %v2921, %v3035
    %v3044 = vadd.f32 %v2922, %v3036
    %v3045 = vadd.f32 %v2923, %v3037
    %v3046 = vadd.f32 %v2924, %v3038
    %v3047 = vadd.f32 %v2925, %v3039
    %v3048 = vpack.c.bf16 %v3041, %v3040
    %v3049 = vpack.c.bf16 %v3043, %v3042
    %v3050 = vpack.c.bf16 %v3045, %v3044
    %v3051 = vpack.c.bf16 %v3047, %v3046
    %v3056 = vcombine.high %v3048, %v3048
    %v3058 = vunpack.c.l.s4 1983009808
    %v3059 = vunpack.c.0.s8 %v3058
    %v3060 = vlaneseq
    %v3061 = vshrl.u32 %v3060, 7
    %v3062 = vsub.s32 %v3059, %v3061
    %v3063 = vrot.slane %v3048, %v3062
    %v3065 = vunpack.c.l.s4 1983009808
    %v3066 = vunpack.c.0.s8 %v3065
    %v3067 = vlaneseq
    %v3068 = vshrl.u32 %v3067, 7
    %v3069 = vsub.s32 %v3066, %v3068
    %v3070 = vrot.slane %v3056, %v3069
    %v3071 = vcombine.high %v3063, %v3063
    %v3072 = vcombine.high %v3070, %v3070
    %v3073 = vcombine.high %v3049, %v3049
    %v3075 = vunpack.c.l.s4 1983009808
    %v3076 = vunpack.c.0.s8 %v3075
    %v3077 = vlaneseq
    %v3078 = vshrl.u32 %v3077, 7
    %v3079 = vsub.s32 %v3076, %v3078
    %v3080 = vrot.slane %v3049, %v3079
    %v3082 = vunpack.c.l.s4 1983009808
    %v3083 = vunpack.c.0.s8 %v3082
    %v3084 = vlaneseq
    %v3085 = vshrl.u32 %v3084, 7
    %v3086 = vsub.s32 %v3083, %v3085
    %v3087 = vrot.slane %v3073, %v3086
    %v3088 = vcombine.high %v3080, %v3080
    %v3089 = vcombine.high %v3087, %v3087
    %v3090 = vcombine.high %v3050, %v3050
    %v3092 = vunpack.c.l.s4 1983009808
    %v3093 = vunpack.c.0.s8 %v3092
    %v3094 = vlaneseq
    %v3095 = vshrl.u32 %v3094, 7
    %v3096 = vsub.s32 %v3093, %v3095
    %v3097 = vrot.slane %v3050, %v3096
    %v3099 = vunpack.c.l.s4 1983009808
    %v3100 = vunpack.c.0.s8 %v3099
    %v3101 = vlaneseq
    %v3102 = vshrl.u32 %v3101, 7
    %v3103 = vsub.s32 %v3100, %v3102
    %v3104 = vrot.slane %v3090, %v3103
    %v3105 = vcombine.high %v3097, %v3097
    %v3106 = vcombine.high %v3104, %v3104
    %v3107 = vcombine.high %v3051, %v3051
    %v3109 = vunpack.c.l.s4 1983009808
    %v3110 = vunpack.c.0.s8 %v3109
    %v3111 = vlaneseq
    %v3112 = vshrl.u32 %v3111, 7
    %v3113 = vsub.s32 %v3110, %v3112
    %v3114 = vrot.slane %v3051, %v3113
    %v3116 = vunpack.c.l.s4 1983009808
    %v3117 = vunpack.c.0.s8 %v3116
    %v3118 = vlaneseq
    %v3119 = vshrl.u32 %v3118, 7
    %v3120 = vsub.s32 %v3117, %v3119
    %v3121 = vrot.slane %v3107, %v3120
    %v3122 = vcombine.high %v3114, %v3114
    %v3123 = vcombine.high %v3121, %v3121
    %v3125 = vunpack.c.l.s4 1983009808
    %v3126 = vunpack.c.0.s8 %v3125
    %v3127 = vlaneseq
    %v3128 = vshrl.u32 %v3127, 7
    %v3129 = vsub.s32 %v3126, %v3128
    %v3130 = vrot.slane %v3063, %v3129
    %v3132 = vunpack.c.l.s4 1983009808
    %v3133 = vunpack.c.0.s8 %v3132
    %v3134 = vlaneseq
    %v3135 = vshrl.u32 %v3134, 7
    %v3136 = vsub.s32 %v3133, %v3135
    %v3137 = vrot.slane %v3071, %v3136
    %v3139 = vunpack.c.l.s4 1983009808
    %v3140 = vunpack.c.0.s8 %v3139
    %v3141 = vlaneseq
    %v3142 = vshrl.u32 %v3141, 7
    %v3143 = vsub.s32 %v3140, %v3142
    %v3144 = vrot.slane %v3070, %v3143
    %v3146 = vunpack.c.l.s4 1983009808
    %v3147 = vunpack.c.0.s8 %v3146
    %v3148 = vlaneseq
    %v3149 = vshrl.u32 %v3148, 7
    %v3150 = vsub.s32 %v3147, %v3149
    %v3151 = vrot.slane %v3072, %v3150
    %v3153 = vunpack.c.l.s4 1983009808
    %v3154 = vunpack.c.0.s8 %v3153
    %v3155 = vlaneseq
    %v3156 = vshrl.u32 %v3155, 7
    %v3157 = vsub.s32 %v3154, %v3156
    %v3158 = vrot.slane %v3080, %v3157
    %v3160 = vunpack.c.l.s4 1983009808
    %v3161 = vunpack.c.0.s8 %v3160
    %v3162 = vlaneseq
    %v3163 = vshrl.u32 %v3162, 7
    %v3164 = vsub.s32 %v3161, %v3163
    %v3165 = vrot.slane %v3088, %v3164
    %v3167 = vunpack.c.l.s4 1983009808
    %v3168 = vunpack.c.0.s8 %v3167
    %v3169 = vlaneseq
    %v3170 = vshrl.u32 %v3169, 7
    %v3171 = vsub.s32 %v3168, %v3170
    %v3172 = vrot.slane %v3087, %v3171
    %v3174 = vunpack.c.l.s4 1983009808
    %v3175 = vunpack.c.0.s8 %v3174
    %v3176 = vlaneseq
    %v3177 = vshrl.u32 %v3176, 7
    %v3178 = vsub.s32 %v3175, %v3177
    %v3179 = vrot.slane %v3089, %v3178
    %v3181 = vunpack.c.l.s4 1983009808
    %v3182 = vunpack.c.0.s8 %v3181
    %v3183 = vlaneseq
    %v3184 = vshrl.u32 %v3183, 7
    %v3185 = vsub.s32 %v3182, %v3184
    %v3186 = vrot.slane %v3097, %v3185
    %v3188 = vunpack.c.l.s4 1983009808
    %v3189 = vunpack.c.0.s8 %v3188
    %v3190 = vlaneseq
    %v3191 = vshrl.u32 %v3190, 7
    %v3192 = vsub.s32 %v3189, %v3191
    %v3193 = vrot.slane %v3105, %v3192
    %v3195 = vunpack.c.l.s4 1983009808
    %v3196 = vunpack.c.0.s8 %v3195
    %v3197 = vlaneseq
    %v3198 = vshrl.u32 %v3197, 7
    %v3199 = vsub.s32 %v3196, %v3198
    %v3200 = vrot.slane %v3104, %v3199
    %v3202 = vunpack.c.l.s4 1983009808
    %v3203 = vunpack.c.0.s8 %v3202
    %v3204 = vlaneseq
    %v3205 = vshrl.u32 %v3204, 7
    %v3206 = vsub.s32 %v3203, %v3205
    %v3207 = vrot.slane %v3106, %v3206
    %v3209 = vunpack.c.l.s4 1983009808
    %v3210 = vunpack.c.0.s8 %v3209
    %v3211 = vlaneseq
    %v3212 = vshrl.u32 %v3211, 7
    %v3213 = vsub.s32 %v3210, %v3212
    %v3214 = vrot.slane %v3114, %v3213
    %v3216 = vunpack.c.l.s4 1983009808
    %v3217 = vunpack.c.0.s8 %v3216
    %v3218 = vlaneseq
    %v3219 = vshrl.u32 %v3218, 7
    %v3220 = vsub.s32 %v3217, %v3219
    %v3221 = vrot.slane %v3122, %v3220
    %v3223 = vunpack.c.l.s4 1983009808
    %v3224 = vunpack.c.0.s8 %v3223
    %v3225 = vlaneseq
    %v3226 = vshrl.u32 %v3225, 7
    %v3227 = vsub.s32 %v3224, %v3226
    %v3228 = vrot.slane %v3121, %v3227
    %v3230 = vunpack.c.l.s4 1983009808
    %v3231 = vunpack.c.0.s8 %v3230
    %v3232 = vlaneseq
    %v3233 = vshrl.u32 %v3232, 7
    %v3234 = vsub.s32 %v3231, %v3233
    %v3235 = vrot.slane %v3123, %v3234
    %v3237 = vshrl.u32 %v3130, 16
    %v3239 = vrot.slane %v3237, 7
    %v3240 = vshll.u32 %v3130, 16
    %v3242 = vor.u32 %v3239, %v3240
    %v3244 = vshrl.u32 %v3137, 16
    %v3246 = vrot.slane %v3244, 7
    %v3247 = vshll.u32 %v3137, 16
    %v3249 = vor.u32 %v3246, %v3247
    %v3251 = vshrl.u32 %v3144, 16
    %v3253 = vrot.slane %v3251, 7
    %v3254 = vshll.u32 %v3144, 16
    %v3256 = vor.u32 %v3253, %v3254
    %v3258 = vshrl.u32 %v3151, 16
    %v3260 = vrot.slane %v3258, 7
    %v3261 = vshll.u32 %v3151, 16
    %v3263 = vor.u32 %v3260, %v3261
    %v3265 = vshrl.u32 %v3158, 16
    %v3267 = vrot.slane %v3265, 7
    %v3268 = vshll.u32 %v3158, 16
    %v3270 = vor.u32 %v3267, %v3268
    %v3272 = vshrl.u32 %v3165, 16
    %v3274 = vrot.slane %v3272, 7
    %v3275 = vshll.u32 %v3165, 16
    %v3277 = vor.u32 %v3274, %v3275
    %v3279 = vshrl.u32 %v3172, 16
    %v3281 = vrot.slane %v3279, 7
    %v3282 = vshll.u32 %v3172, 16
    %v3284 = vor.u32 %v3281, %v3282
    %v3286 = vshrl.u32 %v3179, 16
    %v3288 = vrot.slane %v3286, 7
    %v3289 = vshll.u32 %v3179, 16
    %v3291 = vor.u32 %v3288, %v3289
    %v3293 = vshrl.u32 %v3186, 16
    %v3295 = vrot.slane %v3293, 7
    %v3296 = vshll.u32 %v3186, 16
    %v3298 = vor.u32 %v3295, %v3296
    %v3300 = vshrl.u32 %v3193, 16
    %v3302 = vrot.slane %v3300, 7
    %v3303 = vshll.u32 %v3193, 16
    %v3305 = vor.u32 %v3302, %v3303
    %v3307 = vshrl.u32 %v3200, 16
    %v3309 = vrot.slane %v3307, 7
    %v3310 = vshll.u32 %v3200, 16
    %v3312 = vor.u32 %v3309, %v3310
    %v3314 = vshrl.u32 %v3207, 16
    %v3316 = vrot.slane %v3314, 7
    %v3317 = vshll.u32 %v3207, 16
    %v3319 = vor.u32 %v3316, %v3317
    %v3321 = vshrl.u32 %v3214, 16
    %v3323 = vrot.slane %v3321, 7
    %v3324 = vshll.u32 %v3214, 16
    %v3326 = vor.u32 %v3323, %v3324
    %v3328 = vshrl.u32 %v3221, 16
    %v3330 = vrot.slane %v3328, 7
    %v3331 = vshll.u32 %v3221, 16
    %v3333 = vor.u32 %v3330, %v3331
    %v3335 = vshrl.u32 %v3228, 16
    %v3337 = vrot.slane %v3335, 7
    %v3338 = vshll.u32 %v3228, 16
    %v3340 = vor.u32 %v3337, %v3338
    %v3342 = vshrl.u32 %v3235, 16
    %v3344 = vrot.slane %v3342, 7
    %v3345 = vshll.u32 %v3235, 16
    %v3347 = vor.u32 %v3344, %v3345
    %s3364 = scalar_lea.vmem [#allocation2], 84
    %v3365 = vld [vmem:[%s3364] sm:$0x7]
    %v3366 = vsel %vm1834, %v3242, %v3365
    %3367 = vst [vmem:[%s3364] sm:$0x7] %v3366
    %v3368 = vld [vmem:[%s3364 + $0x4] sm:$0x7]
    %v3369 = vsel %vm1834, %v3249, %v3368
    %3370 = vst [vmem:[%s3364 + $0x4] sm:$0x7] %v3369
    %v3371 = vld [vmem:[%s3364 + $0x8] sm:$0x7]
    %v3372 = vsel %vm1834, %v3256, %v3371
    %3373 = vst [vmem:[%s3364 + $0x8] sm:$0x7] %v3372
    %v3374 = vld [vmem:[%s3364 + $0xc] sm:$0x7]
    %v3375 = vsel %vm1834, %v3263, %v3374
    %3376 = vst [vmem:[%s3364 + $0xc] sm:$0x7] %v3375
    %v3377 = vld [vmem:[%s3364 + $0x10] sm:$0x7]
    %v3378 = vsel %vm1834, %v3270, %v3377
    %3379 = vst [vmem:[%s3364 + $0x10] sm:$0x7] %v3378
    %v3380 = vld [vmem:[%s3364 + $0x14] sm:$0x7]
    %v3381 = vsel %vm1834, %v3277, %v3380
    %3382 = vst [vmem:[%s3364 + $0x14] sm:$0x7] %v3381
    %v3383 = vld [vmem:[%s3364 + $0x18] sm:$0x7]
    %v3384 = vsel %vm1834, %v3284, %v3383
    %3385 = vst [vmem:[%s3364 + $0x18] sm:$0x7] %v3384
    %v3386 = vld [vmem:[%s3364 + $0x1c] sm:$0x7]
    %v3387 = vsel %vm1834, %v3291, %v3386
    %3388 = vst [vmem:[%s3364 + $0x1c] sm:$0x7] %v3387
    %v3389 = vld [vmem:[%s3364 + $0x28] sm:$0x7]
    %v3390 = vsel %vm1834, %v3298, %v3389
    %3391 = vst [vmem:[%s3364 + $0x28] sm:$0x7] %v3390
    %v3392 = vld [vmem:[%s3364 + $0x2c] sm:$0x7]
    %v3393 = vsel %vm1834, %v3305, %v3392
    %3394 = vst [vmem:[%s3364 + $0x2c] sm:$0x7] %v3393
    %v3395 = vld [vmem:[%s3364 + $0x30] sm:$0x7]
    %v3396 = vsel %vm1834, %v3312, %v3395
    %3397 = vst [vmem:[%s3364 + $0x30] sm:$0x7] %v3396
    %v3398 = vld [vmem:[%s3364 + $0x34] sm:$0x7]
    %v3399 = vsel %vm1834, %v3319, %v3398
    %3400 = vst [vmem:[%s3364 + $0x34] sm:$0x7] %v3399
    %v3401 = vld [vmem:[%s3364 + $0x38] sm:$0x7]
    %v3402 = vsel %vm1834, %v3326, %v3401
    %3403 = vst [vmem:[%s3364 + $0x38] sm:$0x7] %v3402
    %v3404 = vld [vmem:[%s3364 + $0x3c] sm:$0x7]
    %v3405 = vsel %vm1834, %v3333, %v3404
    %3406 = vst [vmem:[%s3364 + $0x3c] sm:$0x7] %v3405
    %v3407 = vld [vmem:[%s3364 + $0x40] sm:$0x7]
    %v3408 = vsel %vm1834, %v3340, %v3407
    %3409 = vst [vmem:[%s3364 + $0x40] sm:$0x7] %v3408
    %v3410 = vld [vmem:[%s3364 + $0x44] sm:$0x7]
    %v3411 = vsel %vm1834, %v3347, %v3410
    %3412 = vst [vmem:[%s3364 + $0x44] sm:$0x7] %v3411
    %v3413 = vld [vmem:[#allocation2] sm:$0x7]
    %v3414 = vld [vmem:[#allocation2 + $0x4] sm:$0x7]
    %v3415 = vld [vmem:[#allocation2 + $0x8] sm:$0x7]
    %v3416 = vld [vmem:[#allocation2 + $0xc] sm:$0x7]
    %v3417 = vld [vmem:[#allocation2 + $0x10] sm:$0x7]
    %v3418 = vld [vmem:[#allocation2 + $0x14] sm:$0x7]
    %v3419 = vld [vmem:[#allocation2 + $0x18] sm:$0x7]
    %v3420 = vld [vmem:[#allocation2 + $0x1c] sm:$0x7]
    %v3421 = vld [vmem:[#allocation2 + $0x20] sm:$0x7]
    %v3422 = vld [vmem:[#allocation2 + $0x28] sm:$0x7]
    %v3423 = vld [vmem:[#allocation2 + $0x2c] sm:$0x7]
    %v3424 = vld [vmem:[#allocation2 + $0x30] sm:$0x7]
    %v3425 = vld [vmem:[#allocation2 + $0x34] sm:$0x7]
    %v3426 = vld [vmem:[#allocation2 + $0x38] sm:$0x7]
    %v3427 = vld [vmem:[#allocation2 + $0x3c] sm:$0x7]
    %v3428 = vld [vmem:[#allocation2 + $0x40] sm:$0x7]
    %v3429 = vld [vmem:[#allocation2 + $0x44] sm:$0x7]
    %v3430 = vld [vmem:[#allocation2 + $0x48] sm:$0x7]
    %s3431 = scalar_lea.vmem [#allocation2], 80
    %v3432 = vld [vmem:[%s3431] sm:$0x7]
    %v3433 = vld [vmem:[%s3431 + $0x4] sm:$0x7]
    %v3434 = vld [vmem:[%s3431 + $0x8] sm:$0x7]
    %v3435 = vld [vmem:[%s3431 + $0xc] sm:$0x7]
    %v3436 = vld [vmem:[%s3431 + $0x10] sm:$0x7]
    %v3437 = vld [vmem:[%s3431 + $0x14] sm:$0x7]
    %v3438 = vld [vmem:[%s3431 + $0x18] sm:$0x7]
    %v3439 = vld [vmem:[%s3431 + $0x1c] sm:$0x7]
    %v3440 = vld [vmem:[%s3431 + $0x20] sm:$0x7]
    %v3441 = vld [vmem:[%s3431 + $0x28] sm:$0x7]
    %v3442 = vld [vmem:[%s3431 + $0x2c] sm:$0x7]
    %v3443 = vld [vmem:[%s3431 + $0x30] sm:$0x7]
    %v3444 = vld [vmem:[%s3431 + $0x34] sm:$0x7]
    %v3445 = vld [vmem:[%s3431 + $0x38] sm:$0x7]
    %v3446 = vld [vmem:[%s3431 + $0x3c] sm:$0x7]
    %v3447 = vld [vmem:[%s3431 + $0x40] sm:$0x7]
    %v3448 = vld [vmem:[%s3431 + $0x44] sm:$0x7]
    %v3449 = vld [vmem:[%s3431 + $0x48] sm:$0x7]
    %v3458 = vunpack.c.l.b16 %v3413
    %v3459 = vunpack.c.l.b16 %v3415
    %v3460 = vunpack.c.l.b16 %v3417
    %v3461 = vunpack.c.l.b16 %v3419
    %v3462 = vunpack.c.l.b16 %v3422
    %v3463 = vunpack.c.l.b16 %v3424
    %v3464 = vunpack.c.l.b16 %v3426
    %v3465 = vunpack.c.l.b16 %v3428
    %v3466 = vpack.c.b16 %v3458, %v3458
    %v3467 = vpack.c.b16 %v3459, %v3459
    %v3468 = vpack.c.b16 %v3460, %v3460
    %v3469 = vpack.c.b16 %v3461, %v3461
    %v3470 = vpack.c.b16 %v3462, %v3462
    %v3471 = vpack.c.b16 %v3463, %v3463
    %v3472 = vpack.c.b16 %v3464, %v3464
    %v3473 = vpack.c.b16 %v3465, %v3465
    %v3475 = vshrl.u32 %v3466, 16
    %v3477 = vshll.u32 %v3466, 16
    %v3479 = vrot.slane %v3477, 1
    %v3480 = vor.u32 %v3475, %v3479
    %v3482 = vshrl.u32 %v3467, 16
    %v3484 = vshll.u32 %v3467, 16
    %v3486 = vrot.slane %v3484, 1
    %v3487 = vor.u32 %v3482, %v3486
    %v3489 = vshrl.u32 %v3468, 16
    %v3491 = vshll.u32 %v3468, 16
    %v3493 = vrot.slane %v3491, 1
    %v3494 = vor.u32 %v3489, %v3493
    %v3496 = vshrl.u32 %v3469, 16
    %v3498 = vshll.u32 %v3469, 16
    %v3500 = vrot.slane %v3498, 1
    %v3501 = vor.u32 %v3496, %v3500
    %v3503 = vshrl.u32 %v3470, 16
    %v3505 = vshll.u32 %v3470, 16
    %v3507 = vrot.slane %v3505, 1
    %v3508 = vor.u32 %v3503, %v3507
    %v3510 = vshrl.u32 %v3471, 16
    %v3512 = vshll.u32 %v3471, 16
    %v3514 = vrot.slane %v3512, 1
    %v3515 = vor.u32 %v3510, %v3514
    %v3517 = vshrl.u32 %v3472, 16
    %v3519 = vshll.u32 %v3472, 16
    %v3521 = vrot.slane %v3519, 1
    %v3522 = vor.u32 %v3517, %v3521
    %v3524 = vshrl.u32 %v3473, 16
    %v3526 = vshll.u32 %v3473, 16
    %v3528 = vrot.slane %v3526, 1
    %v3529 = vor.u32 %v3524, %v3528
    %3530 = vrot.lane.b32.xlu0 %v3480, 8
    %v3531 = vpop.permute.xlu0 %3530
    %3532 = vrot.lane.b32.xlu0 %v3487, 8
    %v3533 = vpop.permute.xlu0 %3532
    %3534 = vrot.lane.b32.xlu0 %v3494, 8
    %v3535 = vpop.permute.xlu0 %3534
    %3536 = vrot.lane.b32.xlu0 %v3501, 8
    %v3537 = vpop.permute.xlu0 %3536
    %3538 = vrot.lane.b32.xlu0 %v3508, 8
    %v3539 = vpop.permute.xlu0 %3538
    %3540 = vrot.lane.b32.xlu0 %v3515, 8
    %v3541 = vpop.permute.xlu0 %3540
    %3542 = vrot.lane.b32.xlu0 %v3522, 8
    %v3543 = vpop.permute.xlu0 %3542
    %3544 = vrot.lane.b32.xlu0 %v3529, 8
    %v3545 = vpop.permute.xlu0 %3544
    %v3554 = vunpack.c.l.b16 %v3432
    %v3555 = vunpack.c.l.b16 %v3434
    %v3556 = vunpack.c.l.b16 %v3436
    %v3557 = vunpack.c.l.b16 %v3438
    %v3558 = vunpack.c.l.b16 %v3441
    %v3559 = vunpack.c.l.b16 %v3443
    %v3560 = vunpack.c.l.b16 %v3445
    %v3561 = vunpack.c.l.b16 %v3447
    %v3562 = vpack.c.b16 %v3554, %v3554
    %v3563 = vpack.c.b16 %v3555, %v3555
    %v3564 = vpack.c.b16 %v3556, %v3556
    %v3565 = vpack.c.b16 %v3557, %v3557
    %v3566 = vpack.c.b16 %v3558, %v3558
    %v3567 = vpack.c.b16 %v3559, %v3559
    %v3568 = vpack.c.b16 %v3560, %v3560
    %v3569 = vpack.c.b16 %v3561, %v3561
    %v3571 = vshrl.u32 %v3562, 16
    %v3573 = vshll.u32 %v3562, 16
    %v3575 = vrot.slane %v3573, 1
    %v3576 = vor.u32 %v3571, %v3575
    %v3578 = vshrl.u32 %v3563, 16
    %v3580 = vshll.u32 %v3563, 16
    %v3582 = vrot.slane %v3580, 1
    %v3583 = vor.u32 %v3578, %v3582
    %v3585 = vshrl.u32 %v3564, 16
    %v3587 = vshll.u32 %v3564, 16
    %v3589 = vrot.slane %v3587, 1
    %v3590 = vor.u32 %v3585, %v3589
    %v3592 = vshrl.u32 %v3565, 16
    %v3594 = vshll.u32 %v3565, 16
    %v3596 = vrot.slane %v3594, 1
    %v3597 = vor.u32 %v3592, %v3596
    %v3599 = vshrl.u32 %v3566, 16
    %v3601 = vshll.u32 %v3566, 16
    %v3603 = vrot.slane %v3601, 1
    %v3604 = vor.u32 %v3599, %v3603
    %v3606 = vshrl.u32 %v3567, 16
    %v3608 = vshll.u32 %v3567, 16
    %v3610 = vrot.slane %v3608, 1
    %v3611 = vor.u32 %v3606, %v3610
    %v3613 = vshrl.u32 %v3568, 16
    %v3615 = vshll.u32 %v3568, 16
    %v3617 = vrot.slane %v3615, 1
    %v3618 = vor.u32 %v3613, %v3617
    %v3620 = vshrl.u32 %v3569, 16
    %v3622 = vshll.u32 %v3569, 16
    %v3624 = vrot.slane %v3622, 1
    %v3625 = vor.u32 %v3620, %v3624
    %3626 = vrot.lane.b32.xlu0 %v3576, 16
    %v3627 = vpop.permute.xlu0 %3626
    %3628 = vrot.lane.b32.xlu0 %v3583, 16
    %v3629 = vpop.permute.xlu0 %3628
    %3630 = vrot.lane.b32.xlu0 %v3590, 16
    %v3631 = vpop.permute.xlu0 %3630
    %3632 = vrot.lane.b32.xlu0 %v3597, 16
    %v3633 = vpop.permute.xlu0 %3632
    %3634 = vrot.lane.b32.xlu0 %v3604, 16
    %v3635 = vpop.permute.xlu0 %3634
    %3636 = vrot.lane.b32.xlu0 %v3611, 16
    %v3637 = vpop.permute.xlu0 %3636
    %3638 = vrot.lane.b32.xlu0 %v3618, 16
    %v3639 = vpop.permute.xlu0 %3638
    %3640 = vrot.lane.b32.xlu0 %v3625, 16
    %v3641 = vpop.permute.xlu0 %3640
    %v3650 = vunpack.c.l.b16 %v3433
    %v3651 = vunpack.c.l.b16 %v3435
    %v3652 = vunpack.c.l.b16 %v3437
    %v3653 = vunpack.c.l.b16 %v3439
    %v3654 = vunpack.c.l.b16 %v3442
    %v3655 = vunpack.c.l.b16 %v3444
    %v3656 = vunpack.c.l.b16 %v3446
    %v3657 = vunpack.c.l.b16 %v3448
    %v3658 = vpack.c.b16 %v3650, %v3650
    %v3659 = vpack.c.b16 %v3651, %v3651
    %v3660 = vpack.c.b16 %v3652, %v3652
    %v3661 = vpack.c.b16 %v3653, %v3653
    %v3662 = vpack.c.b16 %v3654, %v3654
    %v3663 = vpack.c.b16 %v3655, %v3655
    %v3664 = vpack.c.b16 %v3656, %v3656
    %v3665 = vpack.c.b16 %v3657, %v3657
    %3666 = vrot.lane.b32.xlu0 %v3658, 24
    %v3667 = vpop.permute.xlu0 %3666
    %3668 = vrot.lane.b32.xlu0 %v3659, 24
    %v3669 = vpop.permute.xlu0 %3668
    %3670 = vrot.lane.b32.xlu0 %v3660, 24
    %v3671 = vpop.permute.xlu0 %3670
    %3672 = vrot.lane.b32.xlu0 %v3661, 24
    %v3673 = vpop.permute.xlu0 %3672
    %3674 = vrot.lane.b32.xlu0 %v3662, 24
    %v3675 = vpop.permute.xlu0 %3674
    %3676 = vrot.lane.b32.xlu0 %v3663, 24
    %v3677 = vpop.permute.xlu0 %3676
    %3678 = vrot.lane.b32.xlu0 %v3664, 24
    %v3679 = vpop.permute.xlu0 %3678
    %3680 = vrot.lane.b32.xlu0 %v3665, 24
    %v3681 = vpop.permute.xlu0 %3680
    %v3690 = vunpack.c.l.b16 %v3414
    %v3691 = vunpack.c.l.b16 %v3416
    %v3692 = vunpack.c.l.b16 %v3418
    %v3693 = vunpack.c.l.b16 %v3420
    %v3694 = vunpack.c.l.b16 %v3423
    %v3695 = vunpack.c.l.b16 %v3425
    %v3696 = vunpack.c.l.b16 %v3427
    %v3697 = vunpack.c.l.b16 %v3429
    %v3698 = vpack.c.b16 %v3690, %v3690
    %v3699 = vpack.c.b16 %v3691, %v3691
    %v3700 = vpack.c.b16 %v3692, %v3692
    %v3701 = vpack.c.b16 %v3693, %v3693
    %v3702 = vpack.c.b16 %v3694, %v3694
    %v3703 = vpack.c.b16 %v3695, %v3695
    %v3704 = vpack.c.b16 %v3696, %v3696
    %v3705 = vpack.c.b16 %v3697, %v3697
    %v3707 = vshrl.u32 %v3698, 16
    %v3709 = vshll.u32 %v3698, 16
    %v3711 = vrot.slane %v3709, 1
    %v3712 = vor.u32 %v3707, %v3711
    %v3714 = vshrl.u32 %v3699, 16
    %v3716 = vshll.u32 %v3699, 16
    %v3718 = vrot.slane %v3716, 1
    %v3719 = vor.u32 %v3714, %v3718
    %v3721 = vshrl.u32 %v3700, 16
    %v3723 = vshll.u32 %v3700, 16
    %v3725 = vrot.slane %v3723, 1
    %v3726 = vor.u32 %v3721, %v3725
    %v3728 = vshrl.u32 %v3701, 16
    %v3730 = vshll.u32 %v3701, 16
    %v3732 = vrot.slane %v3730, 1
    %v3733 = vor.u32 %v3728, %v3732
    %v3735 = vshrl.u32 %v3702, 16
    %v3737 = vshll.u32 %v3702, 16
    %v3739 = vrot.slane %v3737, 1
    %v3740 = vor.u32 %v3735, %v3739
    %v3742 = vshrl.u32 %v3703, 16
    %v3744 = vshll.u32 %v3703, 16
    %v3746 = vrot.slane %v3744, 1
    %v3747 = vor.u32 %v3742, %v3746
    %v3749 = vshrl.u32 %v3704, 16
    %v3751 = vshll.u32 %v3704, 16
    %v3753 = vrot.slane %v3751, 1
    %v3754 = vor.u32 %v3749, %v3753
    %v3756 = vshrl.u32 %v3705, 16
    %v3758 = vshll.u32 %v3705, 16
    %v3760 = vrot.slane %v3758, 1
    %v3761 = vor.u32 %v3756, %v3760
    %3762 = vrot.lane.b32.xlu0 %v3712, 32
    %v3763 = vpop.permute.xlu0 %3762
    %3764 = vrot.lane.b32.xlu0 %v3719, 32
    %v3765 = vpop.permute.xlu0 %3764
    %3766 = vrot.lane.b32.xlu0 %v3726, 32
    %v3767 = vpop.permute.xlu0 %3766
    %3768 = vrot.lane.b32.xlu0 %v3733, 32
    %v3769 = vpop.permute.xlu0 %3768
    %3770 = vrot.lane.b32.xlu0 %v3740, 32
    %v3771 = vpop.permute.xlu0 %3770
    %3772 = vrot.lane.b32.xlu0 %v3747, 32
    %v3773 = vpop.permute.xlu0 %3772
    %3774 = vrot.lane.b32.xlu0 %v3754, 32
    %v3775 = vpop.permute.xlu0 %3774
    %3776 = vrot.lane.b32.xlu0 %v3761, 32
    %v3777 = vpop.permute.xlu0 %3776
    %v3779 = vshrl.u32 %v3658, 16
    %v3781 = vshll.u32 %v3658, 16
    %v3783 = vrot.slane %v3781, 1
    %v3784 = vor.u32 %v3779, %v3783
    %v3786 = vshrl.u32 %v3659, 16
    %v3788 = vshll.u32 %v3659, 16
    %v3790 = vrot.slane %v3788, 1
    %v3791 = vor.u32 %v3786, %v3790
    %v3793 = vshrl.u32 %v3660, 16
    %v3795 = vshll.u32 %v3660, 16
    %v3797 = vrot.slane %v3795, 1
    %v3798 = vor.u32 %v3793, %v3797
    %v3800 = vshrl.u32 %v3661, 16
    %v3802 = vshll.u32 %v3661, 16
    %v3804 = vrot.slane %v3802, 1
    %v3805 = vor.u32 %v3800, %v3804
    %v3807 = vshrl.u32 %v3662, 16
    %v3809 = vshll.u32 %v3662, 16
    %v3811 = vrot.slane %v3809, 1
    %v3812 = vor.u32 %v3807, %v3811
    %v3814 = vshrl.u32 %v3663, 16
    %v3816 = vshll.u32 %v3663, 16
    %v3818 = vrot.slane %v3816, 1
    %v3819 = vor.u32 %v3814, %v3818
    %v3821 = vshrl.u32 %v3664, 16
    %v3823 = vshll.u32 %v3664, 16
    %v3825 = vrot.slane %v3823, 1
    %v3826 = vor.u32 %v3821, %v3825
    %v3828 = vshrl.u32 %v3665, 16
    %v3830 = vshll.u32 %v3665, 16
    %v3832 = vrot.slane %v3830, 1
    %v3833 = vor.u32 %v3828, %v3832
    %3834 = vrot.lane.b32.xlu0 %v3784, 40
    %v3835 = vpop.permute.xlu0 %3834
    %3836 = vrot.lane.b32.xlu0 %v3791, 40
    %v3837 = vpop.permute.xlu0 %3836
    %3838 = vrot.lane.b32.xlu0 %v3798, 40
    %v3839 = vpop.permute.xlu0 %3838
    %3840 = vrot.lane.b32.xlu0 %v3805, 40
    %v3841 = vpop.permute.xlu0 %3840
    %3842 = vrot.lane.b32.xlu0 %v3812, 40
    %v3843 = vpop.permute.xlu0 %3842
    %3844 = vrot.lane.b32.xlu0 %v3819, 40
    %v3845 = vpop.permute.xlu0 %3844
    %3846 = vrot.lane.b32.xlu0 %v3826, 40
    %v3847 = vpop.permute.xlu0 %3846
    %3848 = vrot.lane.b32.xlu0 %v3833, 40
    %v3849 = vpop.permute.xlu0 %3848
    %v3852 = vunpack.c.l.b16 %v3440
    %v3853 = vunpack.c.l.b16 %v3449
    %v3854 = vpack.c.b16 %v3852, %v3852
    %v3855 = vpack.c.b16 %v3853, %v3853
    %3856 = vrot.lane.b32.xlu0 %v3563, 48
    %v3857 = vpop.permute.xlu0 %3856
    %3858 = vrot.lane.b32.xlu0 %v3564, 48
    %v3859 = vpop.permute.xlu0 %3858
    %3860 = vrot.lane.b32.xlu0 %v3565, 48
    %v3861 = vpop.permute.xlu0 %3860
    %3862 = vrot.lane.b32.xlu0 %v3854, 48
    %v3863 = vpop.permute.xlu0 %3862
    %3864 = vrot.lane.b32.xlu0 %v3567, 48
    %v3865 = vpop.permute.xlu0 %3864
    %3866 = vrot.lane.b32.xlu0 %v3568, 48
    %v3867 = vpop.permute.xlu0 %3866
    %3868 = vrot.lane.b32.xlu0 %v3569, 48
    %v3869 = vpop.permute.xlu0 %3868
    %3870 = vrot.lane.b32.xlu0 %v3855, 48
    %v3871 = vpop.permute.xlu0 %3870
    %v3874 = vunpack.c.l.b16 %v3421
    %v3875 = vunpack.c.l.b16 %v3430
    %v3876 = vpack.c.b16 %v3874, %v3874
    %v3877 = vpack.c.b16 %v3875, %v3875
    %v3879 = vshrl.u32 %v3876, 16
    %v3881 = vshll.u32 %v3876, 16
    %v3883 = vrot.slane %v3881, 1
    %v3884 = vor.u32 %v3879, %v3883
    %v3886 = vshrl.u32 %v3877, 16
    %v3888 = vshll.u32 %v3877, 16
    %v3890 = vrot.slane %v3888, 1
    %v3891 = vor.u32 %v3886, %v3890
    %3892 = vrot.lane.b32.xlu0 %v3487, 56
    %v3893 = vpop.permute.xlu0 %3892
    %3894 = vrot.lane.b32.xlu0 %v3494, 56
    %v3895 = vpop.permute.xlu0 %3894
    %3896 = vrot.lane.b32.xlu0 %v3501, 56
    %v3897 = vpop.permute.xlu0 %3896
    %3898 = vrot.lane.b32.xlu0 %v3884, 56
    %v3899 = vpop.permute.xlu0 %3898
    %3900 = vrot.lane.b32.xlu0 %v3515, 56
    %v3901 = vpop.permute.xlu0 %3900
    %3902 = vrot.lane.b32.xlu0 %v3522, 56
    %v3903 = vpop.permute.xlu0 %3902
    %3904 = vrot.lane.b32.xlu0 %v3529, 56
    %v3905 = vpop.permute.xlu0 %3904
    %3906 = vrot.lane.b32.xlu0 %v3891, 56
    %v3907 = vpop.permute.xlu0 %3906
    %v3909 = vshrl.u32 %v3854, 16
    %v3911 = vshll.u32 %v3854, 16
    %v3913 = vrot.slane %v3911, 1
    %v3914 = vor.u32 %v3909, %v3913
    %v3916 = vshrl.u32 %v3855, 16
    %v3918 = vshll.u32 %v3855, 16
    %v3920 = vrot.slane %v3918, 1
    %v3921 = vor.u32 %v3916, %v3920
    %3922 = vrot.lane.b32.xlu0 %v3583, 64
    %v3923 = vpop.permute.xlu0 %3922
    %3924 = vrot.lane.b32.xlu0 %v3590, 64
    %v3925 = vpop.permute.xlu0 %3924
    %3926 = vrot.lane.b32.xlu0 %v3597, 64
    %v3927 = vpop.permute.xlu0 %3926
    %3928 = vrot.lane.b32.xlu0 %v3914, 64
    %v3929 = vpop.permute.xlu0 %3928
    %3930 = vrot.lane.b32.xlu0 %v3611, 64
    %v3931 = vpop.permute.xlu0 %3930
    %3932 = vrot.lane.b32.xlu0 %v3618, 64
    %v3933 = vpop.permute.xlu0 %3932
    %3934 = vrot.lane.b32.xlu0 %v3625, 64
    %v3935 = vpop.permute.xlu0 %3934
    %3936 = vrot.lane.b32.xlu0 %v3921, 64
    %v3937 = vpop.permute.xlu0 %3936
    %v3940 = vsel %vm959, %v3432, %v3531
    %v3943 = vsel %vm959, %v3434, %v3533
    %v3946 = vsel %vm959, %v3436, %v3535
    %v3949 = vsel %vm959, %v3438, %v3537
    %v3952 = vsel %vm959, %v3441, %v3539
    %v3955 = vsel %vm959, %v3443, %v3541
    %v3958 = vsel %vm959, %v3445, %v3543
    %v3961 = vsel %vm959, %v3447, %v3545
    %v3963 = vsel %vm1025, %v3940, %v3627
    %v3965 = vsel %vm1025, %v3943, %v3629
    %v3967 = vsel %vm1025, %v3946, %v3631
    %v3969 = vsel %vm1025, %v3949, %v3633
    %v3971 = vsel %vm1025, %v3952, %v3635
    %v3973 = vsel %vm1025, %v3955, %v3637
    %v3975 = vsel %vm1025, %v3958, %v3639
    %v3977 = vsel %vm1025, %v3961, %v3641
    %v3979 = vsel %vm1091, %v3963, %v3667
    %v3981 = vsel %vm1091, %v3965, %v3669
    %v3983 = vsel %vm1091, %v3967, %v3671
    %v3985 = vsel %vm1091, %v3969, %v3673
    %v3987 = vsel %vm1091, %v3971, %v3675
    %v3989 = vsel %vm1091, %v3973, %v3677
    %v3991 = vsel %vm1091, %v3975, %v3679
    %v3993 = vsel %vm1091, %v3977, %v3681
    %v3995 = vsel %vm1157, %v3979, %v3763
    %v3997 = vsel %vm1157, %v3981, %v3765
    %v3999 = vsel %vm1157, %v3983, %v3767
    %v4001 = vsel %vm1157, %v3985, %v3769
    %v4003 = vsel %vm1157, %v3987, %v3771
    %v4005 = vsel %vm1157, %v3989, %v3773
    %v4007 = vsel %vm1157, %v3991, %v3775
    %v4009 = vsel %vm1157, %v3993, %v3777
    %vm4010 = vcmask 326656
    %v4012 = vsel %vm4010, %v3995, %v3835
    %v4014 = vsel %vm4010, %v3997, %v3837
    %v4016 = vsel %vm4010, %v3999, %v3839
    %v4018 = vsel %vm4010, %v4001, %v3841
    %v4020 = vsel %vm4010, %v4003, %v3843
    %v4022 = vsel %vm4010, %v4005, %v3845
    %v4024 = vsel %vm4010, %v4007, %v3847
    %v4026 = vsel %vm4010, %v4009, %v3849
    %vm4027 = vcmask 392192
    %v4029 = vsel %vm4027, %v4012, %v3857
    %v4031 = vsel %vm4027, %v4014, %v3859
    %v4033 = vsel %vm4027, %v4016, %v3861
    %v4035 = vsel %vm4027, %v4018, %v3863
    %v4037 = vsel %vm4027, %v4020, %v3865
    %v4039 = vsel %vm4027, %v4022, %v3867
    %v4041 = vsel %vm4027, %v4024, %v3869
    %v4043 = vsel %vm4027, %v4026, %v3871
    %vm4044 = vcmask 457728
    %v4046 = vsel %vm4044, %v4029, %v3893
    %v4048 = vsel %vm4044, %v4031, %v3895
    %v4050 = vsel %vm4044, %v4033, %v3897
    %v4052 = vsel %vm4044, %v4035, %v3899
    %v4054 = vsel %vm4044, %v4037, %v3901
    %v4056 = vsel %vm4044, %v4039, %v3903
    %v4058 = vsel %vm4044, %v4041, %v3905
    %v4060 = vsel %vm4044, %v4043, %v3907
    %vm4061 = vcmask 523264
    %v4063 = vsel %vm4061, %v4046, %v3923
    %v4065 = vsel %vm4061, %v4048, %v3925
    %v4067 = vsel %vm4061, %v4050, %v3927
    %v4069 = vsel %vm4061, %v4052, %v3929
    %v4071 = vsel %vm4061, %v4054, %v3931
    %v4073 = vsel %vm4061, %v4056, %v3933
    %v4075 = vsel %vm4061, %v4058, %v3935
    %v4077 = vsel %vm4061, %v4060, %v3937
    %v4079 = vlaneseq
    %v4080 = vshrl.u32 %v4079, 7
    %v4081 = vsub.s32 0, %v4080
    %v4082 = vrot.slane %v69, %v4081
    %v4092 = vcombine.low %v4063, %v4065
    %v4093 = vcombine.low %v4067, %v4069
    %v4095 = vunpack.c.l.s4 1983009808
    %v4096 = vunpack.c.0.s8 %v4095
    %v4097 = vlaneseq
    %v4098 = vshrl.u32 %v4097, 7
    %v4099 = vsub.s32 %v4096, %v4098
    %v4100 = vrot.slane %v4092, %v4099
    %v4102 = vunpack.c.l.s4 1983009808
    %v4103 = vunpack.c.0.s8 %v4102
    %v4104 = vlaneseq
    %v4105 = vshrl.u32 %v4104, 7
    %v4106 = vsub.s32 %v4103, %v4105
    %v4107 = vrot.slane %v4093, %v4106
    %v4108 = vcombine.low %v4100, %v4107
    %v4109 = vcombine.low %v4071, %v4073
    %v4110 = vcombine.low %v4075, %v4077
    %v4112 = vunpack.c.l.s4 1983009808
    %v4113 = vunpack.c.0.s8 %v4112
    %v4114 = vlaneseq
    %v4115 = vshrl.u32 %v4114, 7
    %v4116 = vsub.s32 %v4113, %v4115
    %v4117 = vrot.slane %v4109, %v4116
    %v4119 = vunpack.c.l.s4 1983009808
    %v4120 = vunpack.c.0.s8 %v4119
    %v4121 = vlaneseq
    %v4122 = vshrl.u32 %v4121, 7
    %v4123 = vsub.s32 %v4120, %v4122
    %v4124 = vrot.slane %v4110, %v4123
    %v4125 = vcombine.low %v4117, %v4124
    %v4135 = vunpack.c.l.b16 %v60
    %v4136 = vunpack.c.l.b16 %v61
    %v4137 = vunpack.c.l.b16 %v62
    %v4138 = vunpack.c.l.b16 %v63
    %v4139 = vunpack.c.l.b16 %v64
    %v4140 = vunpack.c.l.b16 %v65
    %v4141 = vunpack.c.l.b16 %v66
    %v4142 = vunpack.c.l.b16 %v67
    %v4143 = vunpack.c.l.b16 %v68
    %v4144 = vpack.c.b16 %v4136, %v4135
    %v4145 = vpack.c.b16 %v4138, %v4137
    %v4146 = vpack.c.b16 %v4140, %v4139
    %v4147 = vpack.c.b16 %v4142, %v4141
    %v4148 = vpack.c.b16 %v4143, %v4143
    %vm4153 = vcmask 588800
    %v4155 = vsel %vm4153, %v4108, 0
    %v4158 = vsel %vm4153, %v4125, 0
    %v4161 = vsel %vm1431, %v4148, 0
    %4163 = vmatprep.subr.bf16.mxu0 0
    %4164 = vmatpush1.bf16.msra.mxu0 0
    %4165 = vmatprep.subr.bf16.mxu0 0
    %4166 = vmatpush1.bf16.msra.mxu0 0
    %4167 = vmatprep.subr.bf16.mxu0 0
    %4168 = vmatpush1.bf16.msra.mxu0 0
    %4169 = vmatprep.subr.bf16.mxu0 0
    %4170 = vmatpush1.bf16.msra.mxu0 %v4161
    %4171 = vmatprep.subr.bf16.mxu0 0
    %4172 = vmatpush1.bf16.msra.mxu0 %v4147
    %4173 = vmatprep.subr.bf16.mxu0 0
    %4174 = vmatpush1.bf16.msra.mxu0 %v4146
    %4175 = vmatprep.subr.bf16.mxu0 0
    %4176 = vmatpush1.bf16.msra.mxu0 %v4145
    %4177 = vmatprep.subr.bf16.mxu0 0
    %4178 = vmatpush1.bf16.msra.mxu0 %v4144
    %4179 = vmatprep.subr.bf16.mxu0 0
    %4180 = vmatpush2.bf16.msra.mxu0 0
    %4181 = vmatprep.subr.bf16.mxu0 0
    %4182 = vmatpush2.bf16.msra.mxu0 0
    %4183 = vmatprep.subr.bf16.mxu0 0
    %4184 = vmatpush2.bf16.msra.mxu0 0
    %4185 = vmatprep.subr.bf16.mxu0 0
    %4186 = vmatpush2.bf16.msra.mxu0 0
    %4187 = vmatprep.subr.bf16.mxu0 0
    %4188 = vmatpush2.bf16.msra.mxu0 0
    %4189 = vmatprep.subr.bf16.mxu0 0
    %4190 = vmatpush2.bf16.msra.mxu0 0
    %4191 = vmatprep.subr.bf16.mxu0 0
    %4192 = vmatpush2.bf16.msra.mxu0 0
    %4193 = vmatprep.subr.bf16.mxu0 0
    %4194 = vmatpush2.bf16.msra.mxu0 0
    %4195 = vmatprep.mubr.bf16.mxu0 0
    %4196 = vmatmul.mubr.bf16.gmra.mxu0 %v4155
    %v4197 = vpop.f32.mrf.mxu0
    %v4198 = vadd.f32 %v4082, %v4197
    %v4199 = vpop.f32.mrf.mxu0
    %v4200 = vpop.f32.mrf.mxu0
    %v4201 = vadd.f32 %v4082, %v4200
    %v4202 = vpop.f32.mrf.mxu0
    %4203 = vmatprep.mubr.bf16.mxu0 0
    %4204 = vmatmul.mubr.bf16.gmra.mxu0 %v4158
    %v4205 = vpop.f32.mrf.mxu0
    %v4206 = vadd.f32 %v4082, %v4205
    %v4207 = vpop.f32.mrf.mxu0
    %v4208 = vpop.f32.mrf.mxu0
    %v4209 = vadd.f32 %v4082, %v4208
    %v4210 = vpop.f32.mrf.mxu0
    %4211 = vdwg.mxu0
    %v4212 = vmax.f32 %v4198, 0.0
    %v4213 = vmax.f32 %v4201, 0.0
    %v4214 = vmax.f32 %v4206, 0.0
    %v4215 = vmax.f32 %v4209, 0.0
    %v4216 = vld [vmem:[%s2] sm:$0xf]
    %v4217 = vld [vmem:[%s2 + $0x4] sm:$0xf]
    %v4218 = vld [vmem:[%s2 + $0x8] sm:$0xf]
    %v4219 = vld [vmem:[%s2 + $0xc] sm:$0xf]
    %v4221 = vlaneseq
    %v4222 = vshrl.u32 %v4221, 7
    %v4223 = vsub.s32 0, %v4222
    %v4224 = vrot.slane %v72, %v4223
    %v4230 = vunpack.c.l.b16 %v4216
    %v4231 = vunpack.c.l.b16 %v4217
    %v4232 = vunpack.c.l.b16 %v4218
    %v4233 = vunpack.c.l.b16 %v4219
    %v4234 = vpack.c.b16 %v4231, %v4230
    %v4235 = vpack.c.b16 %v4233, %v4232
    %v4238 = vunpack.c.l.b16 %v70
    %v4239 = vunpack.c.l.b16 %v71
    %v4240 = vpack.c.b16 %v4239, %v4238
    %v4243 = vsel %vm1025, %v4234, 0
    %v4246 = vsel %vm1025, %v4235, 0
    %4248 = vmatprep.subr.bf16.mxu0 0
    %4249 = vmatpush1.bf16.msra.mxu0 0
    %4250 = vmatprep.subr.bf16.mxu0 0
    %4251 = vmatpush1.bf16.msra.mxu0 0
    %4252 = vmatprep.subr.bf16.mxu0 0
    %4253 = vmatpush1.bf16.msra.mxu0 0
    %4254 = vmatprep.subr.bf16.mxu0 0
    %4255 = vmatpush1.bf16.msra.mxu0 0
    %4256 = vmatprep.subr.bf16.mxu0 0
    %4257 = vmatpush1.bf16.msra.mxu0 0
    %4258 = vmatprep.subr.bf16.mxu0 0
    %4259 = vmatpush1.bf16.msra.mxu0 0
    %4260 = vmatprep.subr.bf16.mxu0 0
    %4261 = vmatpush1.bf16.msra.mxu0 0
    %4262 = vmatprep.subr.bf16.mxu0 0
    %4263 = vmatpush1.bf16.msra.mxu0 %v4240
    %4264 = vmatprep.subr.bf16.mxu0 0
    %4265 = vmatpush2.bf16.msra.mxu0 0
    %4266 = vmatprep.subr.bf16.mxu0 0
    %4267 = vmatpush2.bf16.msra.mxu0 0
    %4268 = vmatprep.subr.bf16.mxu0 0
    %4269 = vmatpush2.bf16.msra.mxu0 0
    %4270 = vmatprep.subr.bf16.mxu0 0
    %4271 = vmatpush2.bf16.msra.mxu0 0
    %4272 = vmatprep.subr.bf16.mxu0 0
    %4273 = vmatpush2.bf16.msra.mxu0 0
    %4274 = vmatprep.subr.bf16.mxu0 0
    %4275 = vmatpush2.bf16.msra.mxu0 0
    %4276 = vmatprep.subr.bf16.mxu0 0
    %4277 = vmatpush2.bf16.msra.mxu0 0
    %4278 = vmatprep.subr.bf16.mxu0 0
    %4279 = vmatpush2.bf16.msra.mxu0 0
    %4280 = vmatprep.mubr.bf16.mxu0 0
    %4281 = vmatmul.mubr.bf16.gmra.mxu0 %v4243
    %v4282 = vpop.f32.mrf.mxu0
    %v4283 = vadd.f32 %v4224, %v4282
    %v4284 = vpop.f32.mrf.mxu0
    %v4285 = vpop.f32.mrf.mxu0
    %v4286 = vadd.f32 %v4224, %v4285
    %v4287 = vpop.f32.mrf.mxu0
    %4288 = vmatprep.mubr.bf16.mxu0 0
    %4289 = vmatmul.mubr.bf16.gmra.mxu0 %v4246
    %v4290 = vpop.f32.mrf.mxu0
    %v4291 = vadd.f32 %v4224, %v4290
    %v4292 = vpop.f32.mrf.mxu0
    %v4293 = vpop.f32.mrf.mxu0
    %v4294 = vadd.f32 %v4224, %v4293
    %v4295 = vpop.f32.mrf.mxu0
    %4296 = vdwg.mxu0
    %v4297 = vmax.f32 %v4283, 0.0
    %v4298 = vmax.f32 %v4286, 0.0
    %v4299 = vmax.f32 %v4291, 0.0
    %v4300 = vmax.f32 %v4294, 0.0
    %v4301 = vadd.f32 %v4212, %v4297
    %v4302 = vadd.f32 %v4213, %v4298
    %v4303 = vadd.f32 %v4214, %v4299
    %v4304 = vadd.f32 %v4215, %v4300
    %v4305 = vpack.c.bf16 %v4302, %v4301
    %v4306 = vpack.c.bf16 %v4304, %v4303
    %v4309 = vcombine.high %v4305, %v4305
    %v4311 = vunpack.c.l.s4 1983009808
    %v4312 = vunpack.c.0.s8 %v4311
    %v4313 = vlaneseq
    %v4314 = vshrl.u32 %v4313, 7
    %v4315 = vsub.s32 %v4312, %v4314
    %v4316 = vrot.slane %v4305, %v4315
    %v4318 = vunpack.c.l.s4 1983009808
    %v4319 = vunpack.c.0.s8 %v4318
    %v4320 = vlaneseq
    %v4321 = vshrl.u32 %v4320, 7
    %v4322 = vsub.s32 %v4319, %v4321
    %v4323 = vrot.slane %v4309, %v4322
    %v4324 = vcombine.high %v4316, %v4316
    %v4325 = vcombine.high %v4323, %v4323
    %v4326 = vcombine.high %v4306, %v4306
    %v4328 = vunpack.c.l.s4 1983009808
    %v4329 = vunpack.c.0.s8 %v4328
    %v4330 = vlaneseq
    %v4331 = vshrl.u32 %v4330, 7
    %v4332 = vsub.s32 %v4329, %v4331
    %v4333 = vrot.slane %v4306, %v4332
    %v4335 = vunpack.c.l.s4 1983009808
    %v4336 = vunpack.c.0.s8 %v4335
    %v4337 = vlaneseq
    %v4338 = vshrl.u32 %v4337, 7
    %v4339 = vsub.s32 %v4336, %v4338
    %v4340 = vrot.slane %v4326, %v4339
    %v4341 = vcombine.high %v4333, %v4333
    %v4342 = vcombine.high %v4340, %v4340
    %vm4343 = vcmask 124928
    %4344 = vst.msk [vmem:[#allocation3] sm:$0x7] %vm4343, 0
    %4345 = vst.msk [vmem:[#allocation3 + $0x4] sm:$0x7] %vm4343, 0
    %4346 = vst.msk [vmem:[#allocation3 + $0x8] sm:$0x7] %vm4343, 0
    %4347 = vst.msk [vmem:[#allocation3 + $0xc] sm:$0x7] %vm4343, 0
    %4348 = vst.msk [vmem:[#allocation3 + $0x10] sm:$0x7] %vm4343, 0
    %4349 = vst.msk [vmem:[#allocation3 + $0x14] sm:$0x7] %vm4343, 0
    %4350 = vst.msk [vmem:[#allocation3 + $0x18] sm:$0x7] %vm4343, 0
    %4351 = vst.msk [vmem:[#allocation3 + $0x1c] sm:$0x7] %vm4343, 0
    %4352 = vst.msk [vmem:[#allocation3 + $0x20] sm:$0x7] %vm4343, 0
    %4353 = vst.msk [vmem:[#allocation3 + $0x24] sm:$0x7] %vm4343, 0
    %4354 = vst.msk [vmem:[#allocation3 + $0x28] sm:$0x7] %vm4343, 0
    %4355 = vst.msk [vmem:[#allocation3 + $0x2c] sm:$0x7] %vm4343, 0
    %v4357 = vunpack.c.l.s4 1983009808
    %v4358 = vunpack.c.0.s8 %v4357
    %v4359 = vlaneseq
    %v4360 = vshrl.u32 %v4359, 7
    %v4361 = vsub.s32 %v4358, %v4360
    %v4362 = vrot.slane %v4316, %v4361
    %v4364 = vunpack.c.l.s4 1983009808
    %v4365 = vunpack.c.0.s8 %v4364
    %v4366 = vlaneseq
    %v4367 = vshrl.u32 %v4366, 7
    %v4368 = vsub.s32 %v4365, %v4367
    %v4369 = vrot.slane %v4324, %v4368
    %v4371 = vunpack.c.l.s4 1983009808
    %v4372 = vunpack.c.0.s8 %v4371
    %v4373 = vlaneseq
    %v4374 = vshrl.u32 %v4373, 7
    %v4375 = vsub.s32 %v4372, %v4374
    %v4376 = vrot.slane %v4323, %v4375
    %v4378 = vunpack.c.l.s4 1983009808
    %v4379 = vunpack.c.0.s8 %v4378
    %v4380 = vlaneseq
    %v4381 = vshrl.u32 %v4380, 7
    %v4382 = vsub.s32 %v4379, %v4381
    %v4383 = vrot.slane %v4325, %v4382
    %v4385 = vunpack.c.l.s4 1983009808
    %v4386 = vunpack.c.0.s8 %v4385
    %v4387 = vlaneseq
    %v4388 = vshrl.u32 %v4387, 7
    %v4389 = vsub.s32 %v4386, %v4388
    %v4390 = vrot.slane %v4333, %v4389
    %v4392 = vunpack.c.l.s4 1983009808
    %v4393 = vunpack.c.0.s8 %v4392
    %v4394 = vlaneseq
    %v4395 = vshrl.u32 %v4394, 7
    %v4396 = vsub.s32 %v4393, %v4395
    %v4397 = vrot.slane %v4341, %v4396
    %v4399 = vunpack.c.l.s4 1983009808
    %v4400 = vunpack.c.0.s8 %v4399
    %v4401 = vlaneseq
    %v4402 = vshrl.u32 %v4401, 7
    %v4403 = vsub.s32 %v4400, %v4402
    %v4404 = vrot.slane %v4340, %v4403
    %v4406 = vunpack.c.l.s4 1983009808
    %v4407 = vunpack.c.0.s8 %v4406
    %v4408 = vlaneseq
    %v4409 = vshrl.u32 %v4408, 7
    %v4410 = vsub.s32 %v4407, %v4409
    %v4411 = vrot.slane %v4342, %v4410
    %v4413 = vshrl.u32 %v4362, 16
    %v4415 = vrot.slane %v4413, 7
    %v4416 = vshll.u32 %v4362, 16
    %v4418 = vor.u32 %v4415, %v4416
    %v4420 = vshrl.u32 %v4369, 16
    %v4422 = vrot.slane %v4420, 7
    %v4423 = vshll.u32 %v4369, 16
    %v4425 = vor.u32 %v4422, %v4423
    %v4427 = vshrl.u32 %v4376, 16
    %v4429 = vrot.slane %v4427, 7
    %v4430 = vshll.u32 %v4376, 16
    %v4432 = vor.u32 %v4429, %v4430
    %v4434 = vshrl.u32 %v4383, 16
    %v4436 = vrot.slane %v4434, 7
    %v4437 = vshll.u32 %v4383, 16
    %v4439 = vor.u32 %v4436, %v4437
    %v4441 = vshrl.u32 %v4390, 16
    %v4443 = vrot.slane %v4441, 7
    %v4444 = vshll.u32 %v4390, 16
    %v4446 = vor.u32 %v4443, %v4444
    %v4448 = vshrl.u32 %v4397, 16
    %v4450 = vrot.slane %v4448, 7
    %v4451 = vshll.u32 %v4397, 16
    %v4453 = vor.u32 %v4450, %v4451
    %v4455 = vshrl.u32 %v4404, 16
    %v4457 = vrot.slane %v4455, 7
    %v4458 = vshll.u32 %v4404, 16
    %v4460 = vor.u32 %v4457, %v4458
    %v4462 = vshrl.u32 %v4411, 16
    %v4464 = vrot.slane %v4462, 7
    %v4465 = vshll.u32 %v4411, 16
    %v4467 = vor.u32 %v4464, %v4465
    %s4476 = scalar_lea.vmem [#allocation3], 4
    %vm4477 = vcmask 124928
    %vm4478 = vmand %vm4477, %vm1833
    %v4479 = vld [vmem:[%s4476] sm:$0x7]
    %v4480 = vsel %vm4478, %v4418, %v4479
    %4481 = vst [vmem:[%s4476] sm:$0x7] %v4480
    %v4482 = vld [vmem:[%s4476 + $0x4] sm:$0x7]
    %v4483 = vsel %vm4478, %v4425, %v4482
    %4484 = vst [vmem:[%s4476 + $0x4] sm:$0x7] %v4483
    %v4485 = vld [vmem:[%s4476 + $0x8] sm:$0x7]
    %v4486 = vsel %vm4478, %v4432, %v4485
    %4487 = vst [vmem:[%s4476 + $0x8] sm:$0x7] %v4486
    %v4488 = vld [vmem:[%s4476 + $0xc] sm:$0x7]
    %v4489 = vsel %vm4478, %v4439, %v4488
    %4490 = vst [vmem:[%s4476 + $0xc] sm:$0x7] %v4489
    %v4491 = vld [vmem:[%s4476 + $0x18] sm:$0x7]
    %v4492 = vsel %vm4478, %v4446, %v4491
    %4493 = vst [vmem:[%s4476 + $0x18] sm:$0x7] %v4492
    %v4494 = vld [vmem:[%s4476 + $0x1c] sm:$0x7]
    %v4495 = vsel %vm4478, %v4453, %v4494
    %4496 = vst [vmem:[%s4476 + $0x1c] sm:$0x7] %v4495
    %v4497 = vld [vmem:[%s4476 + $0x20] sm:$0x7]
    %v4498 = vsel %vm4478, %v4460, %v4497
    %4499 = vst [vmem:[%s4476 + $0x20] sm:$0x7] %v4498
    %v4500 = vld [vmem:[%s4476 + $0x24] sm:$0x7]
    %v4501 = vsel %vm4478, %v4467, %v4500
    %4502 = vst [vmem:[%s4476 + $0x24] sm:$0x7] %v4501
    %v4503 = vld [vmem:[#allocation3] sm:$0x3]
    %v4504 = vld [vmem:[#allocation3 + $0x4] sm:$0x3]
    %v4505 = vld [vmem:[#allocation3 + $0x8] sm:$0x3]
    %v4506 = vld [vmem:[#allocation3 + $0xc] sm:$0x3]
    %v4507 = vld [vmem:[#allocation3 + $0x18] sm:$0x3]
    %v4508 = vld [vmem:[#allocation3 + $0x1c] sm:$0x3]
    %v4509 = vld [vmem:[#allocation3 + $0x20] sm:$0x3]
    %v4510 = vld [vmem:[#allocation3 + $0x24] sm:$0x3]
    %v4511 = vld [vmem:[#allocation3] sm:$0x7]
    %v4512 = vld [vmem:[#allocation3 + $0x4] sm:$0x7]
    %v4513 = vld [vmem:[#allocation3 + $0x8] sm:$0x7]
    %v4514 = vld [vmem:[#allocation3 + $0xc] sm:$0x7]
    %v4515 = vld [vmem:[#allocation3 + $0x18] sm:$0x7]
    %v4516 = vld [vmem:[#allocation3 + $0x1c] sm:$0x7]
    %v4517 = vld [vmem:[#allocation3 + $0x20] sm:$0x7]
    %v4518 = vld [vmem:[#allocation3 + $0x24] sm:$0x7]
    %v4519 = vld [vmem:[#allocation3] sm:$0x6]
    %v4520 = vld [vmem:[#allocation3 + $0x4] sm:$0x6]
    %v4521 = vld [vmem:[#allocation3 + $0x8] sm:$0x6]
    %v4522 = vld [vmem:[#allocation3 + $0xc] sm:$0x6]
    %v4523 = vld [vmem:[#allocation3 + $0x18] sm:$0x6]
    %v4524 = vld [vmem:[#allocation3 + $0x1c] sm:$0x6]
    %v4525 = vld [vmem:[#allocation3 + $0x20] sm:$0x6]
    %v4526 = vld [vmem:[#allocation3 + $0x24] sm:$0x6]
    %v4527 = vld [vmem:[%s4476] sm:$0x3]
    %v4528 = vld [vmem:[%s4476 + $0x4] sm:$0x3]
    %v4529 = vld [vmem:[%s4476 + $0x8] sm:$0x3]
    %v4530 = vld [vmem:[%s4476 + $0xc] sm:$0x3]
    %v4531 = vld [vmem:[%s4476 + $0x18] sm:$0x3]
    %v4532 = vld [vmem:[%s4476 + $0x1c] sm:$0x3]
    %v4533 = vld [vmem:[%s4476 + $0x20] sm:$0x3]
    %v4534 = vld [vmem:[%s4476 + $0x24] sm:$0x3]
    %v4535 = vld [vmem:[%s4476] sm:$0x7]
    %v4536 = vld [vmem:[%s4476 + $0x4] sm:$0x7]
    %v4537 = vld [vmem:[%s4476 + $0x8] sm:$0x7]
    %v4538 = vld [vmem:[%s4476 + $0xc] sm:$0x7]
    %v4539 = vld [vmem:[%s4476 + $0x18] sm:$0x7]
    %v4540 = vld [vmem:[%s4476 + $0x1c] sm:$0x7]
    %v4541 = vld [vmem:[%s4476 + $0x20] sm:$0x7]
    %v4542 = vld [vmem:[%s4476 + $0x24] sm:$0x7]
    %v4543 = vld [vmem:[%s4476] sm:$0x6]
    %v4544 = vld [vmem:[%s4476 + $0x4] sm:$0x6]
    %v4545 = vld [vmem:[%s4476 + $0x8] sm:$0x6]
    %v4546 = vld [vmem:[%s4476 + $0xc] sm:$0x6]
    %v4547 = vld [vmem:[%s4476 + $0x18] sm:$0x6]
    %v4548 = vld [vmem:[%s4476 + $0x1c] sm:$0x6]
    %v4549 = vld [vmem:[%s4476 + $0x20] sm:$0x6]
    %v4550 = vld [vmem:[%s4476 + $0x24] sm:$0x6]
    %s4551 = scalar_lea.vmem [#allocation3], 8
    %v4552 = vld [vmem:[%s4551] sm:$0x3]
    %v4553 = vld [vmem:[%s4551 + $0x4] sm:$0x3]
    %v4554 = vld [vmem:[%s4551 + $0x8] sm:$0x3]
    %v4555 = vld [vmem:[%s4551 + $0xc] sm:$0x3]
    %v4556 = vld [vmem:[%s4551 + $0x18] sm:$0x3]
    %v4557 = vld [vmem:[%s4551 + $0x1c] sm:$0x3]
    %v4558 = vld [vmem:[%s4551 + $0x20] sm:$0x3]
    %v4559 = vld [vmem:[%s4551 + $0x24] sm:$0x3]
    %v4560 = vld [vmem:[%s4551] sm:$0x7]
    %v4561 = vld [vmem:[%s4551 + $0x4] sm:$0x7]
    %v4562 = vld [vmem:[%s4551 + $0x8] sm:$0x7]
    %v4563 = vld [vmem:[%s4551 + $0xc] sm:$0x7]
    %v4564 = vld [vmem:[%s4551 + $0x18] sm:$0x7]
    %v4565 = vld [vmem:[%s4551 + $0x1c] sm:$0x7]
    %v4566 = vld [vmem:[%s4551 + $0x20] sm:$0x7]
    %v4567 = vld [vmem:[%s4551 + $0x24] sm:$0x7]
    %v4568 = vld [vmem:[%s4551] sm:$0x6]
    %v4569 = vld [vmem:[%s4551 + $0x4] sm:$0x6]
    %v4570 = vld [vmem:[%s4551 + $0x8] sm:$0x6]
    %v4571 = vld [vmem:[%s4551 + $0xc] sm:$0x6]
    %v4572 = vld [vmem:[%s4551 + $0x18] sm:$0x6]
    %v4573 = vld [vmem:[%s4551 + $0x1c] sm:$0x6]
    %v4574 = vld [vmem:[%s4551 + $0x20] sm:$0x6]
    %v4575 = vld [vmem:[%s4551 + $0x24] sm:$0x6]
    %v4584 = vunpack.c.l.b16 %v4511
    %v4585 = vunpack.c.l.b16 %v4512
    %v4586 = vunpack.c.l.b16 %v4513
    %v4587 = vunpack.c.l.b16 %v4514
    %v4588 = vunpack.c.l.b16 %v4515
    %v4589 = vunpack.c.l.b16 %v4516
    %v4590 = vunpack.c.l.b16 %v4517
    %v4591 = vunpack.c.l.b16 %v4518
    %v4592 = vpack.c.b16 %v4584, %v4584
    %v4593 = vpack.c.b16 %v4585, %v4585
    %v4594 = vpack.c.b16 %v4586, %v4586
    %v4595 = vpack.c.b16 %v4587, %v4587
    %v4596 = vpack.c.b16 %v4588, %v4588
    %v4597 = vpack.c.b16 %v4589, %v4589
    %v4598 = vpack.c.b16 %v4590, %v4590
    %v4599 = vpack.c.b16 %v4591, %v4591
    %v4601 = vshrl.u32 %v4592, 16
    %v4603 = vshll.u32 %v4592, 16
    %v4605 = vrot.slane %v4603, 1
    %v4606 = vor.u32 %v4601, %v4605
    %v4608 = vshrl.u32 %v4593, 16
    %v4610 = vshll.u32 %v4593, 16
    %v4612 = vrot.slane %v4610, 1
    %v4613 = vor.u32 %v4608, %v4612
    %v4615 = vshrl.u32 %v4594, 16
    %v4617 = vshll.u32 %v4594, 16
    %v4619 = vrot.slane %v4617, 1
    %v4620 = vor.u32 %v4615, %v4619
    %v4622 = vshrl.u32 %v4595, 16
    %v4624 = vshll.u32 %v4595, 16
    %v4626 = vrot.slane %v4624, 1
    %v4627 = vor.u32 %v4622, %v4626
    %v4629 = vshrl.u32 %v4596, 16
    %v4631 = vshll.u32 %v4596, 16
    %v4633 = vrot.slane %v4631, 1
    %v4634 = vor.u32 %v4629, %v4633
    %v4636 = vshrl.u32 %v4597, 16
    %v4638 = vshll.u32 %v4597, 16
    %v4640 = vrot.slane %v4638, 1
    %v4641 = vor.u32 %v4636, %v4640
    %v4643 = vshrl.u32 %v4598, 16
    %v4645 = vshll.u32 %v4598, 16
    %v4647 = vrot.slane %v4645, 1
    %v4648 = vor.u32 %v4643, %v4647
    %v4650 = vshrl.u32 %v4599, 16
    %v4652 = vshll.u32 %v4599, 16
    %v4654 = vrot.slane %v4652, 1
    %v4655 = vor.u32 %v4650, %v4654
    %4656 = vrot.lane.b32.xlu0 %v4606, 16
    %v4657 = vpop.permute.xlu0 %4656
    %4658 = vrot.lane.b32.xlu0 %v4613, 16
    %v4659 = vpop.permute.xlu0 %4658
    %4660 = vrot.lane.b32.xlu0 %v4620, 16
    %v4661 = vpop.permute.xlu0 %4660
    %4662 = vrot.lane.b32.xlu0 %v4627, 16
    %v4663 = vpop.permute.xlu0 %4662
    %4664 = vrot.lane.b32.xlu0 %v4634, 16
    %v4665 = vpop.permute.xlu0 %4664
    %4666 = vrot.lane.b32.xlu0 %v4641, 16
    %v4667 = vpop.permute.xlu0 %4666
    %4668 = vrot.lane.b32.xlu0 %v4648, 16
    %v4669 = vpop.permute.xlu0 %4668
    %4670 = vrot.lane.b32.xlu0 %v4655, 16
    %v4671 = vpop.permute.xlu0 %4670
    %v4680 = vunpack.c.l.b16 %v4519
    %v4681 = vunpack.c.l.b16 %v4520
    %v4682 = vunpack.c.l.b16 %v4521
    %v4683 = vunpack.c.l.b16 %v4522
    %v4684 = vunpack.c.l.b16 %v4523
    %v4685 = vunpack.c.l.b16 %v4524
    %v4686 = vunpack.c.l.b16 %v4525
    %v4687 = vunpack.c.l.b16 %v4526
    %v4688 = vpack.c.b16 %v4680, %v4680
    %v4689 = vpack.c.b16 %v4681, %v4681
    %v4690 = vpack.c.b16 %v4682, %v4682
    %v4691 = vpack.c.b16 %v4683, %v4683
    %v4692 = vpack.c.b16 %v4684, %v4684
    %v4693 = vpack.c.b16 %v4685, %v4685
    %v4694 = vpack.c.b16 %v4686, %v4686
    %v4695 = vpack.c.b16 %v4687, %v4687
    %v4696 = vrot.slane %v4688, 1
    %v4697 = vrot.slane %v4689, 1
    %v4698 = vrot.slane %v4690, 1
    %v4699 = vrot.slane %v4691, 1
    %v4700 = vrot.slane %v4692, 1
    %v4701 = vrot.slane %v4693, 1
    %v4702 = vrot.slane %v4694, 1
    %v4703 = vrot.slane %v4695, 1
    %4704 = vrot.lane.b32.xlu0 %v4696, 32
    %v4705 = vpop.permute.xlu0 %4704
    %4706 = vrot.lane.b32.xlu0 %v4697, 32
    %v4707 = vpop.permute.xlu0 %4706
    %4708 = vrot.lane.b32.xlu0 %v4698, 32
    %v4709 = vpop.permute.xlu0 %4708
    %4710 = vrot.lane.b32.xlu0 %v4699, 32
    %v4711 = vpop.permute.xlu0 %4710
    %4712 = vrot.lane.b32.xlu0 %v4700, 32
    %v4713 = vpop.permute.xlu0 %4712
    %4714 = vrot.lane.b32.xlu0 %v4701, 32
    %v4715 = vpop.permute.xlu0 %4714
    %4716 = vrot.lane.b32.xlu0 %v4702, 32
    %v4717 = vpop.permute.xlu0 %4716
    %4718 = vrot.lane.b32.xlu0 %v4703, 32
    %v4719 = vpop.permute.xlu0 %4718
    %v4728 = vunpack.c.l.b16 %v4527
    %v4729 = vunpack.c.l.b16 %v4528
    %v4730 = vunpack.c.l.b16 %v4529
    %v4731 = vunpack.c.l.b16 %v4530
    %v4732 = vunpack.c.l.b16 %v4531
    %v4733 = vunpack.c.l.b16 %v4532
    %v4734 = vunpack.c.l.b16 %v4533
    %v4735 = vunpack.c.l.b16 %v4534
    %v4736 = vpack.c.b16 %v4728, %v4728
    %v4737 = vpack.c.b16 %v4729, %v4729
    %v4738 = vpack.c.b16 %v4730, %v4730
    %v4739 = vpack.c.b16 %v4731, %v4731
    %v4740 = vpack.c.b16 %v4732, %v4732
    %v4741 = vpack.c.b16 %v4733, %v4733
    %v4742 = vpack.c.b16 %v4734, %v4734
    %v4743 = vpack.c.b16 %v4735, %v4735
    %4744 = vrot.lane.b32.xlu0 %v4736, 48
    %v4745 = vpop.permute.xlu0 %4744
    %4746 = vrot.lane.b32.xlu0 %v4737, 48
    %v4747 = vpop.permute.xlu0 %4746
    %4748 = vrot.lane.b32.xlu0 %v4738, 48
    %v4749 = vpop.permute.xlu0 %4748
    %4750 = vrot.lane.b32.xlu0 %v4739, 48
    %v4751 = vpop.permute.xlu0 %4750
    %4752 = vrot.lane.b32.xlu0 %v4740, 48
    %v4753 = vpop.permute.xlu0 %4752
    %4754 = vrot.lane.b32.xlu0 %v4741, 48
    %v4755 = vpop.permute.xlu0 %4754
    %4756 = vrot.lane.b32.xlu0 %v4742, 48
    %v4757 = vpop.permute.xlu0 %4756
    %4758 = vrot.lane.b32.xlu0 %v4743, 48
    %v4759 = vpop.permute.xlu0 %4758
    %v4768 = vunpack.c.l.b16 %v4535
    %v4769 = vunpack.c.l.b16 %v4536
    %v4770 = vunpack.c.l.b16 %v4537
    %v4771 = vunpack.c.l.b16 %v4538
    %v4772 = vunpack.c.l.b16 %v4539
    %v4773 = vunpack.c.l.b16 %v4540
    %v4774 = vunpack.c.l.b16 %v4541
    %v4775 = vunpack.c.l.b16 %v4542
    %v4776 = vpack.c.b16 %v4768, %v4768
    %v4777 = vpack.c.b16 %v4769, %v4769
    %v4778 = vpack.c.b16 %v4770, %v4770
    %v4779 = vpack.c.b16 %v4771, %v4771
    %v4780 = vpack.c.b16 %v4772, %v4772
    %v4781 = vpack.c.b16 %v4773, %v4773
    %v4782 = vpack.c.b16 %v4774, %v4774
    %v4783 = vpack.c.b16 %v4775, %v4775
    %v4785 = vshrl.u32 %v4776, 16
    %v4787 = vshll.u32 %v4776, 16
    %v4789 = vrot.slane %v4787, 1
    %v4790 = vor.u32 %v4785, %v4789
    %v4792 = vshrl.u32 %v4777, 16
    %v4794 = vshll.u32 %v4777, 16
    %v4796 = vrot.slane %v4794, 1
    %v4797 = vor.u32 %v4792, %v4796
    %v4799 = vshrl.u32 %v4778, 16
    %v4801 = vshll.u32 %v4778, 16
    %v4803 = vrot.slane %v4801, 1
    %v4804 = vor.u32 %v4799, %v4803
    %v4806 = vshrl.u32 %v4779, 16
    %v4808 = vshll.u32 %v4779, 16
    %v4810 = vrot.slane %v4808, 1
    %v4811 = vor.u32 %v4806, %v4810
    %v4813 = vshrl.u32 %v4780, 16
    %v4815 = vshll.u32 %v4780, 16
    %v4817 = vrot.slane %v4815, 1
    %v4818 = vor.u32 %v4813, %v4817
    %v4820 = vshrl.u32 %v4781, 16
    %v4822 = vshll.u32 %v4781, 16
    %v4824 = vrot.slane %v4822, 1
    %v4825 = vor.u32 %v4820, %v4824
    %v4827 = vshrl.u32 %v4782, 16
    %v4829 = vshll.u32 %v4782, 16
    %v4831 = vrot.slane %v4829, 1
    %v4832 = vor.u32 %v4827, %v4831
    %v4834 = vshrl.u32 %v4783, 16
    %v4836 = vshll.u32 %v4783, 16
    %v4838 = vrot.slane %v4836, 1
    %v4839 = vor.u32 %v4834, %v4838
    %4840 = vrot.lane.b32.xlu0 %v4790, 64
    %v4841 = vpop.permute.xlu0 %4840
    %4842 = vrot.lane.b32.xlu0 %v4797, 64
    %v4843 = vpop.permute.xlu0 %4842
    %4844 = vrot.lane.b32.xlu0 %v4804, 64
    %v4845 = vpop.permute.xlu0 %4844
    %4846 = vrot.lane.b32.xlu0 %v4811, 64
    %v4847 = vpop.permute.xlu0 %4846
    %4848 = vrot.lane.b32.xlu0 %v4818, 64
    %v4849 = vpop.permute.xlu0 %4848
    %4850 = vrot.lane.b32.xlu0 %v4825, 64
    %v4851 = vpop.permute.xlu0 %4850
    %4852 = vrot.lane.b32.xlu0 %v4832, 64
    %v4853 = vpop.permute.xlu0 %4852
    %4854 = vrot.lane.b32.xlu0 %v4839, 64
    %v4855 = vpop.permute.xlu0 %4854
    %v4864 = vunpack.c.l.b16 %v4543
    %v4865 = vunpack.c.l.b16 %v4544
    %v4866 = vunpack.c.l.b16 %v4545
    %v4867 = vunpack.c.l.b16 %v4546
    %v4868 = vunpack.c.l.b16 %v4547
    %v4869 = vunpack.c.l.b16 %v4548
    %v4870 = vunpack.c.l.b16 %v4549
    %v4871 = vunpack.c.l.b16 %v4550
    %v4872 = vpack.c.b16 %v4864, %v4864
    %v4873 = vpack.c.b16 %v4865, %v4865
    %v4874 = vpack.c.b16 %v4866, %v4866
    %v4875 = vpack.c.b16 %v4867, %v4867
    %v4876 = vpack.c.b16 %v4868, %v4868
    %v4877 = vpack.c.b16 %v4869, %v4869
    %v4878 = vpack.c.b16 %v4870, %v4870
    %v4879 = vpack.c.b16 %v4871, %v4871
    %v4880 = vrot.slane %v4872, 1
    %v4881 = vrot.slane %v4873, 1
    %v4882 = vrot.slane %v4874, 1
    %v4883 = vrot.slane %v4875, 1
    %v4884 = vrot.slane %v4876, 1
    %v4885 = vrot.slane %v4877, 1
    %v4886 = vrot.slane %v4878, 1
    %v4887 = vrot.slane %v4879, 1
    %4888 = vrot.lane.b32.xlu0 %v4880, 80
    %v4889 = vpop.permute.xlu0 %4888
    %4890 = vrot.lane.b32.xlu0 %v4881, 80
    %v4891 = vpop.permute.xlu0 %4890
    %4892 = vrot.lane.b32.xlu0 %v4882, 80
    %v4893 = vpop.permute.xlu0 %4892
    %4894 = vrot.lane.b32.xlu0 %v4883, 80
    %v4895 = vpop.permute.xlu0 %4894
    %4896 = vrot.lane.b32.xlu0 %v4884, 80
    %v4897 = vpop.permute.xlu0 %4896
    %4898 = vrot.lane.b32.xlu0 %v4885, 80
    %v4899 = vpop.permute.xlu0 %4898
    %4900 = vrot.lane.b32.xlu0 %v4886, 80
    %v4901 = vpop.permute.xlu0 %4900
    %4902 = vrot.lane.b32.xlu0 %v4887, 80
    %v4903 = vpop.permute.xlu0 %4902
    %v4912 = vunpack.c.l.b16 %v4552
    %v4913 = vunpack.c.l.b16 %v4553
    %v4914 = vunpack.c.l.b16 %v4554
    %v4915 = vunpack.c.l.b16 %v4555
    %v4916 = vunpack.c.l.b16 %v4556
    %v4917 = vunpack.c.l.b16 %v4557
    %v4918 = vunpack.c.l.b16 %v4558
    %v4919 = vunpack.c.l.b16 %v4559
    %v4920 = vpack.c.b16 %v4912, %v4912
    %v4921 = vpack.c.b16 %v4913, %v4913
    %v4922 = vpack.c.b16 %v4914, %v4914
    %v4923 = vpack.c.b16 %v4915, %v4915
    %v4924 = vpack.c.b16 %v4916, %v4916
    %v4925 = vpack.c.b16 %v4917, %v4917
    %v4926 = vpack.c.b16 %v4918, %v4918
    %v4927 = vpack.c.b16 %v4919, %v4919
    %4928 = vrot.lane.b32.xlu0 %v4920, 96
    %v4929 = vpop.permute.xlu0 %4928
    %4930 = vrot.lane.b32.xlu0 %v4921, 96
    %v4931 = vpop.permute.xlu0 %4930
    %4932 = vrot.lane.b32.xlu0 %v4922, 96
    %v4933 = vpop.permute.xlu0 %4932
    %4934 = vrot.lane.b32.xlu0 %v4923, 96
    %v4935 = vpop.permute.xlu0 %4934
    %4936 = vrot.lane.b32.xlu0 %v4924, 96
    %v4937 = vpop.permute.xlu0 %4936
    %4938 = vrot.lane.b32.xlu0 %v4925, 96
    %v4939 = vpop.permute.xlu0 %4938
    %4940 = vrot.lane.b32.xlu0 %v4926, 96
    %v4941 = vpop.permute.xlu0 %4940
    %4942 = vrot.lane.b32.xlu0 %v4927, 96
    %v4943 = vpop.permute.xlu0 %4942
    %v4952 = vunpack.c.l.b16 %v4560
    %v4953 = vunpack.c.l.b16 %v4561
    %v4954 = vunpack.c.l.b16 %v4562
    %v4955 = vunpack.c.l.b16 %v4563
    %v4956 = vunpack.c.l.b16 %v4564
    %v4957 = vunpack.c.l.b16 %v4565
    %v4958 = vunpack.c.l.b16 %v4566
    %v4959 = vunpack.c.l.b16 %v4567
    %v4960 = vpack.c.b16 %v4952, %v4952
    %v4961 = vpack.c.b16 %v4953, %v4953
    %v4962 = vpack.c.b16 %v4954, %v4954
    %v4963 = vpack.c.b16 %v4955, %v4955
    %v4964 = vpack.c.b16 %v4956, %v4956
    %v4965 = vpack.c.b16 %v4957, %v4957
    %v4966 = vpack.c.b16 %v4958, %v4958
    %v4967 = vpack.c.b16 %v4959, %v4959
    %v4969 = vshrl.u32 %v4960, 16
    %v4971 = vshll.u32 %v4960, 16
    %v4973 = vrot.slane %v4971, 1
    %v4974 = vor.u32 %v4969, %v4973
    %v4976 = vshrl.u32 %v4961, 16
    %v4978 = vshll.u32 %v4961, 16
    %v4980 = vrot.slane %v4978, 1
    %v4981 = vor.u32 %v4976, %v4980
    %v4983 = vshrl.u32 %v4962, 16
    %v4985 = vshll.u32 %v4962, 16
    %v4987 = vrot.slane %v4985, 1
    %v4988 = vor.u32 %v4983, %v4987
    %v4990 = vshrl.u32 %v4963, 16
    %v4992 = vshll.u32 %v4963, 16
    %v4994 = vrot.slane %v4992, 1
    %v4995 = vor.u32 %v4990, %v4994
    %v4997 = vshrl.u32 %v4964, 16
    %v4999 = vshll.u32 %v4964, 16
    %v5001 = vrot.slane %v4999, 1
    %v5002 = vor.u32 %v4997, %v5001
    %v5004 = vshrl.u32 %v4965, 16
    %v5006 = vshll.u32 %v4965, 16
    %v5008 = vrot.slane %v5006, 1
    %v5009 = vor.u32 %v5004, %v5008
    %v5011 = vshrl.u32 %v4966, 16
    %v5013 = vshll.u32 %v4966, 16
    %v5015 = vrot.slane %v5013, 1
    %v5016 = vor.u32 %v5011, %v5015
    %v5018 = vshrl.u32 %v4967, 16
    %v5020 = vshll.u32 %v4967, 16
    %v5022 = vrot.slane %v5020, 1
    %v5023 = vor.u32 %v5018, %v5022
    %5024 = vrot.lane.b32.xlu0 %v4974, 112
    %v5025 = vpop.permute.xlu0 %5024
    %5026 = vrot.lane.b32.xlu0 %v4981, 112
    %v5027 = vpop.permute.xlu0 %5026
    %5028 = vrot.lane.b32.xlu0 %v4988, 112
    %v5029 = vpop.permute.xlu0 %5028
    %5030 = vrot.lane.b32.xlu0 %v4995, 112
    %v5031 = vpop.permute.xlu0 %5030
    %5032 = vrot.lane.b32.xlu0 %v5002, 112
    %v5033 = vpop.permute.xlu0 %5032
    %5034 = vrot.lane.b32.xlu0 %v5009, 112
    %v5035 = vpop.permute.xlu0 %5034
    %5036 = vrot.lane.b32.xlu0 %v5016, 112
    %v5037 = vpop.permute.xlu0 %5036
    %5038 = vrot.lane.b32.xlu0 %v5023, 112
    %v5039 = vpop.permute.xlu0 %5038
    %v5048 = vunpack.c.l.b16 %v4568
    %v5049 = vunpack.c.l.b16 %v4569
    %v5050 = vunpack.c.l.b16 %v4570
    %v5051 = vunpack.c.l.b16 %v4571
    %v5052 = vunpack.c.l.b16 %v4572
    %v5053 = vunpack.c.l.b16 %v4573
    %v5054 = vunpack.c.l.b16 %v4574
    %v5055 = vunpack.c.l.b16 %v4575
    %v5056 = vpack.c.b16 %v5048, %v5048
    %v5057 = vpack.c.b16 %v5049, %v5049
    %v5058 = vpack.c.b16 %v5050, %v5050
    %v5059 = vpack.c.b16 %v5051, %v5051
    %v5060 = vpack.c.b16 %v5052, %v5052
    %v5061 = vpack.c.b16 %v5053, %v5053
    %v5062 = vpack.c.b16 %v5054, %v5054
    %v5063 = vpack.c.b16 %v5055, %v5055
    %v5064 = vrot.slane %v5056, 1
    %v5065 = vrot.slane %v5057, 1
    %v5066 = vrot.slane %v5058, 1
    %v5067 = vrot.slane %v5059, 1
    %v5068 = vrot.slane %v5060, 1
    %v5069 = vrot.slane %v5061, 1
    %v5070 = vrot.slane %v5062, 1
    %v5071 = vrot.slane %v5063, 1
    %v5074 = vsel %vm1025, %v4503, %v4657
    %v5077 = vsel %vm1025, %v4504, %v4659
    %v5080 = vsel %vm1025, %v4505, %v4661
    %v5083 = vsel %vm1025, %v4506, %v4663
    %v5086 = vsel %vm1025, %v4507, %v4665
    %v5089 = vsel %vm1025, %v4508, %v4667
    %v5092 = vsel %vm1025, %v4509, %v4669
    %v5095 = vsel %vm1025, %v4510, %v4671
    %v5097 = vsel %vm1157, %v5074, %v4705
    %v5099 = vsel %vm1157, %v5077, %v4707
    %v5101 = vsel %vm1157, %v5080, %v4709
    %v5103 = vsel %vm1157, %v5083, %v4711
    %v5105 = vsel %vm1157, %v5086, %v4713
    %v5107 = vsel %vm1157, %v5089, %v4715
    %v5109 = vsel %vm1157, %v5092, %v4717
    %v5111 = vsel %vm1157, %v5095, %v4719
    %v5113 = vsel %vm4027, %v5097, %v4745
    %v5115 = vsel %vm4027, %v5099, %v4747
    %v5117 = vsel %vm4027, %v5101, %v4749
    %v5119 = vsel %vm4027, %v5103, %v4751
    %v5121 = vsel %vm4027, %v5105, %v4753
    %v5123 = vsel %vm4027, %v5107, %v4755
    %v5125 = vsel %vm4027, %v5109, %v4757
    %v5127 = vsel %vm4027, %v5111, %v4759
    %v5129 = vsel %vm4061, %v5113, %v4841
    %v5131 = vsel %vm4061, %v5115, %v4843
    %v5133 = vsel %vm4061, %v5117, %v4845
    %v5135 = vsel %vm4061, %v5119, %v4847
    %v5137 = vsel %vm4061, %v5121, %v4849
    %v5139 = vsel %vm4061, %v5123, %v4851
    %v5141 = vsel %vm4061, %v5125, %v4853
    %v5143 = vsel %vm4061, %v5127, %v4855
    %vm5144 = vcmask 654336
    %v5146 = vsel %vm5144, %v5129, %v4889
    %v5148 = vsel %vm5144, %v5131, %v4891
    %v5150 = vsel %vm5144, %v5133, %v4893
    %v5152 = vsel %vm5144, %v5135, %v4895
    %v5154 = vsel %vm5144, %v5137, %v4897
    %v5156 = vsel %vm5144, %v5139, %v4899
    %v5158 = vsel %vm5144, %v5141, %v4901
    %v5160 = vsel %vm5144, %v5143, %v4903
    %vm5161 = vcmask 785408
    %v5163 = vsel %vm5161, %v5146, %v4929
    %v5165 = vsel %vm5161, %v5148, %v4931
    %v5167 = vsel %vm5161, %v5150, %v4933
    %v5169 = vsel %vm5161, %v5152, %v4935
    %v5171 = vsel %vm5161, %v5154, %v4937
    %v5173 = vsel %vm5161, %v5156, %v4939
    %v5175 = vsel %vm5161, %v5158, %v4941
    %v5177 = vsel %vm5161, %v5160, %v4943
    %vm5178 = vcmask 916480
    %v5180 = vsel %vm5178, %v5163, %v5025
    %v5182 = vsel %vm5178, %v5165, %v5027
    %v5184 = vsel %vm5178, %v5167, %v5029
    %v5186 = vsel %vm5178, %v5169, %v5031
    %v5188 = vsel %vm5178, %v5171, %v5033
    %v5190 = vsel %vm5178, %v5173, %v5035
    %v5192 = vsel %vm5178, %v5175, %v5037
    %v5194 = vsel %vm5178, %v5177, %v5039
    %v5203 = vcombine.low %v5180, %v5064
    %v5205 = vunpack.c.l.s4 1983009808
    %v5206 = vunpack.c.0.s8 %v5205
    %v5207 = vlaneseq
    %v5208 = vshrl.u32 %v5207, 7
    %v5209 = vsub.s32 %v5206, %v5208
    %v5210 = vrot.slane %v5203, %v5209
    %v5211 = vcombine.low %v5182, %v5065
    %v5213 = vunpack.c.l.s4 1983009808
    %v5214 = vunpack.c.0.s8 %v5213
    %v5215 = vlaneseq
    %v5216 = vshrl.u32 %v5215, 7
    %v5217 = vsub.s32 %v5214, %v5216
    %v5218 = vrot.slane %v5211, %v5217
    %v5219 = vcombine.low %v5184, %v5066
    %v5221 = vunpack.c.l.s4 1983009808
    %v5222 = vunpack.c.0.s8 %v5221
    %v5223 = vlaneseq
    %v5224 = vshrl.u32 %v5223, 7
    %v5225 = vsub.s32 %v5222, %v5224
    %v5226 = vrot.slane %v5219, %v5225
    %v5227 = vcombine.low %v5186, %v5067
    %v5229 = vunpack.c.l.s4 1983009808
    %v5230 = vunpack.c.0.s8 %v5229
    %v5231 = vlaneseq
    %v5232 = vshrl.u32 %v5231, 7
    %v5233 = vsub.s32 %v5230, %v5232
    %v5234 = vrot.slane %v5227, %v5233
    %v5235 = vcombine.low %v5188, %v5068
    %v5237 = vunpack.c.l.s4 1983009808
    %v5238 = vunpack.c.0.s8 %v5237
    %v5239 = vlaneseq
    %v5240 = vshrl.u32 %v5239, 7
    %v5241 = vsub.s32 %v5238, %v5240
    %v5242 = vrot.slane %v5235, %v5241
    %v5243 = vcombine.low %v5190, %v5069
    %v5245 = vunpack.c.l.s4 1983009808
    %v5246 = vunpack.c.0.s8 %v5245
    %v5247 = vlaneseq
    %v5248 = vshrl.u32 %v5247, 7
    %v5249 = vsub.s32 %v5246, %v5248
    %v5250 = vrot.slane %v5243, %v5249
    %v5251 = vcombine.low %v5192, %v5070
    %v5253 = vunpack.c.l.s4 1983009808
    %v5254 = vunpack.c.0.s8 %v5253
    %v5255 = vlaneseq
    %v5256 = vshrl.u32 %v5255, 7
    %v5257 = vsub.s32 %v5254, %v5256
    %v5258 = vrot.slane %v5251, %v5257
    %v5259 = vcombine.low %v5194, %v5071
    %v5261 = vunpack.c.l.s4 1983009808
    %v5262 = vunpack.c.0.s8 %v5261
    %v5263 = vlaneseq
    %v5264 = vshrl.u32 %v5263, 7
    %v5265 = vsub.s32 %v5262, %v5264
    %v5266 = vrot.slane %v5259, %v5265
    %v5268 = vlaneseq
    %v5269 = vshrl.u32 %v5268, 7
    %v5270 = vsub.s32 0, %v5269
    %v5271 = vrot.slane %v91, %v5270
    %v5273 = vcombine.low %v5210, %v5218
    %v5274 = vcombine.low %v5226, %v5234
    %v5276 = vunpack.c.l.s4 1983009808
    %v5277 = vunpack.c.0.s8 %v5276
    %v5278 = vlaneseq
    %v5279 = vshrl.u32 %v5278, 7
    %v5280 = vsub.s32 %v5277, %v5279
    %v5281 = vrot.slane %v5273, %v5280
    %v5283 = vunpack.c.l.s4 1983009808
    %v5284 = vunpack.c.0.s8 %v5283
    %v5285 = vlaneseq
    %v5286 = vshrl.u32 %v5285, 7
    %v5287 = vsub.s32 %v5284, %v5286
    %v5288 = vrot.slane %v5274, %v5287
    %v5289 = vcombine.low %v5281, %v5288
    %v5290 = vcombine.high %v5281, %v5288
    %v5291 = vcombine.low %v5242, %v5250
    %v5292 = vcombine.low %v5258, %v5266
    %v5294 = vunpack.c.l.s4 1983009808
    %v5295 = vunpack.c.0.s8 %v5294
    %v5296 = vlaneseq
    %v5297 = vshrl.u32 %v5296, 7
    %v5298 = vsub.s32 %v5295, %v5297
    %v5299 = vrot.slane %v5291, %v5298
    %v5301 = vunpack.c.l.s4 1983009808
    %v5302 = vunpack.c.0.s8 %v5301
    %v5303 = vlaneseq
    %v5304 = vshrl.u32 %v5303, 7
    %v5305 = vsub.s32 %v5302, %v5304
    %v5306 = vrot.slane %v5292, %v5305
    %v5307 = vcombine.low %v5299, %v5306
    %v5308 = vcombine.high %v5299, %v5306
    %v5329 = vunpack.c.l.b16 %v73
    %v5330 = vunpack.c.l.b16 %v74
    %v5331 = vunpack.c.l.b16 %v75
    %v5332 = vunpack.c.l.b16 %v76
    %v5333 = vunpack.c.l.b16 %v77
    %v5334 = vunpack.c.l.b16 %v78
    %v5335 = vunpack.c.l.b16 %v79
    %v5336 = vunpack.c.l.b16 %v80
    %v5337 = vunpack.c.l.b16 %v81
    %v5338 = vunpack.c.l.b16 %v82
    %v5339 = vunpack.c.l.b16 %v83
    %v5340 = vunpack.c.l.b16 %v84
    %v5341 = vunpack.c.l.b16 %v85
    %v5342 = vunpack.c.l.b16 %v86
    %v5343 = vunpack.c.l.b16 %v87
    %v5344 = vunpack.c.l.b16 %v88
    %v5345 = vunpack.c.l.b16 %v89
    %v5346 = vunpack.c.l.b16 %v90
    %v5347 = vpack.c.b16 %v5330, %v5329
    %v5348 = vpack.c.b16 %v5332, %v5331
    %v5349 = vpack.c.b16 %v5334, %v5333
    %v5350 = vpack.c.b16 %v5336, %v5335
    %v5351 = vpack.c.b16 %v5338, %v5337
    %v5352 = vpack.c.b16 %v5340, %v5339
    %v5353 = vpack.c.b16 %v5342, %v5341
    %v5354 = vpack.c.b16 %v5344, %v5343
    %v5355 = vpack.c.b16 %v5346, %v5345
    %v5366 = vsel %vm1025, %v5290, 0
    %v5369 = vsel %vm1025, %v5308, 0
    %5371 = vmatprep.subr.bf16.mxu0 0
    %5372 = vmatpush1.bf16.msra.mxu0 %v5354
    %5373 = vmatprep.subr.bf16.mxu0 0
    %5374 = vmatpush1.bf16.msra.mxu0 %v5353
    %5375 = vmatprep.subr.bf16.mxu0 0
    %5376 = vmatpush1.bf16.msra.mxu0 %v5352
    %5377 = vmatprep.subr.bf16.mxu0 0
    %5378 = vmatpush1.bf16.msra.mxu0 %v5351
    %5379 = vmatprep.subr.bf16.mxu0 0
    %5380 = vmatpush1.bf16.msra.mxu0 %v5350
    %5381 = vmatprep.subr.bf16.mxu0 0
    %5382 = vmatpush1.bf16.msra.mxu0 %v5349
    %5383 = vmatprep.subr.bf16.mxu0 0
    %5384 = vmatpush1.bf16.msra.mxu0 %v5348
    %5385 = vmatprep.subr.bf16.mxu0 0
    %5386 = vmatpush1.bf16.msra.mxu0 %v5347
    %5387 = vmatprep.subr.bf16.mxu0 0
    %5388 = vmatpush2.bf16.msra.mxu0 0
    %5389 = vmatprep.subr.bf16.mxu0 0
    %5390 = vmatpush2.bf16.msra.mxu0 0
    %5391 = vmatprep.subr.bf16.mxu0 0
    %5392 = vmatpush2.bf16.msra.mxu0 0
    %5393 = vmatprep.subr.bf16.mxu0 0
    %5394 = vmatpush2.bf16.msra.mxu0 0
    %5395 = vmatprep.subr.bf16.mxu0 0
    %5396 = vmatpush2.bf16.msra.mxu0 0
    %5397 = vmatprep.subr.bf16.mxu0 0
    %5398 = vmatpush2.bf16.msra.mxu0 0
    %5399 = vmatprep.subr.bf16.mxu0 0
    %5400 = vmatpush2.bf16.msra.mxu0 0
    %5401 = vmatprep.subr.bf16.mxu0 0
    %5402 = vmatpush2.bf16.msra.mxu0 %v5355
    %5403 = vmatprep.mubr.bf16.mxu0 %v5366
    %5404 = vmatmul.mubr.bf16.gmra.mxu0 %v5289
    %v5405 = vpop.f32.mrf.mxu0
    %v5406 = vadd.f32 %v5271, %v5405
    %v5407 = vpop.f32.mrf.mxu0
    %v5408 = vpop.f32.mrf.mxu0
    %v5409 = vadd.f32 %v5271, %v5408
    %v5410 = vpop.f32.mrf.mxu0
    %5411 = vmatprep.mubr.bf16.mxu0 %v5369
    %5412 = vmatmul.mubr.bf16.gmra.mxu0 %v5307
    %v5413 = vpop.f32.mrf.mxu0
    %v5414 = vadd.f32 %v5271, %v5413
    %v5415 = vpop.f32.mrf.mxu0
    %v5416 = vpop.f32.mrf.mxu0
    %v5417 = vadd.f32 %v5271, %v5416
    %v5418 = vpop.f32.mrf.mxu0
    %5419 = vdwg.mxu0
    %v5420 = vmax.f32 %v5406, 0.0
    %v5421 = vmax.f32 %v5409, 0.0
    %v5422 = vmax.f32 %v5414, 0.0
    %v5423 = vmax.f32 %v5417, 0.0
    %v5424 = vsel %vm1025, %v5420, 0.0
    %v5425 = vsel %vm1025, %v5421, 0.0
    %v5426 = vadd.f32 %v5424, %v5425
    %v5427 = vrot.slane %v5426, 4
    %v5428 = vadd.f32 %v5426, %v5427
    %v5429 = vrot.slane %v5428, 2
    %v5430 = vadd.f32 %v5428, %v5429
    %v5431 = vrot.slane %v5430, 1
    %v5432 = vadd.f32 %v5430, %v5431
    %v5433 = vsel %vm1025, %v5422, 0.0
    %v5434 = vsel %vm1025, %v5423, 0.0
    %v5435 = vadd.f32 %v5433, %v5434
    %v5436 = vrot.slane %v5435, 4
    %v5437 = vadd.f32 %v5435, %v5436
    %v5438 = vrot.slane %v5437, 2
    %v5439 = vadd.f32 %v5437, %v5438
    %v5440 = vrot.slane %v5439, 1
    %v5441 = vadd.f32 %v5439, %v5440
    %v5442 = vrcp.pop 16.0
    %v5443 = vmul.f32 %v5432, %v5442
    %v5444 = vmul.f32 %v5441, %v5442
    %v5445 = vpack.c.bf16 %v5443, %v5443
    %v5446 = vpack.c.bf16 %v5444, %v5444
    %v5447 = vld [vmem:[%s13] sm:$0xf]
    %v5448 = vld [vmem:[%s13 + $0x4] sm:$0xf]
    %v5449 = vld [vmem:[%s14] sm:$0x1]
    %v5451 = vlaneseq
    %v5452 = vshrl.u32 %v5451, 7
    %v5453 = vsub.s32 0, %v5452
    %v5454 = vrot.slane %v5449, %v5453
    %v5458 = vunpack.c.l.b16 %v5445
    %v5459 = vunpack.c.l.b16 %v5446
    %vm5460 = vcmask 1041409
    %v5461 = vsel %vm5460, %v5459, %v5458
    %v5462 = vpack.c.b16 %v5461, %v5461
    %v5465 = vunpack.c.l.b16 %v5447
    %v5466 = vunpack.c.l.b16 %v5448
    %v5467 = vpack.c.b16 %v5466, %v5465
    %v5470 = vsel %vm1025, %v5462, 0
    %5472 = vmatprep.subr.bf16.mxu0 0
    %5473 = vmatpush1.bf16.msra.mxu0 0
    %5474 = vmatprep.subr.bf16.mxu0 0
    %5475 = vmatpush1.bf16.msra.mxu0 0
    %5476 = vmatprep.subr.bf16.mxu0 0
    %5477 = vmatpush1.bf16.msra.mxu0 0
    %5478 = vmatprep.subr.bf16.mxu0 0
    %5479 = vmatpush1.bf16.msra.mxu0 0
    %5480 = vmatprep.subr.bf16.mxu0 0
    %5481 = vmatpush1.bf16.msra.mxu0 0
    %5482 = vmatprep.subr.bf16.mxu0 0
    %5483 = vmatpush1.bf16.msra.mxu0 0
    %5484 = vmatprep.subr.bf16.mxu0 0
    %5485 = vmatpush1.bf16.msra.mxu0 0
    %5486 = vmatprep.subr.bf16.mxu0 0
    %5487 = vmatpush1.bf16.msra.mxu0 %v5467
    %5488 = vmatprep.subr.bf16.mxu0 0
    %5489 = vmatpush2.bf16.msra.mxu0 0
    %5490 = vmatprep.subr.bf16.mxu0 0
    %5491 = vmatpush2.bf16.msra.mxu0 0
    %5492 = vmatprep.subr.bf16.mxu0 0
    %5493 = vmatpush2.bf16.msra.mxu0 0
    %5494 = vmatprep.subr.bf16.mxu0 0
    %5495 = vmatpush2.bf16.msra.mxu0 0
    %5496 = vmatprep.subr.bf16.mxu0 0
    %5497 = vmatpush2.bf16.msra.mxu0 0
    %5498 = vmatprep.subr.bf16.mxu0 0
    %5499 = vmatpush2.bf16.msra.mxu0 0
    %5500 = vmatprep.subr.bf16.mxu0 0
    %5501 = vmatpush2.bf16.msra.mxu0 0
    %5502 = vmatprep.subr.bf16.mxu0 0
    %5503 = vmatpush2.bf16.msra.mxu0 0
    %5504 = vmatprep.mubr.bf16.mxu0 0
    %5505 = vmatmul.mubr.bf16.gmra.mxu0 %v5470
    %v5506 = vpop.f32.mrf.mxu0
    %v5507 = vadd.f32 %v5454, %v5506
    %v5508 = vpop.f32.mrf.mxu0
    %v5509 = vpop.f32.mrf.mxu0
    %v5510 = vpop.f32.mrf.mxu0
    %5511 = vdwg.mxu0
    %v5514 = vunpack.c.l.s4 1966171168
    %v5515 = vunpack.c.0.s8 %v5514
    %v5516 = vlaneseq
    %v5517 = vshrl.u32 %v5516, 7
    %v5518 = vsub.s32 %v5515, %v5517
    %v5519 = vrot.slane %v5507, %v5518
    %v5520 = vcombine.high %v5519, %v5519
    %v5522 = vunpack.c.l.s4 1966171168
    %v5523 = vunpack.c.0.s8 %v5522
    %v5524 = vlaneseq
    %v5525 = vshrl.u32 %v5524, 7
    %v5526 = vsub.s32 %v5523, %v5525
    %v5527 = vrot.slane %v5519, %v5526
    %v5529 = vunpack.c.l.s4 1966171168
    %v5530 = vunpack.c.0.s8 %v5529
    %v5531 = vlaneseq
    %v5532 = vshrl.u32 %v5531, 7
    %v5533 = vsub.s32 %v5530, %v5532
    %v5534 = vrot.slane %v5520, %v5533
    %5537 = vst [vmem:[#allocation4] sm:$0x1] %v5527
    %5538 = vst [vmem:[#allocation4 + $0x1] sm:$0x1] %v5534
    // Predicated region
    $region62: #{shake_head_forward.1} parent=1 // pred_check
      _
    $region63: #{shake_head_forward.1} parent=1 // pred_check_branch
      %5540 = sbr.rel (0) target = $region65
    $region64: #{shake_head_forward.1} parent=1 // pred_region
      %s5542 = ssub.s32 32, 32
      %5543 = vsyncadd [#allocation5], %s5542
      %s5544 = sshll.u32 [#allocation4], 4
      %s5545 = int_to_ptr.vmem [resolvable:$true] %s5544
      %5550 = dma.vmem_to_hbm [thread:$0]  %s5545, 32, %s15, [#allocation5], 16, 16, 1
    $region65: #{shake_head_forward.1} parent=1 // pred_fallthru
      _
    // Predicated region
    $region66: #{shake_head_forward.1} parent=1 // pred_check
      _
    $region67: #{shake_head_forward.1} parent=1 // pred_check_branch
      %5552 = sbr.rel (0) target = $region69
    $region68: #{shake_head_forward.1} parent=1 // pred_region
      %5553 = dma.done [#allocation5], 32
    $region69: #{shake_head_forward.1} parent=1 // pred_fallthru
      _
    %5554 = vsyncpa [#allocation5], 1

</llo_original>
